<compile_context>
chip_gen: v7x
topology: tpu7x:2x2x1
jax: 0.10.0
libtpu: 0.0.40
codegen_flags: <defaults>
</compile_context>

<pallas_src>
import jax
import jax.numpy as jnp
from jax.experimental import pallas as pl
from jax.experimental.pallas import tpu as pltpu


def _round_up(x, m):
    return ((x + m - 1) // m) * m


# ---------------------------------------------------------------------------
# Pallas kernel: projection -> (mlp | magnitude) -> L2-normalize * magnitude
# ---------------------------------------------------------------------------
def _query_head_kernel(
    x_ref,                 # [TM, 384]   bf16 base sentence embeddings
    wp_ref, bp_ref,        # projection: [384, 768] bf16, [1, 768] f32
    wcat_ref, bcat_ref,    # fused mlp-1 | mag-1: [768, 1024] bf16, [1, 1024] f32
    w2_ref, b2_ref,        # mlp layer 2: [768, 768] bf16, [1, 768] f32
    wm2_ref, bm2_ref,      # magnitude layer 2 (as row): [1, 256] f32, [1, 1] f32
    out_ref,               # [TM, 768]  normalized_embedding * magnitude
    mag_ref,               # [TM, 1]    magnitude
):
    x = x_ref[...]  # bf16

    # projected = Linear(384, 768); bf16 MXU inputs, f32 accumulation.
    proj = jnp.dot(x, wp_ref[...], preferred_element_type=jnp.float32) + bp_ref[...]
    proj_bf = proj.astype(jnp.bfloat16)

    # One fused matmul feeds both branches: [TM, 1024] = [TM,768] @ [768, 768|256]
    h_cat = (
        jnp.dot(proj_bf, wcat_ref[...], preferred_element_type=jnp.float32)
        + bcat_ref[...]
    )
    h_cat = jnp.maximum(h_cat, 0.0)              # ReLU (Dropout is identity in eval)
    h = h_cat[:, :768]                           # mlp branch        [TM, 768]
    hm = h_cat[:, 768:]                          # magnitude branch  [TM, 256]

    # raw_embedding = Linear(768, 768)
    raw = (
        jnp.dot(h.astype(jnp.bfloat16), w2_ref[...], preferred_element_type=jnp.float32)
        + b2_ref[...]
    )

    # magnitude = Linear(256, 1) -> Softplus, done as a VPU multiply + lane reduce
    # (avoids a degenerate N=1 MXU matmul).
    mag_pre = jnp.sum(hm * wm2_ref[...], axis=-1, keepdims=True) + bm2_ref[...]
    # torch Softplus(beta=1, threshold=20): linear above threshold.
    mag = jnp.where(
        mag_pre > 20.0,
        mag_pre,
        jnp.log1p(jnp.exp(jnp.minimum(mag_pre, 20.0))),
    )

    # F.normalize(raw, p=2, dim=-1): x / max(||x||_2, 1e-12), fused via rsqrt.
    sumsq = jnp.sum(raw * raw, axis=-1, keepdims=True)
    inv_norm = jax.lax.rsqrt(jnp.maximum(sumsq, 1e-24))   # eps^2 preserves semantics

    out_ref[...] = (raw * inv_norm * mag).astype(out_ref.dtype)
    mag_ref[...] = mag.astype(mag_ref.dtype)


def query_embedding_head(base_embeddings, params, *, max_block_b=128):
    """Runs the learned head of QueryEmbeddingModel as a single Pallas kernel."""
    B = base_embeddings.shape[0]
    wp, bp, w1, b1, w2, b2, wm1, bm1, wm2, bm2 = params

    # bf16 for everything feeding the MXU (halves HBM->VMEM weight traffic);
    # biases and the VPU-reduction weight stay f32; all elementwise math is f32.
    x_bf = base_embeddings.astype(jnp.bfloat16)
    wp_bf = wp.astype(jnp.bfloat16)
    w2_bf = w2.astype(jnp.bfloat16)
    wcat_bf = jnp.concatenate([w1, wm1], axis=1).astype(jnp.bfloat16)  # [768, 1024]
    bcat = jnp.concatenate([b1, bm1], axis=1)                          # [1, 1024]
    wm2_row = wm2.T                                                    # [1, 256]

    # Batch tiling: pad batch to a multiple of the tile so every block is full.
    TM = min(max_block_b, _round_up(B, 8))
    Bp = _round_up(B, TM)
    if Bp != B:
        x_bf = jnp.pad(x_bf, ((0, Bp - B), (0, 0)))
    grid = (Bp // TM,)

    def tile_spec(last_dim):
        return pl.BlockSpec((TM, last_dim), lambda i: (i, 0))

    def resident_spec(shape):
        # Constant block index across the batch grid -> DMA'd once, VMEM-resident.
        return pl.BlockSpec(shape, lambda i: (0, 0))

    in_arrays = (x_bf, wp_bf, bp, wcat_bf, bcat, w2_bf, b2, wm2_row, bm2)
    in_specs = [
        tile_spec(384),                     # x
        resident_spec((384, 768)),          # wp
        resident_spec((1, 768)),            # bp
        resident_spec((768, 1024)),         # w1 | wm1
        resident_spec((1, 1024)),           # b1 | bm1
        resident_spec((768, 768)),          # w2
        resident_spec((1, 768)),            # b2
        resident_spec((1, 256)),            # wm2 (row)
        resident_spec((1, 1)),              # bm2
    ]
    out_shapes = (
        jax.ShapeDtypeStruct((Bp, 768), jnp.float32),
        jax.ShapeDtypeStruct((Bp, 1), jnp.float32),
    )
    out_specs = (tile_spec(768), tile_spec(1))

    out, mag = pl.pallas_call(
        _query_head_kernel,
        out_shape=out_shapes,
        grid=grid,
        in_specs=in_specs,
        out_specs=out_specs,
        compiler_params=pltpu.CompilerParams(
            dimension_semantics=("parallel",),
            vmem_limit_bytes=32 << 20,
        ),
    )(*in_arrays)

    if Bp != B:
        out = out[:B]
        mag = mag[:B]
    return out, mag


# ---------------------------------------------------------------------------
# Glue: deterministic parameter init + base-model stand-in
# ---------------------------------------------------------------------------
def init_params(key):
    ks = jax.random.split(key, 10)
    scale = 0.02
    wp = scale * jax.random.normal(ks[0], (384, 768), jnp.float32)
    bp = scale * jax.random.normal(ks[1], (1, 768), jnp.float32)
    w1 = scale * jax.random.normal(ks[2], (768, 768), jnp.float32)
    b1 = scale * jax.random.normal(ks[3], (1, 768), jnp.float32)
    w2 = scale * jax.random.normal(ks[4], (768, 768), jnp.float32)
    b2 = scale * jax.random.normal(ks[5], (1, 768), jnp.float32)
    wm1 = scale * jax.random.normal(ks[6], (768, 256), jnp.float32)
    bm1 = scale * jax.random.normal(ks[7], (1, 256), jnp.float32)
    wm2 = scale * jax.random.normal(ks[8], (256, 1), jnp.float32)
    bm2 = scale * jax.random.normal(ks[9], (1, 1), jnp.float32)
    return (wp, bp, w1, b1, w2, b2, wm1, bm1, wm2, bm2)


def fake_base_model(input_ids, attention_mask, embed_table):
    """Stand-in for the frozen SentenceTransformer: lookup + masked mean pool."""
    emb = embed_table[input_ids]                            # [B, S, 384]
    mask = attention_mask.astype(jnp.float32)[..., None]    # [B, S, 1]
    summed = jnp.sum(emb * mask, axis=1)                    # [B, 384]
    denom = jnp.maximum(jnp.sum(mask, axis=1), 1e-9)        # [B, 1]
    return summed / denom


def query_embedding_model(input_ids, attention_mask, embed_table, params):
    base = fake_base_model(input_ids, attention_mask, embed_table)
    output, magnitude = query_embedding_head(base, params)
    return output, magnitude


if __name__ == "__main__":
    key = jax.random.PRNGKey(0)
    k_tab, k_ids, k_params = jax.random.split(key, 3)

    B, S, VOCAB = 8, 8, 1000
    embed_table = 0.1 * jax.random.normal(k_tab, (VOCAB, 384), jnp.float32)
    input_ids = jax.random.randint(k_ids, (B, S), 0, VOCAB, dtype=jnp.int32)
    attention_mask = jnp.ones((B, S), dtype=jnp.int32)

    params = init_params(k_params)

    output, magnitude = query_embedding_model(
        input_ids, attention_mask, embed_table, params
    )
    jax.block_until_ready((output, magnitude))

    assert output.shape == (B, 768) and magnitude.shape == (B, 1)
    assert bool(jnp.all(jnp.isfinite(output))) and bool(jnp.all(magnitude > 0))
    print("KERNEL_OK")
</pallas_src>

<mosaic_0001>
module attributes {stable_mosaic.version = 11 : i64} {
  func.func @_query_head_kernel(%arg0: i32, %arg1: memref<8x384xbf16, #tpu.memory_space<vmem>>, %arg2: memref<384x768xbf16, #tpu.memory_space<vmem>>, %arg3: memref<1x768xf32, #tpu.memory_space<vmem>>, %arg4: memref<768x1024xbf16, #tpu.memory_space<vmem>>, %arg5: memref<1x1024xf32, #tpu.memory_space<vmem>>, %arg6: memref<768x768xbf16, #tpu.memory_space<vmem>>, %arg7: memref<1x768xf32, #tpu.memory_space<vmem>>, %arg8: memref<1x256xf32, #tpu.memory_space<vmem>>, %arg9: memref<1x1xf32, #tpu.memory_space<vmem>>, %arg10: memref<8x768xf32, #tpu.memory_space<vmem>>, %arg11: memref<8x1xf32, #tpu.memory_space<vmem>>) attributes {dimension_semantics = [#tpu.dimension_semantics<parallel>], iteration_bounds = array<i64: 1>, scalar_prefetch = 0 : i64, scratch_operands = 0 : i64, tpu.core_type = #tpu.core_type<tc>, window_params = [{transform_indices = @transform_0, window_bounds = array<i64: 8, 384>}, {pipeline_mode = #tpu.pipeline_mode<synchronous>, transform_indices = @transform_1, window_bounds = array<i64: 384, 768>}, {pipeline_mode = #tpu.pipeline_mode<synchronous>, transform_indices = @transform_2, window_bounds = array<i64: 1, 768>}, {pipeline_mode = #tpu.pipeline_mode<synchronous>, transform_indices = @transform_3, window_bounds = array<i64: 768, 1024>}, {pipeline_mode = #tpu.pipeline_mode<synchronous>, transform_indices = @transform_4, window_bounds = array<i64: 1, 1024>}, {pipeline_mode = #tpu.pipeline_mode<synchronous>, transform_indices = @transform_5, window_bounds = array<i64: 768, 768>}, {pipeline_mode = #tpu.pipeline_mode<synchronous>, transform_indices = @transform_6, window_bounds = array<i64: 1, 768>}, {pipeline_mode = #tpu.pipeline_mode<synchronous>, transform_indices = @transform_7, window_bounds = array<i64: 1, 256>}, {pipeline_mode = #tpu.pipeline_mode<synchronous>, transform_indices = @transform_8, window_bounds = array<i64: 1, 1>}, {transform_indices = @transform_9, window_bounds = array<i64: 8, 768>}, {transform_indices = @transform_10, window_bounds = array<i64: 8, 1>}]} {
    %c0 = arith.constant 0 : index
    %c0_0 = arith.constant 0 : index
    %0 = vector.load %arg1[%c0, %c0_0] : memref<8x384xbf16, #tpu.memory_space<vmem>>, vector<8x384xbf16>
    %c0_1 = arith.constant 0 : index
    %c0_2 = arith.constant 0 : index
    %1 = vector.load %arg2[%c0_1, %c0_2] : memref<384x768xbf16, #tpu.memory_space<vmem>>, vector<384x768xbf16>
    %cst = arith.constant dense<0.000000e+00> : vector<8x768xf32>
    %2 = tpu.matmul %0, %1, %cst {dimension_numbers = #tpu.dot_dimension_numbers<[1], [0], [0], [1], [0, 0, 1, 1], [], []>} : vector<8x384xbf16>, vector<384x768xbf16>, vector<8x768xf32> -> vector<8x768xf32>
    %c0_3 = arith.constant 0 : index
    %c0_4 = arith.constant 0 : index
    %3 = vector.load %arg3[%c0_3, %c0_4] : memref<1x768xf32, #tpu.memory_space<vmem>>, vector<1x768xf32>
    %4 = vector.broadcast %3 : vector<1x768xf32> to vector<8x768xf32>
    %5 = arith.addf %2, %4 : vector<8x768xf32>
    %6 = arith.truncf %5 : vector<8x768xf32> to vector<8x768xbf16>
    %c0_5 = arith.constant 0 : index
    %c0_6 = arith.constant 0 : index
    %7 = vector.load %arg4[%c0_5, %c0_6] : memref<768x1024xbf16, #tpu.memory_space<vmem>>, vector<768x1024xbf16>
    %cst_7 = arith.constant dense<0.000000e+00> : vector<8x1024xf32>
    %8 = tpu.matmul %6, %7, %cst_7 {dimension_numbers = #tpu.dot_dimension_numbers<[1], [0], [0], [1], [0, 0, 1, 1], [], []>} : vector<8x768xbf16>, vector<768x1024xbf16>, vector<8x1024xf32> -> vector<8x1024xf32>
    %c0_8 = arith.constant 0 : index
    %c0_9 = arith.constant 0 : index
    %9 = vector.load %arg5[%c0_8, %c0_9] : memref<1x1024xf32, #tpu.memory_space<vmem>>, vector<1x1024xf32>
    %10 = vector.broadcast %9 : vector<1x1024xf32> to vector<8x1024xf32>
    %11 = arith.addf %8, %10 : vector<8x1024xf32>
    %cst_10 = arith.constant 0.000000e+00 : f32
    %12 = vector.broadcast %cst_10 : f32 to vector<8x1024xf32>
    %13 = arith.maximumf %11, %12 : vector<8x1024xf32>
    %14 = vector.extract_strided_slice %13 {offsets = [0, 0], sizes = [8, 768], strides = [1, 1]} : vector<8x1024xf32> to vector<8x768xf32>
    %15 = vector.extract_strided_slice %13 {offsets = [0, 768], sizes = [8, 256], strides = [1, 1]} : vector<8x1024xf32> to vector<8x256xf32>
    %16 = arith.truncf %14 : vector<8x768xf32> to vector<8x768xbf16>
    %c0_11 = arith.constant 0 : index
    %c0_12 = arith.constant 0 : index
    %17 = vector.load %arg6[%c0_11, %c0_12] : memref<768x768xbf16, #tpu.memory_space<vmem>>, vector<768x768xbf16>
    %cst_13 = arith.constant dense<0.000000e+00> : vector<8x768xf32>
    %18 = tpu.matmul %16, %17, %cst_13 {dimension_numbers = #tpu.dot_dimension_numbers<[1], [0], [0], [1], [0, 0, 1, 1], [], []>} : vector<8x768xbf16>, vector<768x768xbf16>, vector<8x768xf32> -> vector<8x768xf32>
    %c0_14 = arith.constant 0 : index
    %c0_15 = arith.constant 0 : index
    %19 = vector.load %arg7[%c0_14, %c0_15] : memref<1x768xf32, #tpu.memory_space<vmem>>, vector<1x768xf32>
    %20 = vector.broadcast %19 : vector<1x768xf32> to vector<8x768xf32>
    %21 = arith.addf %18, %20 : vector<8x768xf32>
    %c0_16 = arith.constant 0 : index
    %c0_17 = arith.constant 0 : index
    %22 = vector.load %arg8[%c0_16, %c0_17] : memref<1x256xf32, #tpu.memory_space<vmem>>, vector<1x256xf32>
    %23 = vector.broadcast %22 : vector<1x256xf32> to vector<8x256xf32>
    %24 = arith.mulf %15, %23 : vector<8x256xf32>
    %cst_18 = arith.constant dense<0.000000e+00> : vector<8xf32>
    %25 = vector.multi_reduction <add>, %24, %cst_18 [1] : vector<8x256xf32> to vector<8xf32>
    %26 = vector.shape_cast %25 : vector<8xf32> to vector<8x1xf32>
    %c0_19 = arith.constant 0 : index
    %c0_20 = arith.constant 0 : index
    %27 = vector.load %arg9[%c0_19, %c0_20] : memref<1x1xf32, #tpu.memory_space<vmem>>, vector<1x1xf32>
    %28 = vector.broadcast %27 : vector<1x1xf32> to vector<8x1xf32>
    %29 = arith.addf %26, %28 : vector<8x1xf32>
    %cst_21 = arith.constant 2.000000e+01 : f32
    %30 = vector.broadcast %cst_21 : f32 to vector<8x1xf32>
    %31 = arith.cmpf ogt, %29, %30 : vector<8x1xf32>
    %cst_22 = arith.constant 2.000000e+01 : f32
    %32 = vector.broadcast %cst_22 : f32 to vector<8x1xf32>
    %33 = arith.minimumf %29, %32 : vector<8x1xf32>
    %34 = math.exp %33 : vector<8x1xf32>
    %35 = math.log1p %34 : vector<8x1xf32>
    %36 = arith.select %31, %29, %35 : vector<8x1xi1>, vector<8x1xf32>
    %37 = arith.mulf %21, %21 : vector<8x768xf32>
    %cst_23 = arith.constant dense<0.000000e+00> : vector<8xf32>
    %38 = vector.multi_reduction <add>, %37, %cst_23 [1] : vector<8x768xf32> to vector<8xf32>
    %39 = vector.shape_cast %38 : vector<8xf32> to vector<8x1xf32>
    %cst_24 = arith.constant 1.000000e-24 : f32
    %40 = vector.broadcast %cst_24 : f32 to vector<8x1xf32>
    %41 = arith.maximumf %39, %40 : vector<8x1xf32>
    %42 = math.rsqrt %41 : vector<8x1xf32>
    %43 = vector.broadcast %42 : vector<8x1xf32> to vector<8x768xf32>
    %44 = arith.mulf %21, %43 : vector<8x768xf32>
    %45 = vector.broadcast %36 : vector<8x1xf32> to vector<8x768xf32>
    %46 = arith.mulf %44, %45 : vector<8x768xf32>
    %c0_25 = arith.constant 0 : index
    %c0_26 = arith.constant 0 : index
    %47 = vector.load %arg10[%c0_25, %c0_26] : memref<8x768xf32, #tpu.memory_space<vmem>>, vector<8x768xf32>
    tpu.vector_store %arg10[%c0_25, %c0_26], %46 {strides = array<i32>} : memref<8x768xf32, #tpu.memory_space<vmem>>, vector<8x768xf32>,
    %c0_27 = arith.constant 0 : index
    %c0_28 = arith.constant 0 : index
    %48 = vector.load %arg11[%c0_27, %c0_28] : memref<8x1xf32, #tpu.memory_space<vmem>>, vector<8x1xf32>
    tpu.vector_store %arg11[%c0_27, %c0_28], %36 {strides = array<i32>} : memref<8x1xf32, #tpu.memory_space<vmem>>, vector<8x1xf32>,
    return
  }
  func.func @transform_0(%arg0: i32) -> (i32, i32) {
    %c0_i32 = arith.constant 0 : i32
    %c0_i32_0 = arith.constant 0 : i32
    return %arg0, %c0_i32 : i32, i32
  }
  func.func @transform_1(%arg0: i32) -> (i32, i32) {
    %c0_i32 = arith.constant 0 : i32
    %c0_i32_0 = arith.constant 0 : i32
    %c0_i32_1 = arith.constant 0 : i32
    return %c0_i32, %c0_i32_0 : i32, i32
  }
  func.func @transform_2(%arg0: i32) -> (i32, i32) {
    %c0_i32 = arith.constant 0 : i32
    %c0_i32_0 = arith.constant 0 : i32
    %c0_i32_1 = arith.constant 0 : i32
    return %c0_i32, %c0_i32_0 : i32, i32
  }
  func.func @transform_3(%arg0: i32) -> (i32, i32) {
    %c0_i32 = arith.constant 0 : i32
    %c0_i32_0 = arith.constant 0 : i32
    %c0_i32_1 = arith.constant 0 : i32
    return %c0_i32, %c0_i32_0 : i32, i32
  }
  func.func @transform_4(%arg0: i32) -> (i32, i32) {
    %c0_i32 = arith.constant 0 : i32
    %c0_i32_0 = arith.constant 0 : i32
    %c0_i32_1 = arith.constant 0 : i32
    return %c0_i32, %c0_i32_0 : i32, i32
  }
  func.func @transform_5(%arg0: i32) -> (i32, i32) {
    %c0_i32 = arith.constant 0 : i32
    %c0_i32_0 = arith.constant 0 : i32
    %c0_i32_1 = arith.constant 0 : i32
    return %c0_i32, %c0_i32_0 : i32, i32
  }
  func.func @transform_6(%arg0: i32) -> (i32, i32) {
    %c0_i32 = arith.constant 0 : i32
    %c0_i32_0 = arith.constant 0 : i32
    %c0_i32_1 = arith.constant 0 : i32
    return %c0_i32, %c0_i32_0 : i32, i32
  }
  func.func @transform_7(%arg0: i32) -> (i32, i32) {
    %c0_i32 = arith.constant 0 : i32
    %c0_i32_0 = arith.constant 0 : i32
    %c0_i32_1 = arith.constant 0 : i32
    return %c0_i32, %c0_i32_0 : i32, i32
  }
  func.func @transform_8(%arg0: i32) -> (i32, i32) {
    %c0_i32 = arith.constant 0 : i32
    %c0_i32_0 = arith.constant 0 : i32
    %c0_i32_1 = arith.constant 0 : i32
    return %c0_i32, %c0_i32_0 : i32, i32
  }
  func.func @transform_9(%arg0: i32) -> (i32, i32) {
    %c0_i32 = arith.constant 0 : i32
    %c0_i32_0 = arith.constant 0 : i32
    return %arg0, %c0_i32 : i32, i32
  }
  func.func @transform_10(%arg0: i32) -> (i32, i32) {
    %c0_i32 = arith.constant 0 : i32
    %c0_i32_0 = arith.constant 0 : i32
    return %arg0, %c0_i32 : i32, i32
  }
}

</mosaic_0001>

<llo_original>
// kernel: tpu_custom_call.1
$region0: #{tpu_custom_call.1}
  #allocation0 [shape = 'u32[]', space=smem, size = 0x4, offset = 0x4, fixed_abs, tag = 'smem constant byte address 0x4 - core index']
  #allocation1 [shape = 'u32[144,128]{1,0:T(1,128)}', space=vmem, size = 0x12000, scoped, tag = 'internal scratch']
  #allocation2 [shape = 'f32[1,1]{1,0:T(1,128)S(1)}', space=vmem, size = 0x200, scoped, tag = 'scoped memory for tpu_custom_call.1']
  %s0 = inlined_call_operand.hbm [shape: bf16[8,384], index: 0, kind: input, shape index: {}]
  %s1 = inlined_call_operand.hbm [shape: bf16[384,768], index: 1, kind: input, shape index: {}]
  %s2 = inlined_call_operand.hbm [shape: f32[1,768], index: 2, kind: input, shape index: {}]
  %s3 = inlined_call_operand.hbm [shape: bf16[768,1024], index: 3, kind: input, shape index: {}]
  %s4 = inlined_call_operand.hbm [shape: f32[1,1024], index: 4, kind: input, shape index: {}]
  %s5 = inlined_call_operand.hbm [shape: bf16[768,768], index: 5, kind: input, shape index: {}]
  %s6 = inlined_call_operand.hbm [shape: f32[1,768], index: 6, kind: input, shape index: {}]
  %s7 = inlined_call_operand.hbm [shape: f32[1,256], index: 7, kind: input, shape index: {}]
  %s8 = inlined_call_operand.<no memory space> [shape: f32[1,1], index: 8, kind: input, shape index: {}]
  %s9 = inlined_call_operand.hbm [shape: f32[8,768], index: 9, kind: output, shape index: {0}]
  %s10 = inlined_call_operand.vmem [shape: f32[8,1], index: 10, kind: output, shape index: {1}]
  %11 = xla_tuple %s9, %s10
  %s12 = sld [smem:[#allocation0]]
  $region86: #{tpu_custom_call.1} parent=0
    _
  %s14 = ssub.s32 1, %s12
  %s15 = scalar_select 0, %s14, %s12
  %v16 = vstv %s8
  %17 = vst [vmem:[#allocation2] sm:$0x1] %v16
  $region1: #{tpu_custom_call.1} parent=0
    #allocation3 [shape = 'u8[6144]{0}', space=vmem, size = 0x1800, scoped, tag = 'input window, operand 0, single buffered']
    #allocation4 [shape = 's32[1]{0}', space=sflag, size = 0x4, scoped, tag = 'scoped memory for tpu_custom_call.1']
    #allocation5 [shape = 's32[1]{0}', space=sflag, size = 0x4, scoped, tag = 'scoped memory for tpu_custom_call.1']
    #allocation6 [shape = 'u8[589824]{0}', space=vmem, size = 0x90000, scoped, tag = 'input window, operand 1, single buffered']
    #allocation7 [shape = 's32[1]{0}', space=sflag, size = 0x4, scoped, tag = 'scoped memory for tpu_custom_call.1']
    #allocation8 [shape = 'u8[3072]{0}', space=vmem, size = 0xc00, scoped, tag = 'input window, operand 2, single buffered']
    #allocation9 [shape = 'u8[1572864]{0}', space=vmem, size = 0x180000, scoped, tag = 'input window, operand 3, single buffered']
    #allocation10 [shape = 's32[1]{0}', space=sflag, size = 0x4, scoped, tag = 'scoped memory for tpu_custom_call.1']
    #allocation11 [shape = 'u8[4096]{0}', space=vmem, size = 0x1000, scoped, tag = 'input window, operand 4, single buffered']
    #allocation12 [shape = 'u8[1179648]{0}', space=vmem, size = 0x120000, scoped, tag = 'input window, operand 5, single buffered']
    #allocation13 [shape = 's32[1]{0}', space=sflag, size = 0x4, scoped, tag = 'scoped memory for tpu_custom_call.1']
    #allocation14 [shape = 'u8[3072]{0}', space=vmem, size = 0xc00, scoped, tag = 'input window, operand 6, single buffered']
    #allocation15 [shape = 'u8[1024]{0}', space=vmem, size = 0x400, scoped, tag = 'input window, operand 7, single buffered']
    #allocation16 [shape = 's32[1]{0}', space=sflag, size = 0x4, scoped, tag = 'scoped memory for tpu_custom_call.1']
    #allocation17 [shape = 'u8[24576]{0}', space=vmem, size = 0x6000, scoped, tag = 'output window, operand 0, single buffered']
    %18 = vsyncpa [#allocation4], 0
    %19 = vsyncpa [#allocation7], 0
    %20 = vsyncpa [#allocation10], 0
    %21 = vsyncpa [#allocation13], 0
    %22 = vsyncpa [#allocation16], 0
    %23 = vsyncpa [#allocation5], 0
    // Predicated region
    $region2: #{tpu_custom_call.1} parent=1 // pred_check
      _
    $region3: #{tpu_custom_call.1} parent=1 // pred_check_branch
      %25 = sbr.rel (0) target = $region5
    $region4: #{tpu_custom_call.1} parent=1 // pred_region
      %s27 = ssub.s32 192, 192
      %28 = vsyncadd [#allocation4], %s27
      %s30 = sshll.u32 [#allocation3], 4
      %s31 = int_to_ptr.vmem [resolvable:$true] %s30
      %33 = dma.hbm_to_vmem [thread:$0]  %s0, 192, %s31, [#allocation4]
    $region5: #{tpu_custom_call.1} parent=1 // pred_fallthru
      _
    // Predicated region
    $region6: #{tpu_custom_call.1} parent=1 // pred_check
      _
    $region7: #{tpu_custom_call.1} parent=1 // pred_check_branch
      %35 = sbr.rel (0) target = $region9
    $region8: #{tpu_custom_call.1} parent=1 // pred_region
      %s37 = ssub.s32 18432, 18432
      %38 = vsyncadd [#allocation7], %s37
      %s39 = sshll.u32 [#allocation6], 4
      %s40 = int_to_ptr.vmem [resolvable:$true] %s39
      %45 = dma.hbm_to_vmem [thread:$0]  %s1, 18432, %s40, [#allocation7], 384, 384, 24
    $region9: #{tpu_custom_call.1} parent=1 // pred_fallthru
      _
    // Predicated region
    $region10: #{tpu_custom_call.1} parent=1 // pred_check
      _
    $region11: #{tpu_custom_call.1} parent=1 // pred_check_branch
      %47 = sbr.rel (0) target = $region13
    $region12: #{tpu_custom_call.1} parent=1 // pred_region
      %s49 = ssub.s32 96, 96
      %50 = vsyncadd [#allocation7], %s49
      %s52 = sshll.u32 [#allocation8], 4
      %s53 = int_to_ptr.vmem [resolvable:$true] %s52
      %55 = dma.hbm_to_vmem [thread:$0]  %s2, 96, %s53, [#allocation7]
    $region13: #{tpu_custom_call.1} parent=1 // pred_fallthru
      _
    // Predicated region
    $region14: #{tpu_custom_call.1} parent=1 // pred_check
      _
    $region15: #{tpu_custom_call.1} parent=1 // pred_check_branch
      %57 = sbr.rel (0) target = $region17
    $region16: #{tpu_custom_call.1} parent=1 // pred_region
      %s59 = ssub.s32 49152, 49152
      %60 = vsyncadd [#allocation10], %s59
      %s61 = sshll.u32 [#allocation9], 4
      %s62 = int_to_ptr.vmem [resolvable:$true] %s61
      %67 = dma.hbm_to_vmem [thread:$0]  %s3, 49152, %s62, [#allocation10], 512, 512, 32
    $region17: #{tpu_custom_call.1} parent=1 // pred_fallthru
      _
    // Predicated region
    $region18: #{tpu_custom_call.1} parent=1 // pred_check
      _
    $region19: #{tpu_custom_call.1} parent=1 // pred_check_branch
      %69 = sbr.rel (0) target = $region21
    $region20: #{tpu_custom_call.1} parent=1 // pred_region
      %s71 = ssub.s32 128, 128
      %72 = vsyncadd [#allocation10], %s71
      %s74 = sshll.u32 [#allocation11], 4
      %s75 = int_to_ptr.vmem [resolvable:$true] %s74
      %77 = dma.hbm_to_vmem [thread:$0]  %s4, 128, %s75, [#allocation10]
    $region21: #{tpu_custom_call.1} parent=1 // pred_fallthru
      _
    // Predicated region
    $region22: #{tpu_custom_call.1} parent=1 // pred_check
      _
    $region23: #{tpu_custom_call.1} parent=1 // pred_check_branch
      %79 = sbr.rel (0) target = $region25
    $region24: #{tpu_custom_call.1} parent=1 // pred_region
      %s81 = ssub.s32 36864, 36864
      %82 = vsyncadd [#allocation13], %s81
      %s83 = sshll.u32 [#allocation12], 4
      %s84 = int_to_ptr.vmem [resolvable:$true] %s83
      %89 = dma.hbm_to_vmem [thread:$0]  %s5, 36864, %s84, [#allocation13], 384, 384, 24
    $region25: #{tpu_custom_call.1} parent=1 // pred_fallthru
      _
    // Predicated region
    $region26: #{tpu_custom_call.1} parent=1 // pred_check
      _
    $region27: #{tpu_custom_call.1} parent=1 // pred_check_branch
      %91 = sbr.rel (0) target = $region29
    $region28: #{tpu_custom_call.1} parent=1 // pred_region
      %s93 = ssub.s32 96, 96
      %94 = vsyncadd [#allocation13], %s93
      %s96 = sshll.u32 [#allocation14], 4
      %s97 = int_to_ptr.vmem [resolvable:$true] %s96
      %99 = dma.hbm_to_vmem [thread:$0]  %s6, 96, %s97, [#allocation13]
    $region29: #{tpu_custom_call.1} parent=1 // pred_fallthru
      _
    // Predicated region
    $region30: #{tpu_custom_call.1} parent=1 // pred_check
      _
    $region31: #{tpu_custom_call.1} parent=1 // pred_check_branch
      %101 = sbr.rel (0) target = $region33
    $region32: #{tpu_custom_call.1} parent=1 // pred_region
      %s103 = ssub.s32 32, 32
      %104 = vsyncadd [#allocation16], %s103
      %s106 = sshll.u32 [#allocation15], 4
      %s107 = int_to_ptr.vmem [resolvable:$true] %s106
      %109 = dma.hbm_to_vmem [thread:$0]  %s7, 32, %s107, [#allocation16]
    $region33: #{tpu_custom_call.1} parent=1 // pred_fallthru
      _
    // Predicated region
    $region34: #{tpu_custom_call.1} parent=1 // pred_check
      _
    $region35: #{tpu_custom_call.1} parent=1 // pred_check_branch
      %111 = sbr.rel (0) target = $region37
    $region36: #{tpu_custom_call.1} parent=1 // pred_region
      _
    $region37: #{tpu_custom_call.1} parent=1 // pred_fallthru
      _
    // Predicated region
    $region38: #{tpu_custom_call.1} parent=1 // pred_check
      _
    $region39: #{tpu_custom_call.1} parent=1 // pred_check_branch
      %113 = sbr.rel (0) target = $region41
    $region40: #{tpu_custom_call.1} parent=1 // pred_region
      %114 = dma.done [#allocation4], 192
    $region41: #{tpu_custom_call.1} parent=1 // pred_fallthru
      _
    // Predicated region
    $region42: #{tpu_custom_call.1} parent=1 // pred_check
      _
    $region43: #{tpu_custom_call.1} parent=1 // pred_check_branch
      %116 = sbr.rel (0) target = $region45
    $region44: #{tpu_custom_call.1} parent=1 // pred_region
      %117 = dma.done [#allocation7], 18432
    $region45: #{tpu_custom_call.1} parent=1 // pred_fallthru
      _
    // Predicated region
    $region46: #{tpu_custom_call.1} parent=1 // pred_check
      _
    $region47: #{tpu_custom_call.1} parent=1 // pred_check_branch
      %119 = sbr.rel (0) target = $region49
    $region48: #{tpu_custom_call.1} parent=1 // pred_region
      %120 = dma.done [#allocation7], 96
    $region49: #{tpu_custom_call.1} parent=1 // pred_fallthru
      _
    // Predicated region
    $region50: #{tpu_custom_call.1} parent=1 // pred_check
      _
    $region51: #{tpu_custom_call.1} parent=1 // pred_check_branch
      %122 = sbr.rel (0) target = $region53
    $region52: #{tpu_custom_call.1} parent=1 // pred_region
      %123 = dma.done [#allocation10], 49152
    $region53: #{tpu_custom_call.1} parent=1 // pred_fallthru
      _
    // Predicated region
    $region54: #{tpu_custom_call.1} parent=1 // pred_check
      _
    $region55: #{tpu_custom_call.1} parent=1 // pred_check_branch
      %125 = sbr.rel (0) target = $region57
    $region56: #{tpu_custom_call.1} parent=1 // pred_region
      %126 = dma.done [#allocation10], 128
    $region57: #{tpu_custom_call.1} parent=1 // pred_fallthru
      _
    // Predicated region
    $region58: #{tpu_custom_call.1} parent=1 // pred_check
      _
    $region59: #{tpu_custom_call.1} parent=1 // pred_check_branch
      %128 = sbr.rel (0) target = $region61
    $region60: #{tpu_custom_call.1} parent=1 // pred_region
      %129 = dma.done [#allocation13], 36864
    $region61: #{tpu_custom_call.1} parent=1 // pred_fallthru
      _
    // Predicated region
    $region62: #{tpu_custom_call.1} parent=1 // pred_check
      _
    $region63: #{tpu_custom_call.1} parent=1 // pred_check_branch
      %131 = sbr.rel (0) target = $region65
    $region64: #{tpu_custom_call.1} parent=1 // pred_region
      %132 = dma.done [#allocation13], 96
    $region65: #{tpu_custom_call.1} parent=1 // pred_fallthru
      _
    // Predicated region
    $region66: #{tpu_custom_call.1} parent=1 // pred_check
      _
    $region67: #{tpu_custom_call.1} parent=1 // pred_check_branch
      %134 = sbr.rel (0) target = $region69
    $region68: #{tpu_custom_call.1} parent=1 // pred_region
      %135 = dma.done [#allocation16], 32
    $region69: #{tpu_custom_call.1} parent=1 // pred_fallthru
      _
    %v137 = vld [vmem:[#allocation3] sm:$0xff]
    %v138 = vld [vmem:[#allocation3 + $0x8] sm:$0xf]
    %v139 = vld [vmem:[#allocation6] sm:$0xff]
    %v140 = vld [vmem:[#allocation6 + $0x8] sm:$0xff]
    %v141 = vld [vmem:[#allocation6 + $0x10] sm:$0xff]
    %v142 = vld [vmem:[#allocation6 + $0x18] sm:$0xff]
    %v143 = vld [vmem:[#allocation6 + $0x20] sm:$0xff]
    %v144 = vld [vmem:[#allocation6 + $0x28] sm:$0xff]
    %v145 = vld [vmem:[#allocation6 + $0x30] sm:$0xff]
    %v146 = vld [vmem:[#allocation6 + $0x38] sm:$0xff]
    %v147 = vld [vmem:[#allocation6 + $0x40] sm:$0xff]
    %v148 = vld [vmem:[#allocation6 + $0x48] sm:$0xff]
    %v149 = vld [vmem:[#allocation6 + $0x50] sm:$0xff]
    %v150 = vld [vmem:[#allocation6 + $0x58] sm:$0xff]
    %v151 = vld [vmem:[#allocation6 + $0x60] sm:$0xff]
    %v152 = vld [vmem:[#allocation6 + $0x68] sm:$0xff]
    %v153 = vld [vmem:[#allocation6 + $0x70] sm:$0xff]
    %v154 = vld [vmem:[#allocation6 + $0x78] sm:$0xff]
    %v155 = vld [vmem:[#allocation6 + $0x80] sm:$0xff]
    %v156 = vld [vmem:[#allocation6 + $0x88] sm:$0xff]
    %v157 = vld [vmem:[#allocation6 + $0x90] sm:$0xff]
    %v158 = vld [vmem:[#allocation6 + $0x98] sm:$0xff]
    %v159 = vld [vmem:[#allocation6 + $0xa0] sm:$0xff]
    %v160 = vld [vmem:[#allocation6 + $0xa8] sm:$0xff]
    %v161 = vld [vmem:[#allocation6 + $0xb0] sm:$0xff]
    %v162 = vld [vmem:[#allocation6 + $0xb8] sm:$0xff]
    %v163 = vld [vmem:[#allocation6 + $0xc0] sm:$0xff]
    %v164 = vld [vmem:[#allocation6 + $0xc8] sm:$0xff]
    %v165 = vld [vmem:[#allocation6 + $0xd0] sm:$0xff]
    %v166 = vld [vmem:[#allocation6 + $0xd8] sm:$0xff]
    %v167 = vld [vmem:[#allocation6 + $0xe0] sm:$0xff]
    %v168 = vld [vmem:[#allocation6 + $0xe8] sm:$0xff]
    %v169 = vld [vmem:[#allocation6 + $0xf0] sm:$0xff]
    %v170 = vld [vmem:[#allocation6 + $0xf8] sm:$0xff]
    %v171 = vld [vmem:[#allocation6 + $0x100] sm:$0xff]
    %v172 = vld [vmem:[#allocation6 + $0x108] sm:$0xff]
    %v173 = vld [vmem:[#allocation6 + $0x110] sm:$0xff]
    %v174 = vld [vmem:[#allocation6 + $0x118] sm:$0xff]
    %v175 = vld [vmem:[#allocation6 + $0x120] sm:$0xff]
    %v176 = vld [vmem:[#allocation6 + $0x128] sm:$0xff]
    %v177 = vld [vmem:[#allocation6 + $0x130] sm:$0xff]
    %v178 = vld [vmem:[#allocation6 + $0x138] sm:$0xff]
    %v179 = vld [vmem:[#allocation6 + $0x140] sm:$0xff]
    %v180 = vld [vmem:[#allocation6 + $0x148] sm:$0xff]
    %v181 = vld [vmem:[#allocation6 + $0x150] sm:$0xff]
    %v182 = vld [vmem:[#allocation6 + $0x158] sm:$0xff]
    %v183 = vld [vmem:[#allocation6 + $0x160] sm:$0xff]
    %v184 = vld [vmem:[#allocation6 + $0x168] sm:$0xff]
    %v185 = vld [vmem:[#allocation6 + $0x170] sm:$0xff]
    %v186 = vld [vmem:[#allocation6 + $0x178] sm:$0xff]
    %v187 = vld [vmem:[#allocation6 + $0x180] sm:$0xff]
    %v188 = vld [vmem:[#allocation6 + $0x188] sm:$0xff]
    %v189 = vld [vmem:[#allocation6 + $0x190] sm:$0xff]
    %v190 = vld [vmem:[#allocation6 + $0x198] sm:$0xff]
    %v191 = vld [vmem:[#allocation6 + $0x1a0] sm:$0xff]
    %v192 = vld [vmem:[#allocation6 + $0x1a8] sm:$0xff]
    %v193 = vld [vmem:[#allocation6 + $0x1b0] sm:$0xff]
    %v194 = vld [vmem:[#allocation6 + $0x1b8] sm:$0xff]
    %v195 = vld [vmem:[#allocation6 + $0x1c0] sm:$0xff]
    %v196 = vld [vmem:[#allocation6 + $0x1c8] sm:$0xff]
    %v197 = vld [vmem:[#allocation6 + $0x1d0] sm:$0xff]
    %v198 = vld [vmem:[#allocation6 + $0x1d8] sm:$0xff]
    %v199 = vld [vmem:[#allocation6 + $0x1e0] sm:$0xff]
    %v200 = vld [vmem:[#allocation6 + $0x1e8] sm:$0xff]
    %v201 = vld [vmem:[#allocation6 + $0x1f0] sm:$0xff]
    %v202 = vld [vmem:[#allocation6 + $0x1f8] sm:$0xff]
    %v203 = vld [vmem:[#allocation6 + $0x200] sm:$0xff]
    %v204 = vld [vmem:[#allocation6 + $0x208] sm:$0xff]
    %v205 = vld [vmem:[#allocation6 + $0x210] sm:$0xff]
    %v206 = vld [vmem:[#allocation6 + $0x218] sm:$0xff]
    %v207 = vld [vmem:[#allocation6 + $0x220] sm:$0xff]
    %v208 = vld [vmem:[#allocation6 + $0x228] sm:$0xff]
    %v209 = vld [vmem:[#allocation6 + $0x230] sm:$0xff]
    %v210 = vld [vmem:[#allocation6 + $0x238] sm:$0xff]
    %v211 = vld [vmem:[#allocation6 + $0x240] sm:$0xff]
    %v212 = vld [vmem:[#allocation6 + $0x248] sm:$0xff]
    %v213 = vld [vmem:[#allocation6 + $0x250] sm:$0xff]
    %v214 = vld [vmem:[#allocation6 + $0x258] sm:$0xff]
    %v215 = vld [vmem:[#allocation6 + $0x260] sm:$0xff]
    %v216 = vld [vmem:[#allocation6 + $0x268] sm:$0xff]
    %v217 = vld [vmem:[#allocation6 + $0x270] sm:$0xff]
    %v218 = vld [vmem:[#allocation6 + $0x278] sm:$0xff]
    %v219 = vld [vmem:[#allocation6 + $0x280] sm:$0xff]
    %v220 = vld [vmem:[#allocation6 + $0x288] sm:$0xff]
    %v221 = vld [vmem:[#allocation6 + $0x290] sm:$0xff]
    %v222 = vld [vmem:[#allocation6 + $0x298] sm:$0xff]
    %v223 = vld [vmem:[#allocation6 + $0x2a0] sm:$0xff]
    %v224 = vld [vmem:[#allocation6 + $0x2a8] sm:$0xff]
    %v225 = vld [vmem:[#allocation6 + $0x2b0] sm:$0xff]
    %v226 = vld [vmem:[#allocation6 + $0x2b8] sm:$0xff]
    %v227 = vld [vmem:[#allocation6 + $0x2c0] sm:$0xff]
    %v228 = vld [vmem:[#allocation6 + $0x2c8] sm:$0xff]
    %v229 = vld [vmem:[#allocation6 + $0x2d0] sm:$0xff]
    %v230 = vld [vmem:[#allocation6 + $0x2d8] sm:$0xff]
    %v231 = vld [vmem:[#allocation6 + $0x2e0] sm:$0xff]
    %v232 = vld [vmem:[#allocation6 + $0x2e8] sm:$0xff]
    %v233 = vld [vmem:[#allocation6 + $0x2f0] sm:$0xff]
    %v234 = vld [vmem:[#allocation6 + $0x2f8] sm:$0xff]
    %v235 = vld [vmem:[#allocation6 + $0x300] sm:$0xff]
    %v236 = vld [vmem:[#allocation6 + $0x308] sm:$0xff]
    %v237 = vld [vmem:[#allocation6 + $0x310] sm:$0xff]
    %v238 = vld [vmem:[#allocation6 + $0x318] sm:$0xff]
    %v239 = vld [vmem:[#allocation6 + $0x320] sm:$0xff]
    %v240 = vld [vmem:[#allocation6 + $0x328] sm:$0xff]
    %v241 = vld [vmem:[#allocation6 + $0x330] sm:$0xff]
    %v242 = vld [vmem:[#allocation6 + $0x338] sm:$0xff]
    %v243 = vld [vmem:[#allocation6 + $0x340] sm:$0xff]
    %v244 = vld [vmem:[#allocation6 + $0x348] sm:$0xff]
    %v245 = vld [vmem:[#allocation6 + $0x350] sm:$0xff]
    %v246 = vld [vmem:[#allocation6 + $0x358] sm:$0xff]
    %v247 = vld [vmem:[#allocation6 + $0x360] sm:$0xff]
    %v248 = vld [vmem:[#allocation6 + $0x368] sm:$0xff]
    %v249 = vld [vmem:[#allocation6 + $0x370] sm:$0xff]
    %v250 = vld [vmem:[#allocation6 + $0x378] sm:$0xff]
    %v251 = vld [vmem:[#allocation6 + $0x380] sm:$0xff]
    %v252 = vld [vmem:[#allocation6 + $0x388] sm:$0xff]
    %v253 = vld [vmem:[#allocation6 + $0x390] sm:$0xff]
    %v254 = vld [vmem:[#allocation6 + $0x398] sm:$0xff]
    %v255 = vld [vmem:[#allocation6 + $0x3a0] sm:$0xff]
    %v256 = vld [vmem:[#allocation6 + $0x3a8] sm:$0xff]
    %v257 = vld [vmem:[#allocation6 + $0x3b0] sm:$0xff]
    %v258 = vld [vmem:[#allocation6 + $0x3b8] sm:$0xff]
    %v259 = vld [vmem:[#allocation6 + $0x3c0] sm:$0xff]
    %v260 = vld [vmem:[#allocation6 + $0x3c8] sm:$0xff]
    %v261 = vld [vmem:[#allocation6 + $0x3d0] sm:$0xff]
    %v262 = vld [vmem:[#allocation6 + $0x3d8] sm:$0xff]
    %v263 = vld [vmem:[#allocation6 + $0x3e0] sm:$0xff]
    %v264 = vld [vmem:[#allocation6 + $0x3e8] sm:$0xff]
    %v265 = vld [vmem:[#allocation6 + $0x3f0] sm:$0xff]
    %v266 = vld [vmem:[#allocation6 + $0x3f8] sm:$0xff]
    %v267 = vld [vmem:[#allocation6 + $0x400] sm:$0xff]
    %v268 = vld [vmem:[#allocation6 + $0x408] sm:$0xff]
    %v269 = vld [vmem:[#allocation6 + $0x410] sm:$0xff]
    %v270 = vld [vmem:[#allocation6 + $0x418] sm:$0xff]
    %v271 = vld [vmem:[#allocation6 + $0x420] sm:$0xff]
    %v272 = vld [vmem:[#allocation6 + $0x428] sm:$0xff]
    %v273 = vld [vmem:[#allocation6 + $0x430] sm:$0xff]
    %v274 = vld [vmem:[#allocation6 + $0x438] sm:$0xff]
    %v275 = vld [vmem:[#allocation6 + $0x440] sm:$0xff]
    %v276 = vld [vmem:[#allocation6 + $0x448] sm:$0xff]
    %v277 = vld [vmem:[#allocation6 + $0x450] sm:$0xff]
    %v278 = vld [vmem:[#allocation6 + $0x458] sm:$0xff]
    %v279 = vld [vmem:[#allocation6 + $0x460] sm:$0xff]
    %v280 = vld [vmem:[#allocation6 + $0x468] sm:$0xff]
    %v281 = vld [vmem:[#allocation6 + $0x470] sm:$0xff]
    %v282 = vld [vmem:[#allocation6 + $0x478] sm:$0xff]
    %v283 = vld [vmem:[#allocation8] sm:$0x3f]
    %v285 = vlaneseq
    %v286 = vshrl.u32 %v285, 7
    %v287 = vsub.s32 0, %v286
    %v288 = vrot.slane %v283, %v287
    %v289 = vlaneseq
    %v290 = vshrl.u32 %v289, 7
    %v291 = vsub.s32 1, %v290
    %v292 = vrot.slane %v283, %v291
    %v293 = vlaneseq
    %v294 = vshrl.u32 %v293, 7
    %v295 = vsub.s32 2, %v294
    %v296 = vrot.slane %v283, %v295
    %v297 = vlaneseq
    %v298 = vshrl.u32 %v297, 7
    %v299 = vsub.s32 3, %v298
    %v300 = vrot.slane %v283, %v299
    %v301 = vlaneseq
    %v302 = vshrl.u32 %v301, 7
    %v303 = vsub.s32 4, %v302
    %v304 = vrot.slane %v283, %v303
    %v305 = vlaneseq
    %v306 = vshrl.u32 %v305, 7
    %v307 = vsub.s32 5, %v306
    %v308 = vrot.slane %v283, %v307
    %v317 = vunpack.c.l.b16 %v137
    %v318 = vunpack.c.h.b16 %v137
    %v319 = vunpack.c.l.b16 %v138
    %v320 = vpack.c.b16 %v317, %v317
    %v321 = vpack.c.b16 %v318, %v318
    %v322 = vpack.c.b16 %v319, %v319
    %v470 = vunpack.c.l.b16 %v139
    %v471 = vunpack.c.h.b16 %v139
    %v472 = vunpack.c.l.b16 %v140
    %v473 = vunpack.c.h.b16 %v140
    %v474 = vunpack.c.l.b16 %v141
    %v475 = vunpack.c.h.b16 %v141
    %v476 = vunpack.c.l.b16 %v142
    %v477 = vunpack.c.h.b16 %v142
    %v478 = vunpack.c.l.b16 %v143
    %v479 = vunpack.c.h.b16 %v143
    %v480 = vunpack.c.l.b16 %v144
    %v481 = vunpack.c.h.b16 %v144
    %v482 = vunpack.c.l.b16 %v145
    %v483 = vunpack.c.h.b16 %v145
    %v484 = vunpack.c.l.b16 %v146
    %v485 = vunpack.c.h.b16 %v146
    %v486 = vunpack.c.l.b16 %v147
    %v487 = vunpack.c.h.b16 %v147
    %v488 = vunpack.c.l.b16 %v148
    %v489 = vunpack.c.h.b16 %v148
    %v490 = vunpack.c.l.b16 %v149
    %v491 = vunpack.c.h.b16 %v149
    %v492 = vunpack.c.l.b16 %v150
    %v493 = vunpack.c.h.b16 %v150
    %v494 = vunpack.c.l.b16 %v151
    %v495 = vunpack.c.h.b16 %v151
    %v496 = vunpack.c.l.b16 %v152
    %v497 = vunpack.c.h.b16 %v152
    %v498 = vunpack.c.l.b16 %v153
    %v499 = vunpack.c.h.b16 %v153
    %v500 = vunpack.c.l.b16 %v154
    %v501 = vunpack.c.h.b16 %v154
    %v502 = vunpack.c.l.b16 %v155
    %v503 = vunpack.c.h.b16 %v155
    %v504 = vunpack.c.l.b16 %v156
    %v505 = vunpack.c.h.b16 %v156
    %v506 = vunpack.c.l.b16 %v157
    %v507 = vunpack.c.h.b16 %v157
    %v508 = vunpack.c.l.b16 %v158
    %v509 = vunpack.c.h.b16 %v158
    %v510 = vunpack.c.l.b16 %v159
    %v511 = vunpack.c.h.b16 %v159
    %v512 = vunpack.c.l.b16 %v160
    %v513 = vunpack.c.h.b16 %v160
    %v514 = vunpack.c.l.b16 %v161
    %v515 = vunpack.c.h.b16 %v161
    %v516 = vunpack.c.l.b16 %v162
    %v517 = vunpack.c.h.b16 %v162
    %v518 = vunpack.c.l.b16 %v163
    %v519 = vunpack.c.h.b16 %v163
    %v520 = vunpack.c.l.b16 %v164
    %v521 = vunpack.c.h.b16 %v164
    %v522 = vunpack.c.l.b16 %v165
    %v523 = vunpack.c.h.b16 %v165
    %v524 = vunpack.c.l.b16 %v166
    %v525 = vunpack.c.h.b16 %v166
    %v526 = vunpack.c.l.b16 %v167
    %v527 = vunpack.c.h.b16 %v167
    %v528 = vunpack.c.l.b16 %v168
    %v529 = vunpack.c.h.b16 %v168
    %v530 = vunpack.c.l.b16 %v169
    %v531 = vunpack.c.h.b16 %v169
    %v532 = vunpack.c.l.b16 %v170
    %v533 = vunpack.c.h.b16 %v170
    %v534 = vunpack.c.l.b16 %v171
    %v535 = vunpack.c.h.b16 %v171
    %v536 = vunpack.c.l.b16 %v172
    %v537 = vunpack.c.h.b16 %v172
    %v538 = vunpack.c.l.b16 %v173
    %v539 = vunpack.c.h.b16 %v173
    %v540 = vunpack.c.l.b16 %v174
    %v541 = vunpack.c.h.b16 %v174
    %v542 = vunpack.c.l.b16 %v175
    %v543 = vunpack.c.h.b16 %v175
    %v544 = vunpack.c.l.b16 %v176
    %v545 = vunpack.c.h.b16 %v176
    %v546 = vunpack.c.l.b16 %v177
    %v547 = vunpack.c.h.b16 %v177
    %v548 = vunpack.c.l.b16 %v178
    %v549 = vunpack.c.h.b16 %v178
    %v550 = vunpack.c.l.b16 %v179
    %v551 = vunpack.c.h.b16 %v179
    %v552 = vunpack.c.l.b16 %v180
    %v553 = vunpack.c.h.b16 %v180
    %v554 = vunpack.c.l.b16 %v181
    %v555 = vunpack.c.h.b16 %v181
    %v556 = vunpack.c.l.b16 %v182
    %v557 = vunpack.c.h.b16 %v182
    %v558 = vunpack.c.l.b16 %v183
    %v559 = vunpack.c.h.b16 %v183
    %v560 = vunpack.c.l.b16 %v184
    %v561 = vunpack.c.h.b16 %v184
    %v562 = vunpack.c.l.b16 %v185
    %v563 = vunpack.c.h.b16 %v185
    %v564 = vunpack.c.l.b16 %v186
    %v565 = vunpack.c.h.b16 %v186
    %v566 = vunpack.c.l.b16 %v187
    %v567 = vunpack.c.h.b16 %v187
    %v568 = vunpack.c.l.b16 %v188
    %v569 = vunpack.c.h.b16 %v188
    %v570 = vunpack.c.l.b16 %v189
    %v571 = vunpack.c.h.b16 %v189
    %v572 = vunpack.c.l.b16 %v190
    %v573 = vunpack.c.h.b16 %v190
    %v574 = vunpack.c.l.b16 %v191
    %v575 = vunpack.c.h.b16 %v191
    %v576 = vunpack.c.l.b16 %v192
    %v577 = vunpack.c.h.b16 %v192
    %v578 = vunpack.c.l.b16 %v193
    %v579 = vunpack.c.h.b16 %v193
    %v580 = vunpack.c.l.b16 %v194
    %v581 = vunpack.c.h.b16 %v194
    %v582 = vunpack.c.l.b16 %v195
    %v583 = vunpack.c.h.b16 %v195
    %v584 = vunpack.c.l.b16 %v196
    %v585 = vunpack.c.h.b16 %v196
    %v586 = vunpack.c.l.b16 %v197
    %v587 = vunpack.c.h.b16 %v197
    %v588 = vunpack.c.l.b16 %v198
    %v589 = vunpack.c.h.b16 %v198
    %v590 = vunpack.c.l.b16 %v199
    %v591 = vunpack.c.h.b16 %v199
    %v592 = vunpack.c.l.b16 %v200
    %v593 = vunpack.c.h.b16 %v200
    %v594 = vunpack.c.l.b16 %v201
    %v595 = vunpack.c.h.b16 %v201
    %v596 = vunpack.c.l.b16 %v202
    %v597 = vunpack.c.h.b16 %v202
    %v598 = vunpack.c.l.b16 %v203
    %v599 = vunpack.c.h.b16 %v203
    %v600 = vunpack.c.l.b16 %v204
    %v601 = vunpack.c.h.b16 %v204
    %v602 = vunpack.c.l.b16 %v205
    %v603 = vunpack.c.h.b16 %v205
    %v604 = vunpack.c.l.b16 %v206
    %v605 = vunpack.c.h.b16 %v206
    %v606 = vunpack.c.l.b16 %v207
    %v607 = vunpack.c.h.b16 %v207
    %v608 = vunpack.c.l.b16 %v208
    %v609 = vunpack.c.h.b16 %v208
    %v610 = vunpack.c.l.b16 %v209
    %v611 = vunpack.c.h.b16 %v209
    %v612 = vunpack.c.l.b16 %v210
    %v613 = vunpack.c.h.b16 %v210
    %v614 = vunpack.c.l.b16 %v211
    %v615 = vunpack.c.h.b16 %v211
    %v616 = vunpack.c.l.b16 %v212
    %v617 = vunpack.c.h.b16 %v212
    %v618 = vunpack.c.l.b16 %v213
    %v619 = vunpack.c.h.b16 %v213
    %v620 = vunpack.c.l.b16 %v214
    %v621 = vunpack.c.h.b16 %v214
    %v622 = vunpack.c.l.b16 %v215
    %v623 = vunpack.c.h.b16 %v215
    %v624 = vunpack.c.l.b16 %v216
    %v625 = vunpack.c.h.b16 %v216
    %v626 = vunpack.c.l.b16 %v217
    %v627 = vunpack.c.h.b16 %v217
    %v628 = vunpack.c.l.b16 %v218
    %v629 = vunpack.c.h.b16 %v218
    %v630 = vunpack.c.l.b16 %v219
    %v631 = vunpack.c.h.b16 %v219
    %v632 = vunpack.c.l.b16 %v220
    %v633 = vunpack.c.h.b16 %v220
    %v634 = vunpack.c.l.b16 %v221
    %v635 = vunpack.c.h.b16 %v221
    %v636 = vunpack.c.l.b16 %v222
    %v637 = vunpack.c.h.b16 %v222
    %v638 = vunpack.c.l.b16 %v223
    %v639 = vunpack.c.h.b16 %v223
    %v640 = vunpack.c.l.b16 %v224
    %v641 = vunpack.c.h.b16 %v224
    %v642 = vunpack.c.l.b16 %v225
    %v643 = vunpack.c.h.b16 %v225
    %v644 = vunpack.c.l.b16 %v226
    %v645 = vunpack.c.h.b16 %v226
    %v646 = vunpack.c.l.b16 %v227
    %v647 = vunpack.c.h.b16 %v227
    %v648 = vunpack.c.l.b16 %v228
    %v649 = vunpack.c.h.b16 %v228
    %v650 = vunpack.c.l.b16 %v229
    %v651 = vunpack.c.h.b16 %v229
    %v652 = vunpack.c.l.b16 %v230
    %v653 = vunpack.c.h.b16 %v230
    %v654 = vunpack.c.l.b16 %v231
    %v655 = vunpack.c.h.b16 %v231
    %v656 = vunpack.c.l.b16 %v232
    %v657 = vunpack.c.h.b16 %v232
    %v658 = vunpack.c.l.b16 %v233
    %v659 = vunpack.c.h.b16 %v233
    %v660 = vunpack.c.l.b16 %v234
    %v661 = vunpack.c.h.b16 %v234
    %v662 = vunpack.c.l.b16 %v235
    %v663 = vunpack.c.h.b16 %v235
    %v664 = vunpack.c.l.b16 %v236
    %v665 = vunpack.c.h.b16 %v236
    %v666 = vunpack.c.l.b16 %v237
    %v667 = vunpack.c.h.b16 %v237
    %v668 = vunpack.c.l.b16 %v238
    %v669 = vunpack.c.h.b16 %v238
    %v670 = vunpack.c.l.b16 %v239
    %v671 = vunpack.c.h.b16 %v239
    %v672 = vunpack.c.l.b16 %v240
    %v673 = vunpack.c.h.b16 %v240
    %v674 = vunpack.c.l.b16 %v241
    %v675 = vunpack.c.h.b16 %v241
    %v676 = vunpack.c.l.b16 %v242
    %v677 = vunpack.c.h.b16 %v242
    %v678 = vunpack.c.l.b16 %v243
    %v679 = vunpack.c.h.b16 %v243
    %v680 = vunpack.c.l.b16 %v244
    %v681 = vunpack.c.h.b16 %v244
    %v682 = vunpack.c.l.b16 %v245
    %v683 = vunpack.c.h.b16 %v245
    %v684 = vunpack.c.l.b16 %v246
    %v685 = vunpack.c.h.b16 %v246
    %v686 = vunpack.c.l.b16 %v247
    %v687 = vunpack.c.h.b16 %v247
    %v688 = vunpack.c.l.b16 %v248
    %v689 = vunpack.c.h.b16 %v248
    %v690 = vunpack.c.l.b16 %v249
    %v691 = vunpack.c.h.b16 %v249
    %v692 = vunpack.c.l.b16 %v250
    %v693 = vunpack.c.h.b16 %v250
    %v694 = vunpack.c.l.b16 %v251
    %v695 = vunpack.c.h.b16 %v251
    %v696 = vunpack.c.l.b16 %v252
    %v697 = vunpack.c.h.b16 %v252
    %v698 = vunpack.c.l.b16 %v253
    %v699 = vunpack.c.h.b16 %v253
    %v700 = vunpack.c.l.b16 %v254
    %v701 = vunpack.c.h.b16 %v254
    %v702 = vunpack.c.l.b16 %v255
    %v703 = vunpack.c.h.b16 %v255
    %v704 = vunpack.c.l.b16 %v256
    %v705 = vunpack.c.h.b16 %v256
    %v706 = vunpack.c.l.b16 %v257
    %v707 = vunpack.c.h.b16 %v257
    %v708 = vunpack.c.l.b16 %v258
    %v709 = vunpack.c.h.b16 %v258
    %v710 = vunpack.c.l.b16 %v259
    %v711 = vunpack.c.h.b16 %v259
    %v712 = vunpack.c.l.b16 %v260
    %v713 = vunpack.c.h.b16 %v260
    %v714 = vunpack.c.l.b16 %v261
    %v715 = vunpack.c.h.b16 %v261
    %v716 = vunpack.c.l.b16 %v262
    %v717 = vunpack.c.h.b16 %v262
    %v718 = vunpack.c.l.b16 %v263
    %v719 = vunpack.c.h.b16 %v263
    %v720 = vunpack.c.l.b16 %v264
    %v721 = vunpack.c.h.b16 %v264
    %v722 = vunpack.c.l.b16 %v265
    %v723 = vunpack.c.h.b16 %v265
    %v724 = vunpack.c.l.b16 %v266
    %v725 = vunpack.c.h.b16 %v266
    %v726 = vunpack.c.l.b16 %v267
    %v727 = vunpack.c.h.b16 %v267
    %v728 = vunpack.c.l.b16 %v268
    %v729 = vunpack.c.h.b16 %v268
    %v730 = vunpack.c.l.b16 %v269
    %v731 = vunpack.c.h.b16 %v269
    %v732 = vunpack.c.l.b16 %v270
    %v733 = vunpack.c.h.b16 %v270
    %v734 = vunpack.c.l.b16 %v271
    %v735 = vunpack.c.h.b16 %v271
    %v736 = vunpack.c.l.b16 %v272
    %v737 = vunpack.c.h.b16 %v272
    %v738 = vunpack.c.l.b16 %v273
    %v739 = vunpack.c.h.b16 %v273
    %v740 = vunpack.c.l.b16 %v274
    %v741 = vunpack.c.h.b16 %v274
    %v742 = vunpack.c.l.b16 %v275
    %v743 = vunpack.c.h.b16 %v275
    %v744 = vunpack.c.l.b16 %v276
    %v745 = vunpack.c.h.b16 %v276
    %v746 = vunpack.c.l.b16 %v277
    %v747 = vunpack.c.h.b16 %v277
    %v748 = vunpack.c.l.b16 %v278
    %v749 = vunpack.c.h.b16 %v278
    %v750 = vunpack.c.l.b16 %v279
    %v751 = vunpack.c.h.b16 %v279
    %v752 = vunpack.c.l.b16 %v280
    %v753 = vunpack.c.h.b16 %v280
    %v754 = vunpack.c.l.b16 %v281
    %v755 = vunpack.c.h.b16 %v281
    %v756 = vunpack.c.l.b16 %v282
    %v757 = vunpack.c.h.b16 %v282
    %v758 = vpack.c.b16 %v476, %v470
    %v759 = vpack.c.b16 %v477, %v471
    %v760 = vpack.c.b16 %v478, %v472
    %v761 = vpack.c.b16 %v479, %v473
    %v762 = vpack.c.b16 %v480, %v474
    %v763 = vpack.c.b16 %v481, %v475
    %v764 = vpack.c.b16 %v488, %v482
    %v765 = vpack.c.b16 %v489, %v483
    %v766 = vpack.c.b16 %v490, %v484
    %v767 = vpack.c.b16 %v491, %v485
    %v768 = vpack.c.b16 %v492, %v486
    %v769 = vpack.c.b16 %v493, %v487
    %v770 = vpack.c.b16 %v500, %v494
    %v771 = vpack.c.b16 %v501, %v495
    %v772 = vpack.c.b16 %v502, %v496
    %v773 = vpack.c.b16 %v503, %v497
    %v774 = vpack.c.b16 %v504, %v498
    %v775 = vpack.c.b16 %v505, %v499
    %v776 = vpack.c.b16 %v512, %v506
    %v777 = vpack.c.b16 %v513, %v507
    %v778 = vpack.c.b16 %v514, %v508
    %v779 = vpack.c.b16 %v515, %v509
    %v780 = vpack.c.b16 %v516, %v510
    %v781 = vpack.c.b16 %v517, %v511
    %v782 = vpack.c.b16 %v524, %v518
    %v783 = vpack.c.b16 %v525, %v519
    %v784 = vpack.c.b16 %v526, %v520
    %v785 = vpack.c.b16 %v527, %v521
    %v786 = vpack.c.b16 %v528, %v522
    %v787 = vpack.c.b16 %v529, %v523
    %v788 = vpack.c.b16 %v536, %v530
    %v789 = vpack.c.b16 %v537, %v531
    %v790 = vpack.c.b16 %v538, %v532
    %v791 = vpack.c.b16 %v539, %v533
    %v792 = vpack.c.b16 %v540, %v534
    %v793 = vpack.c.b16 %v541, %v535
    %v794 = vpack.c.b16 %v548, %v542
    %v795 = vpack.c.b16 %v549, %v543
    %v796 = vpack.c.b16 %v550, %v544
    %v797 = vpack.c.b16 %v551, %v545
    %v798 = vpack.c.b16 %v552, %v546
    %v799 = vpack.c.b16 %v553, %v547
    %v800 = vpack.c.b16 %v560, %v554
    %v801 = vpack.c.b16 %v561, %v555
    %v802 = vpack.c.b16 %v562, %v556
    %v803 = vpack.c.b16 %v563, %v557
    %v804 = vpack.c.b16 %v564, %v558
    %v805 = vpack.c.b16 %v565, %v559
    %v806 = vpack.c.b16 %v572, %v566
    %v807 = vpack.c.b16 %v573, %v567
    %v808 = vpack.c.b16 %v574, %v568
    %v809 = vpack.c.b16 %v575, %v569
    %v810 = vpack.c.b16 %v576, %v570
    %v811 = vpack.c.b16 %v577, %v571
    %v812 = vpack.c.b16 %v584, %v578
    %v813 = vpack.c.b16 %v585, %v579
    %v814 = vpack.c.b16 %v586, %v580
    %v815 = vpack.c.b16 %v587, %v581
    %v816 = vpack.c.b16 %v588, %v582
    %v817 = vpack.c.b16 %v589, %v583
    %v818 = vpack.c.b16 %v596, %v590
    %v819 = vpack.c.b16 %v597, %v591
    %v820 = vpack.c.b16 %v598, %v592
    %v821 = vpack.c.b16 %v599, %v593
    %v822 = vpack.c.b16 %v600, %v594
    %v823 = vpack.c.b16 %v601, %v595
    %v824 = vpack.c.b16 %v608, %v602
    %v825 = vpack.c.b16 %v609, %v603
    %v826 = vpack.c.b16 %v610, %v604
    %v827 = vpack.c.b16 %v611, %v605
    %v828 = vpack.c.b16 %v612, %v606
    %v829 = vpack.c.b16 %v613, %v607
    %v830 = vpack.c.b16 %v620, %v614
    %v831 = vpack.c.b16 %v621, %v615
    %v832 = vpack.c.b16 %v622, %v616
    %v833 = vpack.c.b16 %v623, %v617
    %v834 = vpack.c.b16 %v624, %v618
    %v835 = vpack.c.b16 %v625, %v619
    %v836 = vpack.c.b16 %v632, %v626
    %v837 = vpack.c.b16 %v633, %v627
    %v838 = vpack.c.b16 %v634, %v628
    %v839 = vpack.c.b16 %v635, %v629
    %v840 = vpack.c.b16 %v636, %v630
    %v841 = vpack.c.b16 %v637, %v631
    %v842 = vpack.c.b16 %v644, %v638
    %v843 = vpack.c.b16 %v645, %v639
    %v844 = vpack.c.b16 %v646, %v640
    %v845 = vpack.c.b16 %v647, %v641
    %v846 = vpack.c.b16 %v648, %v642
    %v847 = vpack.c.b16 %v649, %v643
    %v848 = vpack.c.b16 %v656, %v650
    %v849 = vpack.c.b16 %v657, %v651
    %v850 = vpack.c.b16 %v658, %v652
    %v851 = vpack.c.b16 %v659, %v653
    %v852 = vpack.c.b16 %v660, %v654
    %v853 = vpack.c.b16 %v661, %v655
    %v854 = vpack.c.b16 %v668, %v662
    %v855 = vpack.c.b16 %v669, %v663
    %v856 = vpack.c.b16 %v670, %v664
    %v857 = vpack.c.b16 %v671, %v665
    %v858 = vpack.c.b16 %v672, %v666
    %v859 = vpack.c.b16 %v673, %v667
    %v860 = vpack.c.b16 %v680, %v674
    %v861 = vpack.c.b16 %v681, %v675
    %v862 = vpack.c.b16 %v682, %v676
    %v863 = vpack.c.b16 %v683, %v677
    %v864 = vpack.c.b16 %v684, %v678
    %v865 = vpack.c.b16 %v685, %v679
    %v866 = vpack.c.b16 %v692, %v686
    %v867 = vpack.c.b16 %v693, %v687
    %v868 = vpack.c.b16 %v694, %v688
    %v869 = vpack.c.b16 %v695, %v689
    %v870 = vpack.c.b16 %v696, %v690
    %v871 = vpack.c.b16 %v697, %v691
    %v872 = vpack.c.b16 %v704, %v698
    %v873 = vpack.c.b16 %v705, %v699
    %v874 = vpack.c.b16 %v706, %v700
    %v875 = vpack.c.b16 %v707, %v701
    %v876 = vpack.c.b16 %v708, %v702
    %v877 = vpack.c.b16 %v709, %v703
    %v878 = vpack.c.b16 %v716, %v710
    %v879 = vpack.c.b16 %v717, %v711
    %v880 = vpack.c.b16 %v718, %v712
    %v881 = vpack.c.b16 %v719, %v713
    %v882 = vpack.c.b16 %v720, %v714
    %v883 = vpack.c.b16 %v721, %v715
    %v884 = vpack.c.b16 %v728, %v722
    %v885 = vpack.c.b16 %v729, %v723
    %v886 = vpack.c.b16 %v730, %v724
    %v887 = vpack.c.b16 %v731, %v725
    %v888 = vpack.c.b16 %v732, %v726
    %v889 = vpack.c.b16 %v733, %v727
    %v890 = vpack.c.b16 %v740, %v734
    %v891 = vpack.c.b16 %v741, %v735
    %v892 = vpack.c.b16 %v742, %v736
    %v893 = vpack.c.b16 %v743, %v737
    %v894 = vpack.c.b16 %v744, %v738
    %v895 = vpack.c.b16 %v745, %v739
    %v896 = vpack.c.b16 %v752, %v746
    %v897 = vpack.c.b16 %v753, %v747
    %v898 = vpack.c.b16 %v754, %v748
    %v899 = vpack.c.b16 %v755, %v749
    %v900 = vpack.c.b16 %v756, %v750
    %v901 = vpack.c.b16 %v757, %v751
    %1046 = vmatprep.subr.bf16.mxu0 %v759
    %1047 = vmatpush1.bf16.msra.mxu0 %v758
    %1048 = vmatprep.subr.bf16.mxu0 %v765
    %1049 = vmatpush1.bf16.msra.mxu0 %v764
    %1050 = vmatprep.subr.bf16.mxu0 %v771
    %1051 = vmatpush1.bf16.msra.mxu0 %v770
    %1052 = vmatprep.subr.bf16.mxu0 %v777
    %1053 = vmatpush1.bf16.msra.mxu0 %v776
    %1054 = vmatprep.subr.bf16.mxu0 %v783
    %1055 = vmatpush1.bf16.msra.mxu0 %v782
    %1056 = vmatprep.subr.bf16.mxu0 %v789
    %1057 = vmatpush1.bf16.msra.mxu0 %v788
    %1058 = vmatprep.subr.bf16.mxu0 %v795
    %1059 = vmatpush1.bf16.msra.mxu0 %v794
    %1060 = vmatprep.subr.bf16.mxu0 %v801
    %1061 = vmatpush1.bf16.msra.mxu0 %v800
    %1062 = vmatprep.subr.bf16.mxu0 %v807
    %1063 = vmatpush1.bf16.msra.mxu0 %v806
    %1064 = vmatprep.subr.bf16.mxu0 %v813
    %1065 = vmatpush1.bf16.msra.mxu0 %v812
    %1066 = vmatprep.subr.bf16.mxu0 %v819
    %1067 = vmatpush1.bf16.msra.mxu0 %v818
    %1068 = vmatprep.subr.bf16.mxu0 %v825
    %1069 = vmatpush1.bf16.msra.mxu0 %v824
    %1070 = vmatprep.subr.bf16.mxu0 %v831
    %1071 = vmatpush1.bf16.msra.mxu0 %v830
    %1072 = vmatprep.subr.bf16.mxu0 %v837
    %1073 = vmatpush1.bf16.msra.mxu0 %v836
    %1074 = vmatprep.subr.bf16.mxu0 %v843
    %1075 = vmatpush1.bf16.msra.mxu0 %v842
    %1076 = vmatprep.subr.bf16.mxu0 %v849
    %1077 = vmatpush1.bf16.msra.mxu0 %v848
    %1078 = vmatprep.mubr.bf16.mxu0 %v321
    %1079 = vmatmul.mubr.bf16.gmra.mrb[0].mxu0 %v320
    %v1080 = vpop.f32.mrb[0].mxu0
    %v1081 = vadd.f32 %v288, %v1080
    %v1082 = vpop.f32.mrb[0].mxu0
    %v1083 = vadd.f32 %v292, %v1082
    %v1084 = vpop.f32.mrb[0].mxu0
    %v1085 = vpop.f32.mrb[0].mxu0
    %1086 = vdwg.mxu0
    %1087 = vmatprep.subr.bf16.mxu0 %v855
    %1088 = vmatpush1.bf16.msra.mxu0 %v854
    %1089 = vmatprep.subr.bf16.mxu0 %v861
    %1090 = vmatpush1.bf16.msra.mxu0 %v860
    %1091 = vmatprep.subr.bf16.mxu0 %v867
    %1092 = vmatpush1.bf16.msra.mxu0 %v866
    %1093 = vmatprep.subr.bf16.mxu0 %v873
    %1094 = vmatpush1.bf16.msra.mxu0 %v872
    %1095 = vmatprep.subr.bf16.mxu0 %v879
    %1096 = vmatpush1.bf16.msra.mxu0 %v878
    %1097 = vmatprep.subr.bf16.mxu0 %v885
    %1098 = vmatpush1.bf16.msra.mxu0 %v884
    %1099 = vmatprep.subr.bf16.mxu0 %v891
    %1100 = vmatpush1.bf16.msra.mxu0 %v890
    %1101 = vmatprep.subr.bf16.mxu0 %v897
    %1102 = vmatpush1.bf16.msra.mxu0 %v896
    %1103 = vmatprep.subr.bf16.mxu0 0
    %1104 = vmatpush1.bf16.msra.mxu0 0
    %1105 = vmatprep.subr.bf16.mxu0 0
    %1106 = vmatpush1.bf16.msra.mxu0 0
    %1107 = vmatprep.subr.bf16.mxu0 0
    %1108 = vmatpush1.bf16.msra.mxu0 0
    %1109 = vmatprep.subr.bf16.mxu0 0
    %1110 = vmatpush1.bf16.msra.mxu0 0
    %1111 = vmatprep.subr.bf16.mxu0 0
    %1112 = vmatpush1.bf16.msra.mxu0 0
    %1113 = vmatprep.subr.bf16.mxu0 0
    %1114 = vmatpush1.bf16.msra.mxu0 0
    %1115 = vmatprep.subr.bf16.mxu0 0
    %1116 = vmatpush1.bf16.msra.mxu0 0
    %1117 = vmatprep.subr.bf16.mxu0 0
    %1118 = vmatpush1.bf16.msra.mxu0 0
    %1119 = vmatprep.mubr.bf16.mxu0 0
    %1120 = vmatmul.mubr.bf16.gmra.mrb[0].mxu0 %v322
    %v1121 = vpop.f32.mrb[0].mxu0
    %v1122 = vadd.f32 %v1081, %v1121
    %v1123 = vpop.f32.mrb[0].mxu0
    %v1124 = vadd.f32 %v1083, %v1123
    %v1125 = vpop.f32.mrb[0].mxu0
    %v1126 = vpop.f32.mrb[0].mxu0
    %1127 = vdwg.mxu0
    %1128 = vmatprep.subr.bf16.mxu0 %v761
    %1129 = vmatpush1.bf16.msra.mxu0 %v760
    %1130 = vmatprep.subr.bf16.mxu0 %v767
    %1131 = vmatpush1.bf16.msra.mxu0 %v766
    %1132 = vmatprep.subr.bf16.mxu0 %v773
    %1133 = vmatpush1.bf16.msra.mxu0 %v772
    %1134 = vmatprep.subr.bf16.mxu0 %v779
    %1135 = vmatpush1.bf16.msra.mxu0 %v778
    %1136 = vmatprep.subr.bf16.mxu0 %v785
    %1137 = vmatpush1.bf16.msra.mxu0 %v784
    %1138 = vmatprep.subr.bf16.mxu0 %v791
    %1139 = vmatpush1.bf16.msra.mxu0 %v790
    %1140 = vmatprep.subr.bf16.mxu0 %v797
    %1141 = vmatpush1.bf16.msra.mxu0 %v796
    %1142 = vmatprep.subr.bf16.mxu0 %v803
    %1143 = vmatpush1.bf16.msra.mxu0 %v802
    %1144 = vmatprep.subr.bf16.mxu0 %v809
    %1145 = vmatpush1.bf16.msra.mxu0 %v808
    %1146 = vmatprep.subr.bf16.mxu0 %v815
    %1147 = vmatpush1.bf16.msra.mxu0 %v814
    %1148 = vmatprep.subr.bf16.mxu0 %v821
    %1149 = vmatpush1.bf16.msra.mxu0 %v820
    %1150 = vmatprep.subr.bf16.mxu0 %v827
    %1151 = vmatpush1.bf16.msra.mxu0 %v826
    %1152 = vmatprep.subr.bf16.mxu0 %v833
    %1153 = vmatpush1.bf16.msra.mxu0 %v832
    %1154 = vmatprep.subr.bf16.mxu0 %v839
    %1155 = vmatpush1.bf16.msra.mxu0 %v838
    %1156 = vmatprep.subr.bf16.mxu0 %v845
    %1157 = vmatpush1.bf16.msra.mxu0 %v844
    %1158 = vmatprep.subr.bf16.mxu0 %v851
    %1159 = vmatpush1.bf16.msra.mxu0 %v850
    %1160 = vmatprep.mubr.bf16.mxu0 %v321
    %1161 = vmatmul.mubr.bf16.gmra.mrb[0].mxu0 %v320
    %v1162 = vpop.f32.mrb[0].mxu0
    %v1163 = vadd.f32 %v296, %v1162
    %v1164 = vpop.f32.mrb[0].mxu0
    %v1165 = vadd.f32 %v300, %v1164
    %v1166 = vpop.f32.mrb[0].mxu0
    %v1167 = vpop.f32.mrb[0].mxu0
    %1168 = vdwg.mxu0
    %1169 = vmatprep.subr.bf16.mxu0 %v857
    %1170 = vmatpush1.bf16.msra.mxu0 %v856
    %1171 = vmatprep.subr.bf16.mxu0 %v863
    %1172 = vmatpush1.bf16.msra.mxu0 %v862
    %1173 = vmatprep.subr.bf16.mxu0 %v869
    %1174 = vmatpush1.bf16.msra.mxu0 %v868
    %1175 = vmatprep.subr.bf16.mxu0 %v875
    %1176 = vmatpush1.bf16.msra.mxu0 %v874
    %1177 = vmatprep.subr.bf16.mxu0 %v881
    %1178 = vmatpush1.bf16.msra.mxu0 %v880
    %1179 = vmatprep.subr.bf16.mxu0 %v887
    %1180 = vmatpush1.bf16.msra.mxu0 %v886
    %1181 = vmatprep.subr.bf16.mxu0 %v893
    %1182 = vmatpush1.bf16.msra.mxu0 %v892
    %1183 = vmatprep.subr.bf16.mxu0 %v899
    %1184 = vmatpush1.bf16.msra.mxu0 %v898
    %1185 = vmatprep.subr.bf16.mxu0 0
    %1186 = vmatpush1.bf16.msra.mxu0 0
    %1187 = vmatprep.subr.bf16.mxu0 0
    %1188 = vmatpush1.bf16.msra.mxu0 0
    %1189 = vmatprep.subr.bf16.mxu0 0
    %1190 = vmatpush1.bf16.msra.mxu0 0
    %1191 = vmatprep.subr.bf16.mxu0 0
    %1192 = vmatpush1.bf16.msra.mxu0 0
    %1193 = vmatprep.subr.bf16.mxu0 0
    %1194 = vmatpush1.bf16.msra.mxu0 0
    %1195 = vmatprep.subr.bf16.mxu0 0
    %1196 = vmatpush1.bf16.msra.mxu0 0
    %1197 = vmatprep.subr.bf16.mxu0 0
    %1198 = vmatpush1.bf16.msra.mxu0 0
    %1199 = vmatprep.subr.bf16.mxu0 0
    %1200 = vmatpush1.bf16.msra.mxu0 0
    %1201 = vmatprep.mubr.bf16.mxu0 0
    %1202 = vmatmul.mubr.bf16.gmra.mrb[0].mxu0 %v322
    %v1203 = vpop.f32.mrb[0].mxu0
    %v1204 = vadd.f32 %v1163, %v1203
    %v1205 = vpop.f32.mrb[0].mxu0
    %v1206 = vadd.f32 %v1165, %v1205
    %v1207 = vpop.f32.mrb[0].mxu0
    %v1208 = vpop.f32.mrb[0].mxu0
    %1209 = vdwg.mxu0
    %1210 = vmatprep.subr.bf16.mxu0 %v763
    %1211 = vmatpush1.bf16.msra.mxu0 %v762
    %1212 = vmatprep.subr.bf16.mxu0 %v769
    %1213 = vmatpush1.bf16.msra.mxu0 %v768
    %1214 = vmatprep.subr.bf16.mxu0 %v775
    %1215 = vmatpush1.bf16.msra.mxu0 %v774
    %1216 = vmatprep.subr.bf16.mxu0 %v781
    %1217 = vmatpush1.bf16.msra.mxu0 %v780
    %1218 = vmatprep.subr.bf16.mxu0 %v787
    %1219 = vmatpush1.bf16.msra.mxu0 %v786
    %1220 = vmatprep.subr.bf16.mxu0 %v793
    %1221 = vmatpush1.bf16.msra.mxu0 %v792
    %1222 = vmatprep.subr.bf16.mxu0 %v799
    %1223 = vmatpush1.bf16.msra.mxu0 %v798
    %1224 = vmatprep.subr.bf16.mxu0 %v805
    %1225 = vmatpush1.bf16.msra.mxu0 %v804
    %1226 = vmatprep.subr.bf16.mxu0 %v811
    %1227 = vmatpush1.bf16.msra.mxu0 %v810
    %1228 = vmatprep.subr.bf16.mxu0 %v817
    %1229 = vmatpush1.bf16.msra.mxu0 %v816
    %1230 = vmatprep.subr.bf16.mxu0 %v823
    %1231 = vmatpush1.bf16.msra.mxu0 %v822
    %1232 = vmatprep.subr.bf16.mxu0 %v829
    %1233 = vmatpush1.bf16.msra.mxu0 %v828
    %1234 = vmatprep.subr.bf16.mxu0 %v835
    %1235 = vmatpush1.bf16.msra.mxu0 %v834
    %1236 = vmatprep.subr.bf16.mxu0 %v841
    %1237 = vmatpush1.bf16.msra.mxu0 %v840
    %1238 = vmatprep.subr.bf16.mxu0 %v847
    %1239 = vmatpush1.bf16.msra.mxu0 %v846
    %1240 = vmatprep.subr.bf16.mxu0 %v853
    %1241 = vmatpush1.bf16.msra.mxu0 %v852
    %1242 = vmatprep.mubr.bf16.mxu0 %v321
    %1243 = vmatmul.mubr.bf16.gmra.mrb[0].mxu0 %v320
    %v1244 = vpop.f32.mrb[0].mxu0
    %v1245 = vadd.f32 %v304, %v1244
    %v1246 = vpop.f32.mrb[0].mxu0
    %v1247 = vadd.f32 %v308, %v1246
    %v1248 = vpop.f32.mrb[0].mxu0
    %v1249 = vpop.f32.mrb[0].mxu0
    %1250 = vdwg.mxu0
    %1251 = vmatprep.subr.bf16.mxu0 %v859
    %1252 = vmatpush1.bf16.msra.mxu0 %v858
    %1253 = vmatprep.subr.bf16.mxu0 %v865
    %1254 = vmatpush1.bf16.msra.mxu0 %v864
    %1255 = vmatprep.subr.bf16.mxu0 %v871
    %1256 = vmatpush1.bf16.msra.mxu0 %v870
    %1257 = vmatprep.subr.bf16.mxu0 %v877
    %1258 = vmatpush1.bf16.msra.mxu0 %v876
    %1259 = vmatprep.subr.bf16.mxu0 %v883
    %1260 = vmatpush1.bf16.msra.mxu0 %v882
    %1261 = vmatprep.subr.bf16.mxu0 %v889
    %1262 = vmatpush1.bf16.msra.mxu0 %v888
    %1263 = vmatprep.subr.bf16.mxu0 %v895
    %1264 = vmatpush1.bf16.msra.mxu0 %v894
    %1265 = vmatprep.subr.bf16.mxu0 %v901
    %1266 = vmatpush1.bf16.msra.mxu0 %v900
    %1267 = vmatprep.subr.bf16.mxu0 0
    %1268 = vmatpush1.bf16.msra.mxu0 0
    %1269 = vmatprep.subr.bf16.mxu0 0
    %1270 = vmatpush1.bf16.msra.mxu0 0
    %1271 = vmatprep.subr.bf16.mxu0 0
    %1272 = vmatpush1.bf16.msra.mxu0 0
    %1273 = vmatprep.subr.bf16.mxu0 0
    %1274 = vmatpush1.bf16.msra.mxu0 0
    %1275 = vmatprep.subr.bf16.mxu0 0
    %1276 = vmatpush1.bf16.msra.mxu0 0
    %1277 = vmatprep.subr.bf16.mxu0 0
    %1278 = vmatpush1.bf16.msra.mxu0 0
    %1279 = vmatprep.subr.bf16.mxu0 0
    %1280 = vmatpush1.bf16.msra.mxu0 0
    %1281 = vmatprep.subr.bf16.mxu0 0
    %1282 = vmatpush1.bf16.msra.mxu0 0
    %1283 = vmatprep.mubr.bf16.mxu0 0
    %1284 = vmatmul.mubr.bf16.gmra.mrb[0].mxu0 %v322
    %v1285 = vpop.f32.mrb[0].mxu0
    %v1286 = vadd.f32 %v1245, %v1285
    %v1287 = vpop.f32.mrb[0].mxu0
    %v1288 = vadd.f32 %v1247, %v1287
    %v1289 = vpop.f32.mrb[0].mxu0
    %v1290 = vpop.f32.mrb[0].mxu0
    %1291 = vdwg.mxu0
    %v1292 = vpack.c.bf16 %v1122, %v1122
    %v1293 = vpack.c.bf16 %v1124, %v1124
    %v1294 = vpack.c.bf16 %v1204, %v1204
    %v1295 = vpack.c.bf16 %v1206, %v1206
    %v1296 = vpack.c.bf16 %v1286, %v1286
    %v1297 = vpack.c.bf16 %v1288, %v1288
    %v1298 = vld [vmem:[#allocation9] sm:$0xff]
    %v1299 = vld [vmem:[#allocation9 + $0x8] sm:$0xff]
    %v1300 = vld [vmem:[#allocation9 + $0x10] sm:$0xff]
    %v1301 = vld [vmem:[#allocation9 + $0x18] sm:$0xff]
    %v1302 = vld [vmem:[#allocation9 + $0x20] sm:$0xff]
    %v1303 = vld [vmem:[#allocation9 + $0x28] sm:$0xff]
    %v1304 = vld [vmem:[#allocation9 + $0x30] sm:$0xff]
    %v1305 = vld [vmem:[#allocation9 + $0x38] sm:$0xff]
    %v1306 = vld [vmem:[#allocation9 + $0x40] sm:$0xff]
    %v1307 = vld [vmem:[#allocation9 + $0x48] sm:$0xff]
    %v1308 = vld [vmem:[#allocation9 + $0x50] sm:$0xff]
    %v1309 = vld [vmem:[#allocation9 + $0x58] sm:$0xff]
    %v1310 = vld [vmem:[#allocation9 + $0x60] sm:$0xff]
    %v1311 = vld [vmem:[#allocation9 + $0x68] sm:$0xff]
    %v1312 = vld [vmem:[#allocation9 + $0x70] sm:$0xff]
    %v1313 = vld [vmem:[#allocation9 + $0x78] sm:$0xff]
    %v1314 = vld [vmem:[#allocation9 + $0x80] sm:$0xff]
    %v1315 = vld [vmem:[#allocation9 + $0x88] sm:$0xff]
    %v1316 = vld [vmem:[#allocation9 + $0x90] sm:$0xff]
    %v1317 = vld [vmem:[#allocation9 + $0x98] sm:$0xff]
    %v1318 = vld [vmem:[#allocation9 + $0xa0] sm:$0xff]
    %v1319 = vld [vmem:[#allocation9 + $0xa8] sm:$0xff]
    %v1320 = vld [vmem:[#allocation9 + $0xb0] sm:$0xff]
    %v1321 = vld [vmem:[#allocation9 + $0xb8] sm:$0xff]
    %v1322 = vld [vmem:[#allocation9 + $0xc0] sm:$0xff]
    %v1323 = vld [vmem:[#allocation9 + $0xc8] sm:$0xff]
    %v1324 = vld [vmem:[#allocation9 + $0xd0] sm:$0xff]
    %v1325 = vld [vmem:[#allocation9 + $0xd8] sm:$0xff]
    %v1326 = vld [vmem:[#allocation9 + $0xe0] sm:$0xff]
    %v1327 = vld [vmem:[#allocation9 + $0xe8] sm:$0xff]
    %v1328 = vld [vmem:[#allocation9 + $0xf0] sm:$0xff]
    %v1329 = vld [vmem:[#allocation9 + $0xf8] sm:$0xff]
    %v1330 = vld [vmem:[#allocation9 + $0x100] sm:$0xff]
    %v1331 = vld [vmem:[#allocation9 + $0x108] sm:$0xff]
    %v1332 = vld [vmem:[#allocation9 + $0x110] sm:$0xff]
    %v1333 = vld [vmem:[#allocation9 + $0x118] sm:$0xff]
    %v1334 = vld [vmem:[#allocation9 + $0x120] sm:$0xff]
    %v1335 = vld [vmem:[#allocation9 + $0x128] sm:$0xff]
    %v1336 = vld [vmem:[#allocation9 + $0x130] sm:$0xff]
    %v1337 = vld [vmem:[#allocation9 + $0x138] sm:$0xff]
    %v1338 = vld [vmem:[#allocation9 + $0x140] sm:$0xff]
    %v1339 = vld [vmem:[#allocation9 + $0x148] sm:$0xff]
    %v1340 = vld [vmem:[#allocation9 + $0x150] sm:$0xff]
    %v1341 = vld [vmem:[#allocation9 + $0x158] sm:$0xff]
    %v1342 = vld [vmem:[#allocation9 + $0x160] sm:$0xff]
    %v1343 = vld [vmem:[#allocation9 + $0x168] sm:$0xff]
    %v1344 = vld [vmem:[#allocation9 + $0x170] sm:$0xff]
    %v1345 = vld [vmem:[#allocation9 + $0x178] sm:$0xff]
    %v1346 = vld [vmem:[#allocation9 + $0x180] sm:$0xff]
    %v1347 = vld [vmem:[#allocation9 + $0x188] sm:$0xff]
    %v1348 = vld [vmem:[#allocation9 + $0x190] sm:$0xff]
    %v1349 = vld [vmem:[#allocation9 + $0x198] sm:$0xff]
    %v1350 = vld [vmem:[#allocation9 + $0x1a0] sm:$0xff]
    %v1351 = vld [vmem:[#allocation9 + $0x1a8] sm:$0xff]
    %v1352 = vld [vmem:[#allocation9 + $0x1b0] sm:$0xff]
    %v1353 = vld [vmem:[#allocation9 + $0x1b8] sm:$0xff]
    %v1354 = vld [vmem:[#allocation9 + $0x1c0] sm:$0xff]
    %v1355 = vld [vmem:[#allocation9 + $0x1c8] sm:$0xff]
    %v1356 = vld [vmem:[#allocation9 + $0x1d0] sm:$0xff]
    %v1357 = vld [vmem:[#allocation9 + $0x1d8] sm:$0xff]
    %v1358 = vld [vmem:[#allocation9 + $0x1e0] sm:$0xff]
    %v1359 = vld [vmem:[#allocation9 + $0x1e8] sm:$0xff]
    %v1360 = vld [vmem:[#allocation9 + $0x1f0] sm:$0xff]
    %v1361 = vld [vmem:[#allocation9 + $0x1f8] sm:$0xff]
    %v1362 = vld [vmem:[#allocation9 + $0x200] sm:$0xff]
    %v1363 = vld [vmem:[#allocation9 + $0x208] sm:$0xff]
    %v1364 = vld [vmem:[#allocation9 + $0x210] sm:$0xff]
    %v1365 = vld [vmem:[#allocation9 + $0x218] sm:$0xff]
    %v1366 = vld [vmem:[#allocation9 + $0x220] sm:$0xff]
    %v1367 = vld [vmem:[#allocation9 + $0x228] sm:$0xff]
    %v1368 = vld [vmem:[#allocation9 + $0x230] sm:$0xff]
    %v1369 = vld [vmem:[#allocation9 + $0x238] sm:$0xff]
    %v1370 = vld [vmem:[#allocation9 + $0x240] sm:$0xff]
    %v1371 = vld [vmem:[#allocation9 + $0x248] sm:$0xff]
    %v1372 = vld [vmem:[#allocation9 + $0x250] sm:$0xff]
    %v1373 = vld [vmem:[#allocation9 + $0x258] sm:$0xff]
    %v1374 = vld [vmem:[#allocation9 + $0x260] sm:$0xff]
    %v1375 = vld [vmem:[#allocation9 + $0x268] sm:$0xff]
    %v1376 = vld [vmem:[#allocation9 + $0x270] sm:$0xff]
    %v1377 = vld [vmem:[#allocation9 + $0x278] sm:$0xff]
    %v1378 = vld [vmem:[#allocation9 + $0x280] sm:$0xff]
    %v1379 = vld [vmem:[#allocation9 + $0x288] sm:$0xff]
    %v1380 = vld [vmem:[#allocation9 + $0x290] sm:$0xff]
    %v1381 = vld [vmem:[#allocation9 + $0x298] sm:$0xff]
    %v1382 = vld [vmem:[#allocation9 + $0x2a0] sm:$0xff]
    %v1383 = vld [vmem:[#allocation9 + $0x2a8] sm:$0xff]
    %v1384 = vld [vmem:[#allocation9 + $0x2b0] sm:$0xff]
    %v1385 = vld [vmem:[#allocation9 + $0x2b8] sm:$0xff]
    %v1386 = vld [vmem:[#allocation9 + $0x2c0] sm:$0xff]
    %v1387 = vld [vmem:[#allocation9 + $0x2c8] sm:$0xff]
    %v1388 = vld [vmem:[#allocation9 + $0x2d0] sm:$0xff]
    %v1389 = vld [vmem:[#allocation9 + $0x2d8] sm:$0xff]
    %v1390 = vld [vmem:[#allocation9 + $0x2e0] sm:$0xff]
    %v1391 = vld [vmem:[#allocation9 + $0x2e8] sm:$0xff]
    %v1392 = vld [vmem:[#allocation9 + $0x2f0] sm:$0xff]
    %v1393 = vld [vmem:[#allocation9 + $0x2f8] sm:$0xff]
    %v1394 = vld [vmem:[#allocation9 + $0x300] sm:$0xff]
    %v1395 = vld [vmem:[#allocation9 + $0x308] sm:$0xff]
    %v1396 = vld [vmem:[#allocation9 + $0x310] sm:$0xff]
    %v1397 = vld [vmem:[#allocation9 + $0x318] sm:$0xff]
    %v1398 = vld [vmem:[#allocation9 + $0x320] sm:$0xff]
    %v1399 = vld [vmem:[#allocation9 + $0x328] sm:$0xff]
    %v1400 = vld [vmem:[#allocation9 + $0x330] sm:$0xff]
    %v1401 = vld [vmem:[#allocation9 + $0x338] sm:$0xff]
    %v1402 = vld [vmem:[#allocation9 + $0x340] sm:$0xff]
    %v1403 = vld [vmem:[#allocation9 + $0x348] sm:$0xff]
    %v1404 = vld [vmem:[#allocation9 + $0x350] sm:$0xff]
    %v1405 = vld [vmem:[#allocation9 + $0x358] sm:$0xff]
    %v1406 = vld [vmem:[#allocation9 + $0x360] sm:$0xff]
    %v1407 = vld [vmem:[#allocation9 + $0x368] sm:$0xff]
    %v1408 = vld [vmem:[#allocation9 + $0x370] sm:$0xff]
    %v1409 = vld [vmem:[#allocation9 + $0x378] sm:$0xff]
    %v1410 = vld [vmem:[#allocation9 + $0x380] sm:$0xff]
    %v1411 = vld [vmem:[#allocation9 + $0x388] sm:$0xff]
    %v1412 = vld [vmem:[#allocation9 + $0x390] sm:$0xff]
    %v1413 = vld [vmem:[#allocation9 + $0x398] sm:$0xff]
    %v1414 = vld [vmem:[#allocation9 + $0x3a0] sm:$0xff]
    %v1415 = vld [vmem:[#allocation9 + $0x3a8] sm:$0xff]
    %v1416 = vld [vmem:[#allocation9 + $0x3b0] sm:$0xff]
    %v1417 = vld [vmem:[#allocation9 + $0x3b8] sm:$0xff]
    %v1418 = vld [vmem:[#allocation9 + $0x3c0] sm:$0xff]
    %v1419 = vld [vmem:[#allocation9 + $0x3c8] sm:$0xff]
    %v1420 = vld [vmem:[#allocation9 + $0x3d0] sm:$0xff]
    %v1421 = vld [vmem:[#allocation9 + $0x3d8] sm:$0xff]
    %v1422 = vld [vmem:[#allocation9 + $0x3e0] sm:$0xff]
    %v1423 = vld [vmem:[#allocation9 + $0x3e8] sm:$0xff]
    %v1424 = vld [vmem:[#allocation9 + $0x3f0] sm:$0xff]
    %v1425 = vld [vmem:[#allocation9 + $0x3f8] sm:$0xff]
    %v1426 = vld [vmem:[#allocation9 + $0x400] sm:$0xff]
    %v1427 = vld [vmem:[#allocation9 + $0x408] sm:$0xff]
    %v1428 = vld [vmem:[#allocation9 + $0x410] sm:$0xff]
    %v1429 = vld [vmem:[#allocation9 + $0x418] sm:$0xff]
    %v1430 = vld [vmem:[#allocation9 + $0x420] sm:$0xff]
    %v1431 = vld [vmem:[#allocation9 + $0x428] sm:$0xff]
    %v1432 = vld [vmem:[#allocation9 + $0x430] sm:$0xff]
    %v1433 = vld [vmem:[#allocation9 + $0x438] sm:$0xff]
    %v1434 = vld [vmem:[#allocation9 + $0x440] sm:$0xff]
    %v1435 = vld [vmem:[#allocation9 + $0x448] sm:$0xff]
    %v1436 = vld [vmem:[#allocation9 + $0x450] sm:$0xff]
    %v1437 = vld [vmem:[#allocation9 + $0x458] sm:$0xff]
    %v1438 = vld [vmem:[#allocation9 + $0x460] sm:$0xff]
    %v1439 = vld [vmem:[#allocation9 + $0x468] sm:$0xff]
    %v1440 = vld [vmem:[#allocation9 + $0x470] sm:$0xff]
    %v1441 = vld [vmem:[#allocation9 + $0x478] sm:$0xff]
    %v1442 = vld [vmem:[#allocation9 + $0x480] sm:$0xff]
    %v1443 = vld [vmem:[#allocation9 + $0x488] sm:$0xff]
    %v1444 = vld [vmem:[#allocation9 + $0x490] sm:$0xff]
    %v1445 = vld [vmem:[#allocation9 + $0x498] sm:$0xff]
    %v1446 = vld [vmem:[#allocation9 + $0x4a0] sm:$0xff]
    %v1447 = vld [vmem:[#allocation9 + $0x4a8] sm:$0xff]
    %v1448 = vld [vmem:[#allocation9 + $0x4b0] sm:$0xff]
    %v1449 = vld [vmem:[#allocation9 + $0x4b8] sm:$0xff]
    %v1450 = vld [vmem:[#allocation9 + $0x4c0] sm:$0xff]
    %v1451 = vld [vmem:[#allocation9 + $0x4c8] sm:$0xff]
    %v1452 = vld [vmem:[#allocation9 + $0x4d0] sm:$0xff]
    %v1453 = vld [vmem:[#allocation9 + $0x4d8] sm:$0xff]
    %v1454 = vld [vmem:[#allocation9 + $0x4e0] sm:$0xff]
    %v1455 = vld [vmem:[#allocation9 + $0x4e8] sm:$0xff]
    %v1456 = vld [vmem:[#allocation9 + $0x4f0] sm:$0xff]
    %v1457 = vld [vmem:[#allocation9 + $0x4f8] sm:$0xff]
    %v1458 = vld [vmem:[#allocation9 + $0x500] sm:$0xff]
    %v1459 = vld [vmem:[#allocation9 + $0x508] sm:$0xff]
    %v1460 = vld [vmem:[#allocation9 + $0x510] sm:$0xff]
    %v1461 = vld [vmem:[#allocation9 + $0x518] sm:$0xff]
    %v1462 = vld [vmem:[#allocation9 + $0x520] sm:$0xff]
    %v1463 = vld [vmem:[#allocation9 + $0x528] sm:$0xff]
    %v1464 = vld [vmem:[#allocation9 + $0x530] sm:$0xff]
    %v1465 = vld [vmem:[#allocation9 + $0x538] sm:$0xff]
    %v1466 = vld [vmem:[#allocation9 + $0x540] sm:$0xff]
    %v1467 = vld [vmem:[#allocation9 + $0x548] sm:$0xff]
    %v1468 = vld [vmem:[#allocation9 + $0x550] sm:$0xff]
    %v1469 = vld [vmem:[#allocation9 + $0x558] sm:$0xff]
    %v1470 = vld [vmem:[#allocation9 + $0x560] sm:$0xff]
    %v1471 = vld [vmem:[#allocation9 + $0x568] sm:$0xff]
    %v1472 = vld [vmem:[#allocation9 + $0x570] sm:$0xff]
    %v1473 = vld [vmem:[#allocation9 + $0x578] sm:$0xff]
    %v1474 = vld [vmem:[#allocation9 + $0x580] sm:$0xff]
    %v1475 = vld [vmem:[#allocation9 + $0x588] sm:$0xff]
    %v1476 = vld [vmem:[#allocation9 + $0x590] sm:$0xff]
    %v1477 = vld [vmem:[#allocation9 + $0x598] sm:$0xff]
    %v1478 = vld [vmem:[#allocation9 + $0x5a0] sm:$0xff]
    %v1479 = vld [vmem:[#allocation9 + $0x5a8] sm:$0xff]
    %v1480 = vld [vmem:[#allocation9 + $0x5b0] sm:$0xff]
    %v1481 = vld [vmem:[#allocation9 + $0x5b8] sm:$0xff]
    %v1482 = vld [vmem:[#allocation9 + $0x5c0] sm:$0xff]
    %v1483 = vld [vmem:[#allocation9 + $0x5c8] sm:$0xff]
    %v1484 = vld [vmem:[#allocation9 + $0x5d0] sm:$0xff]
    %v1485 = vld [vmem:[#allocation9 + $0x5d8] sm:$0xff]
    %v1486 = vld [vmem:[#allocation9 + $0x5e0] sm:$0xff]
    %v1487 = vld [vmem:[#allocation9 + $0x5e8] sm:$0xff]
    %v1488 = vld [vmem:[#allocation9 + $0x5f0] sm:$0xff]
    %v1489 = vld [vmem:[#allocation9 + $0x5f8] sm:$0xff]
    %v1490 = vld [vmem:[#allocation9 + $0x600] sm:$0xff]
    %v1491 = vld [vmem:[#allocation9 + $0x608] sm:$0xff]
    %v1492 = vld [vmem:[#allocation9 + $0x610] sm:$0xff]
    %v1493 = vld [vmem:[#allocation9 + $0x618] sm:$0xff]
    %v1494 = vld [vmem:[#allocation9 + $0x620] sm:$0xff]
    %v1495 = vld [vmem:[#allocation9 + $0x628] sm:$0xff]
    %v1496 = vld [vmem:[#allocation9 + $0x630] sm:$0xff]
    %v1497 = vld [vmem:[#allocation9 + $0x638] sm:$0xff]
    %v1498 = vld [vmem:[#allocation9 + $0x640] sm:$0xff]
    %v1499 = vld [vmem:[#allocation9 + $0x648] sm:$0xff]
    %v1500 = vld [vmem:[#allocation9 + $0x650] sm:$0xff]
    %v1501 = vld [vmem:[#allocation9 + $0x658] sm:$0xff]
    %v1502 = vld [vmem:[#allocation9 + $0x660] sm:$0xff]
    %v1503 = vld [vmem:[#allocation9 + $0x668] sm:$0xff]
    %v1504 = vld [vmem:[#allocation9 + $0x670] sm:$0xff]
    %v1505 = vld [vmem:[#allocation9 + $0x678] sm:$0xff]
    %v1506 = vld [vmem:[#allocation9 + $0x680] sm:$0xff]
    %v1507 = vld [vmem:[#allocation9 + $0x688] sm:$0xff]
    %v1508 = vld [vmem:[#allocation9 + $0x690] sm:$0xff]
    %v1509 = vld [vmem:[#allocation9 + $0x698] sm:$0xff]
    %v1510 = vld [vmem:[#allocation9 + $0x6a0] sm:$0xff]
    %v1511 = vld [vmem:[#allocation9 + $0x6a8] sm:$0xff]
    %v1512 = vld [vmem:[#allocation9 + $0x6b0] sm:$0xff]
    %v1513 = vld [vmem:[#allocation9 + $0x6b8] sm:$0xff]
    %v1514 = vld [vmem:[#allocation9 + $0x6c0] sm:$0xff]
    %v1515 = vld [vmem:[#allocation9 + $0x6c8] sm:$0xff]
    %v1516 = vld [vmem:[#allocation9 + $0x6d0] sm:$0xff]
    %v1517 = vld [vmem:[#allocation9 + $0x6d8] sm:$0xff]
    %v1518 = vld [vmem:[#allocation9 + $0x6e0] sm:$0xff]
    %v1519 = vld [vmem:[#allocation9 + $0x6e8] sm:$0xff]
    %v1520 = vld [vmem:[#allocation9 + $0x6f0] sm:$0xff]
    %v1521 = vld [vmem:[#allocation9 + $0x6f8] sm:$0xff]
    %v1522 = vld [vmem:[#allocation9 + $0x700] sm:$0xff]
    %v1523 = vld [vmem:[#allocation9 + $0x708] sm:$0xff]
    %v1524 = vld [vmem:[#allocation9 + $0x710] sm:$0xff]
    %v1525 = vld [vmem:[#allocation9 + $0x718] sm:$0xff]
    %v1526 = vld [vmem:[#allocation9 + $0x720] sm:$0xff]
    %v1527 = vld [vmem:[#allocation9 + $0x728] sm:$0xff]
    %v1528 = vld [vmem:[#allocation9 + $0x730] sm:$0xff]
    %v1529 = vld [vmem:[#allocation9 + $0x738] sm:$0xff]
    %v1530 = vld [vmem:[#allocation9 + $0x740] sm:$0xff]
    %v1531 = vld [vmem:[#allocation9 + $0x748] sm:$0xff]
    %v1532 = vld [vmem:[#allocation9 + $0x750] sm:$0xff]
    %v1533 = vld [vmem:[#allocation9 + $0x758] sm:$0xff]
    %v1534 = vld [vmem:[#allocation9 + $0x760] sm:$0xff]
    %v1535 = vld [vmem:[#allocation9 + $0x768] sm:$0xff]
    %v1536 = vld [vmem:[#allocation9 + $0x770] sm:$0xff]
    %v1537 = vld [vmem:[#allocation9 + $0x778] sm:$0xff]
    %v1538 = vld [vmem:[#allocation9 + $0x780] sm:$0xff]
    %v1539 = vld [vmem:[#allocation9 + $0x788] sm:$0xff]
    %v1540 = vld [vmem:[#allocation9 + $0x790] sm:$0xff]
    %v1541 = vld [vmem:[#allocation9 + $0x798] sm:$0xff]
    %v1542 = vld [vmem:[#allocation9 + $0x7a0] sm:$0xff]
    %v1543 = vld [vmem:[#allocation9 + $0x7a8] sm:$0xff]
    %v1544 = vld [vmem:[#allocation9 + $0x7b0] sm:$0xff]
    %v1545 = vld [vmem:[#allocation9 + $0x7b8] sm:$0xff]
    %v1546 = vld [vmem:[#allocation9 + $0x7c0] sm:$0xff]
    %v1547 = vld [vmem:[#allocation9 + $0x7c8] sm:$0xff]
    %v1548 = vld [vmem:[#allocation9 + $0x7d0] sm:$0xff]
    %v1549 = vld [vmem:[#allocation9 + $0x7d8] sm:$0xff]
    %v1550 = vld [vmem:[#allocation9 + $0x7e0] sm:$0xff]
    %v1551 = vld [vmem:[#allocation9 + $0x7e8] sm:$0xff]
    %v1552 = vld [vmem:[#allocation9 + $0x7f0] sm:$0xff]
    %v1553 = vld [vmem:[#allocation9 + $0x7f8] sm:$0xff]
    %v1554 = vld [vmem:[#allocation9 + $0x800] sm:$0xff]
    %v1555 = vld [vmem:[#allocation9 + $0x808] sm:$0xff]
    %v1556 = vld [vmem:[#allocation9 + $0x810] sm:$0xff]
    %v1557 = vld [vmem:[#allocation9 + $0x818] sm:$0xff]
    %v1558 = vld [vmem:[#allocation9 + $0x820] sm:$0xff]
    %v1559 = vld [vmem:[#allocation9 + $0x828] sm:$0xff]
    %v1560 = vld [vmem:[#allocation9 + $0x830] sm:$0xff]
    %v1561 = vld [vmem:[#allocation9 + $0x838] sm:$0xff]
    %v1562 = vld [vmem:[#allocation9 + $0x840] sm:$0xff]
    %v1563 = vld [vmem:[#allocation9 + $0x848] sm:$0xff]
    %v1564 = vld [vmem:[#allocation9 + $0x850] sm:$0xff]
    %v1565 = vld [vmem:[#allocation9 + $0x858] sm:$0xff]
    %v1566 = vld [vmem:[#allocation9 + $0x860] sm:$0xff]
    %v1567 = vld [vmem:[#allocation9 + $0x868] sm:$0xff]
    %v1568 = vld [vmem:[#allocation9 + $0x870] sm:$0xff]
    %v1569 = vld [vmem:[#allocation9 + $0x878] sm:$0xff]
    %v1570 = vld [vmem:[#allocation9 + $0x880] sm:$0xff]
    %v1571 = vld [vmem:[#allocation9 + $0x888] sm:$0xff]
    %v1572 = vld [vmem:[#allocation9 + $0x890] sm:$0xff]
    %v1573 = vld [vmem:[#allocation9 + $0x898] sm:$0xff]
    %v1574 = vld [vmem:[#allocation9 + $0x8a0] sm:$0xff]
    %v1575 = vld [vmem:[#allocation9 + $0x8a8] sm:$0xff]
    %v1576 = vld [vmem:[#allocation9 + $0x8b0] sm:$0xff]
    %v1577 = vld [vmem:[#allocation9 + $0x8b8] sm:$0xff]
    %v1578 = vld [vmem:[#allocation9 + $0x8c0] sm:$0xff]
    %v1579 = vld [vmem:[#allocation9 + $0x8c8] sm:$0xff]
    %v1580 = vld [vmem:[#allocation9 + $0x8d0] sm:$0xff]
    %v1581 = vld [vmem:[#allocation9 + $0x8d8] sm:$0xff]
    %v1582 = vld [vmem:[#allocation9 + $0x8e0] sm:$0xff]
    %v1583 = vld [vmem:[#allocation9 + $0x8e8] sm:$0xff]
    %v1584 = vld [vmem:[#allocation9 + $0x8f0] sm:$0xff]
    %v1585 = vld [vmem:[#allocation9 + $0x8f8] sm:$0xff]
    %v1586 = vld [vmem:[#allocation9 + $0x900] sm:$0xff]
    %v1587 = vld [vmem:[#allocation9 + $0x908] sm:$0xff]
    %v1588 = vld [vmem:[#allocation9 + $0x910] sm:$0xff]
    %v1589 = vld [vmem:[#allocation9 + $0x918] sm:$0xff]
    %v1590 = vld [vmem:[#allocation9 + $0x920] sm:$0xff]
    %v1591 = vld [vmem:[#allocation9 + $0x928] sm:$0xff]
    %v1592 = vld [vmem:[#allocation9 + $0x930] sm:$0xff]
    %v1593 = vld [vmem:[#allocation9 + $0x938] sm:$0xff]
    %v1594 = vld [vmem:[#allocation9 + $0x940] sm:$0xff]
    %v1595 = vld [vmem:[#allocation9 + $0x948] sm:$0xff]
    %v1596 = vld [vmem:[#allocation9 + $0x950] sm:$0xff]
    %v1597 = vld [vmem:[#allocation9 + $0x958] sm:$0xff]
    %v1598 = vld [vmem:[#allocation9 + $0x960] sm:$0xff]
    %v1599 = vld [vmem:[#allocation9 + $0x968] sm:$0xff]
    %v1600 = vld [vmem:[#allocation9 + $0x970] sm:$0xff]
    %v1601 = vld [vmem:[#allocation9 + $0x978] sm:$0xff]
    %v1602 = vld [vmem:[#allocation9 + $0x980] sm:$0xff]
    %v1603 = vld [vmem:[#allocation9 + $0x988] sm:$0xff]
    %v1604 = vld [vmem:[#allocation9 + $0x990] sm:$0xff]
    %v1605 = vld [vmem:[#allocation9 + $0x998] sm:$0xff]
    %v1606 = vld [vmem:[#allocation9 + $0x9a0] sm:$0xff]
    %v1607 = vld [vmem:[#allocation9 + $0x9a8] sm:$0xff]
    %v1608 = vld [vmem:[#allocation9 + $0x9b0] sm:$0xff]
    %v1609 = vld [vmem:[#allocation9 + $0x9b8] sm:$0xff]
    %v1610 = vld [vmem:[#allocation9 + $0x9c0] sm:$0xff]
    %v1611 = vld [vmem:[#allocation9 + $0x9c8] sm:$0xff]
    %v1612 = vld [vmem:[#allocation9 + $0x9d0] sm:$0xff]
    %v1613 = vld [vmem:[#allocation9 + $0x9d8] sm:$0xff]
    %v1614 = vld [vmem:[#allocation9 + $0x9e0] sm:$0xff]
    %v1615 = vld [vmem:[#allocation9 + $0x9e8] sm:$0xff]
    %v1616 = vld [vmem:[#allocation9 + $0x9f0] sm:$0xff]
    %v1617 = vld [vmem:[#allocation9 + $0x9f8] sm:$0xff]
    %v1618 = vld [vmem:[#allocation9 + $0xa00] sm:$0xff]
    %v1619 = vld [vmem:[#allocation9 + $0xa08] sm:$0xff]
    %v1620 = vld [vmem:[#allocation9 + $0xa10] sm:$0xff]
    %v1621 = vld [vmem:[#allocation9 + $0xa18] sm:$0xff]
    %v1622 = vld [vmem:[#allocation9 + $0xa20] sm:$0xff]
    %v1623 = vld [vmem:[#allocation9 + $0xa28] sm:$0xff]
    %v1624 = vld [vmem:[#allocation9 + $0xa30] sm:$0xff]
    %v1625 = vld [vmem:[#allocation9 + $0xa38] sm:$0xff]
    %v1626 = vld [vmem:[#allocation9 + $0xa40] sm:$0xff]
    %v1627 = vld [vmem:[#allocation9 + $0xa48] sm:$0xff]
    %v1628 = vld [vmem:[#allocation9 + $0xa50] sm:$0xff]
    %v1629 = vld [vmem:[#allocation9 + $0xa58] sm:$0xff]
    %v1630 = vld [vmem:[#allocation9 + $0xa60] sm:$0xff]
    %v1631 = vld [vmem:[#allocation9 + $0xa68] sm:$0xff]
    %v1632 = vld [vmem:[#allocation9 + $0xa70] sm:$0xff]
    %v1633 = vld [vmem:[#allocation9 + $0xa78] sm:$0xff]
    %v1634 = vld [vmem:[#allocation9 + $0xa80] sm:$0xff]
    %v1635 = vld [vmem:[#allocation9 + $0xa88] sm:$0xff]
    %v1636 = vld [vmem:[#allocation9 + $0xa90] sm:$0xff]
    %v1637 = vld [vmem:[#allocation9 + $0xa98] sm:$0xff]
    %v1638 = vld [vmem:[#allocation9 + $0xaa0] sm:$0xff]
    %v1639 = vld [vmem:[#allocation9 + $0xaa8] sm:$0xff]
    %v1640 = vld [vmem:[#allocation9 + $0xab0] sm:$0xff]
    %v1641 = vld [vmem:[#allocation9 + $0xab8] sm:$0xff]
    %v1642 = vld [vmem:[#allocation9 + $0xac0] sm:$0xff]
    %v1643 = vld [vmem:[#allocation9 + $0xac8] sm:$0xff]
    %v1644 = vld [vmem:[#allocation9 + $0xad0] sm:$0xff]
    %v1645 = vld [vmem:[#allocation9 + $0xad8] sm:$0xff]
    %v1646 = vld [vmem:[#allocation9 + $0xae0] sm:$0xff]
    %v1647 = vld [vmem:[#allocation9 + $0xae8] sm:$0xff]
    %v1648 = vld [vmem:[#allocation9 + $0xaf0] sm:$0xff]
    %v1649 = vld [vmem:[#allocation9 + $0xaf8] sm:$0xff]
    %v1650 = vld [vmem:[#allocation9 + $0xb00] sm:$0xff]
    %v1651 = vld [vmem:[#allocation9 + $0xb08] sm:$0xff]
    %v1652 = vld [vmem:[#allocation9 + $0xb10] sm:$0xff]
    %v1653 = vld [vmem:[#allocation9 + $0xb18] sm:$0xff]
    %v1654 = vld [vmem:[#allocation9 + $0xb20] sm:$0xff]
    %v1655 = vld [vmem:[#allocation9 + $0xb28] sm:$0xff]
    %v1656 = vld [vmem:[#allocation9 + $0xb30] sm:$0xff]
    %v1657 = vld [vmem:[#allocation9 + $0xb38] sm:$0xff]
    %v1658 = vld [vmem:[#allocation9 + $0xb40] sm:$0xff]
    %v1659 = vld [vmem:[#allocation9 + $0xb48] sm:$0xff]
    %v1660 = vld [vmem:[#allocation9 + $0xb50] sm:$0xff]
    %v1661 = vld [vmem:[#allocation9 + $0xb58] sm:$0xff]
    %v1662 = vld [vmem:[#allocation9 + $0xb60] sm:$0xff]
    %v1663 = vld [vmem:[#allocation9 + $0xb68] sm:$0xff]
    %v1664 = vld [vmem:[#allocation9 + $0xb70] sm:$0xff]
    %v1665 = vld [vmem:[#allocation9 + $0xb78] sm:$0xff]
    %v1666 = vld [vmem:[#allocation9 + $0xb80] sm:$0xff]
    %v1667 = vld [vmem:[#allocation9 + $0xb88] sm:$0xff]
    %v1668 = vld [vmem:[#allocation9 + $0xb90] sm:$0xff]
    %v1669 = vld [vmem:[#allocation9 + $0xb98] sm:$0xff]
    %v1670 = vld [vmem:[#allocation9 + $0xba0] sm:$0xff]
    %v1671 = vld [vmem:[#allocation9 + $0xba8] sm:$0xff]
    %v1672 = vld [vmem:[#allocation9 + $0xbb0] sm:$0xff]
    %v1673 = vld [vmem:[#allocation9 + $0xbb8] sm:$0xff]
    %v1674 = vld [vmem:[#allocation9 + $0xbc0] sm:$0xff]
    %v1675 = vld [vmem:[#allocation9 + $0xbc8] sm:$0xff]
    %v1676 = vld [vmem:[#allocation9 + $0xbd0] sm:$0xff]
    %v1677 = vld [vmem:[#allocation9 + $0xbd8] sm:$0xff]
    %v1678 = vld [vmem:[#allocation9 + $0xbe0] sm:$0xff]
    %v1679 = vld [vmem:[#allocation9 + $0xbe8] sm:$0xff]
    %v1680 = vld [vmem:[#allocation9 + $0xbf0] sm:$0xff]
    %v1681 = vld [vmem:[#allocation9 + $0xbf8] sm:$0xff]
    %v1682 = vld [vmem:[#allocation11] sm:$0xff]
    %v1684 = vlaneseq
    %v1685 = vshrl.u32 %v1684, 7
    %v1686 = vsub.s32 0, %v1685
    %v1687 = vrot.slane %v1682, %v1686
    %v1688 = vlaneseq
    %v1689 = vshrl.u32 %v1688, 7
    %v1690 = vsub.s32 1, %v1689
    %v1691 = vrot.slane %v1682, %v1690
    %v1692 = vlaneseq
    %v1693 = vshrl.u32 %v1692, 7
    %v1694 = vsub.s32 2, %v1693
    %v1695 = vrot.slane %v1682, %v1694
    %v1696 = vlaneseq
    %v1697 = vshrl.u32 %v1696, 7
    %v1698 = vsub.s32 3, %v1697
    %v1699 = vrot.slane %v1682, %v1698
    %v1700 = vlaneseq
    %v1701 = vshrl.u32 %v1700, 7
    %v1702 = vsub.s32 4, %v1701
    %v1703 = vrot.slane %v1682, %v1702
    %v1704 = vlaneseq
    %v1705 = vshrl.u32 %v1704, 7
    %v1706 = vsub.s32 5, %v1705
    %v1707 = vrot.slane %v1682, %v1706
    %v1708 = vlaneseq
    %v1709 = vshrl.u32 %v1708, 7
    %v1710 = vsub.s32 6, %v1709
    %v1711 = vrot.slane %v1682, %v1710
    %v1712 = vlaneseq
    %v1713 = vshrl.u32 %v1712, 7
    %v1714 = vsub.s32 7, %v1713
    %v1715 = vrot.slane %v1682, %v1714
    %v2108 = vunpack.c.l.b16 %v1298
    %v2109 = vunpack.c.h.b16 %v1298
    %v2110 = vunpack.c.l.b16 %v1299
    %v2111 = vunpack.c.h.b16 %v1299
    %v2112 = vunpack.c.l.b16 %v1300
    %v2113 = vunpack.c.h.b16 %v1300
    %v2114 = vunpack.c.l.b16 %v1301
    %v2115 = vunpack.c.h.b16 %v1301
    %v2116 = vunpack.c.l.b16 %v1302
    %v2117 = vunpack.c.h.b16 %v1302
    %v2118 = vunpack.c.l.b16 %v1303
    %v2119 = vunpack.c.h.b16 %v1303
    %v2120 = vunpack.c.l.b16 %v1304
    %v2121 = vunpack.c.h.b16 %v1304
    %v2122 = vunpack.c.l.b16 %v1305
    %v2123 = vunpack.c.h.b16 %v1305
    %v2124 = vunpack.c.l.b16 %v1306
    %v2125 = vunpack.c.h.b16 %v1306
    %v2126 = vunpack.c.l.b16 %v1307
    %v2127 = vunpack.c.h.b16 %v1307
    %v2128 = vunpack.c.l.b16 %v1308
    %v2129 = vunpack.c.h.b16 %v1308
    %v2130 = vunpack.c.l.b16 %v1309
    %v2131 = vunpack.c.h.b16 %v1309
    %v2132 = vunpack.c.l.b16 %v1310
    %v2133 = vunpack.c.h.b16 %v1310
    %v2134 = vunpack.c.l.b16 %v1311
    %v2135 = vunpack.c.h.b16 %v1311
    %v2136 = vunpack.c.l.b16 %v1312
    %v2137 = vunpack.c.h.b16 %v1312
    %v2138 = vunpack.c.l.b16 %v1313
    %v2139 = vunpack.c.h.b16 %v1313
    %v2140 = vunpack.c.l.b16 %v1314
    %v2141 = vunpack.c.h.b16 %v1314
    %v2142 = vunpack.c.l.b16 %v1315
    %v2143 = vunpack.c.h.b16 %v1315
    %v2144 = vunpack.c.l.b16 %v1316
    %v2145 = vunpack.c.h.b16 %v1316
    %v2146 = vunpack.c.l.b16 %v1317
    %v2147 = vunpack.c.h.b16 %v1317
    %v2148 = vunpack.c.l.b16 %v1318
    %v2149 = vunpack.c.h.b16 %v1318
    %v2150 = vunpack.c.l.b16 %v1319
    %v2151 = vunpack.c.h.b16 %v1319
    %v2152 = vunpack.c.l.b16 %v1320
    %v2153 = vunpack.c.h.b16 %v1320
    %v2154 = vunpack.c.l.b16 %v1321
    %v2155 = vunpack.c.h.b16 %v1321
    %v2156 = vunpack.c.l.b16 %v1322
    %v2157 = vunpack.c.h.b16 %v1322
    %v2158 = vunpack.c.l.b16 %v1323
    %v2159 = vunpack.c.h.b16 %v1323
    %v2160 = vunpack.c.l.b16 %v1324
    %v2161 = vunpack.c.h.b16 %v1324
    %v2162 = vunpack.c.l.b16 %v1325
    %v2163 = vunpack.c.h.b16 %v1325
    %v2164 = vunpack.c.l.b16 %v1326
    %v2165 = vunpack.c.h.b16 %v1326
    %v2166 = vunpack.c.l.b16 %v1327
    %v2167 = vunpack.c.h.b16 %v1327
    %v2168 = vunpack.c.l.b16 %v1328
    %v2169 = vunpack.c.h.b16 %v1328
    %v2170 = vunpack.c.l.b16 %v1329
    %v2171 = vunpack.c.h.b16 %v1329
    %v2172 = vunpack.c.l.b16 %v1330
    %v2173 = vunpack.c.h.b16 %v1330
    %v2174 = vunpack.c.l.b16 %v1331
    %v2175 = vunpack.c.h.b16 %v1331
    %v2176 = vunpack.c.l.b16 %v1332
    %v2177 = vunpack.c.h.b16 %v1332
    %v2178 = vunpack.c.l.b16 %v1333
    %v2179 = vunpack.c.h.b16 %v1333
    %v2180 = vunpack.c.l.b16 %v1334
    %v2181 = vunpack.c.h.b16 %v1334
    %v2182 = vunpack.c.l.b16 %v1335
    %v2183 = vunpack.c.h.b16 %v1335
    %v2184 = vunpack.c.l.b16 %v1336
    %v2185 = vunpack.c.h.b16 %v1336
    %v2186 = vunpack.c.l.b16 %v1337
    %v2187 = vunpack.c.h.b16 %v1337
    %v2188 = vunpack.c.l.b16 %v1338
    %v2189 = vunpack.c.h.b16 %v1338
    %v2190 = vunpack.c.l.b16 %v1339
    %v2191 = vunpack.c.h.b16 %v1339
    %v2192 = vunpack.c.l.b16 %v1340
    %v2193 = vunpack.c.h.b16 %v1340
    %v2194 = vunpack.c.l.b16 %v1341
    %v2195 = vunpack.c.h.b16 %v1341
    %v2196 = vunpack.c.l.b16 %v1342
    %v2197 = vunpack.c.h.b16 %v1342
    %v2198 = vunpack.c.l.b16 %v1343
    %v2199 = vunpack.c.h.b16 %v1343
    %v2200 = vunpack.c.l.b16 %v1344
    %v2201 = vunpack.c.h.b16 %v1344
    %v2202 = vunpack.c.l.b16 %v1345
    %v2203 = vunpack.c.h.b16 %v1345
    %v2204 = vunpack.c.l.b16 %v1346
    %v2205 = vunpack.c.h.b16 %v1346
    %v2206 = vunpack.c.l.b16 %v1347
    %v2207 = vunpack.c.h.b16 %v1347
    %v2208 = vunpack.c.l.b16 %v1348
    %v2209 = vunpack.c.h.b16 %v1348
    %v2210 = vunpack.c.l.b16 %v1349
    %v2211 = vunpack.c.h.b16 %v1349
    %v2212 = vunpack.c.l.b16 %v1350
    %v2213 = vunpack.c.h.b16 %v1350
    %v2214 = vunpack.c.l.b16 %v1351
    %v2215 = vunpack.c.h.b16 %v1351
    %v2216 = vunpack.c.l.b16 %v1352
    %v2217 = vunpack.c.h.b16 %v1352
    %v2218 = vunpack.c.l.b16 %v1353
    %v2219 = vunpack.c.h.b16 %v1353
    %v2220 = vunpack.c.l.b16 %v1354
    %v2221 = vunpack.c.h.b16 %v1354
    %v2222 = vunpack.c.l.b16 %v1355
    %v2223 = vunpack.c.h.b16 %v1355
    %v2224 = vunpack.c.l.b16 %v1356
    %v2225 = vunpack.c.h.b16 %v1356
    %v2226 = vunpack.c.l.b16 %v1357
    %v2227 = vunpack.c.h.b16 %v1357
    %v2228 = vunpack.c.l.b16 %v1358
    %v2229 = vunpack.c.h.b16 %v1358
    %v2230 = vunpack.c.l.b16 %v1359
    %v2231 = vunpack.c.h.b16 %v1359
    %v2232 = vunpack.c.l.b16 %v1360
    %v2233 = vunpack.c.h.b16 %v1360
    %v2234 = vunpack.c.l.b16 %v1361
    %v2235 = vunpack.c.h.b16 %v1361
    %v2236 = vunpack.c.l.b16 %v1362
    %v2237 = vunpack.c.h.b16 %v1362
    %v2238 = vunpack.c.l.b16 %v1363
    %v2239 = vunpack.c.h.b16 %v1363
    %v2240 = vunpack.c.l.b16 %v1364
    %v2241 = vunpack.c.h.b16 %v1364
    %v2242 = vunpack.c.l.b16 %v1365
    %v2243 = vunpack.c.h.b16 %v1365
    %v2244 = vunpack.c.l.b16 %v1366
    %v2245 = vunpack.c.h.b16 %v1366
    %v2246 = vunpack.c.l.b16 %v1367
    %v2247 = vunpack.c.h.b16 %v1367
    %v2248 = vunpack.c.l.b16 %v1368
    %v2249 = vunpack.c.h.b16 %v1368
    %v2250 = vunpack.c.l.b16 %v1369
    %v2251 = vunpack.c.h.b16 %v1369
    %v2252 = vunpack.c.l.b16 %v1370
    %v2253 = vunpack.c.h.b16 %v1370
    %v2254 = vunpack.c.l.b16 %v1371
    %v2255 = vunpack.c.h.b16 %v1371
    %v2256 = vunpack.c.l.b16 %v1372
    %v2257 = vunpack.c.h.b16 %v1372
    %v2258 = vunpack.c.l.b16 %v1373
    %v2259 = vunpack.c.h.b16 %v1373
    %v2260 = vunpack.c.l.b16 %v1374
    %v2261 = vunpack.c.h.b16 %v1374
    %v2262 = vunpack.c.l.b16 %v1375
    %v2263 = vunpack.c.h.b16 %v1375
    %v2264 = vunpack.c.l.b16 %v1376
    %v2265 = vunpack.c.h.b16 %v1376
    %v2266 = vunpack.c.l.b16 %v1377
    %v2267 = vunpack.c.h.b16 %v1377
    %v2268 = vunpack.c.l.b16 %v1378
    %v2269 = vunpack.c.h.b16 %v1378
    %v2270 = vunpack.c.l.b16 %v1379
    %v2271 = vunpack.c.h.b16 %v1379
    %v2272 = vunpack.c.l.b16 %v1380
    %v2273 = vunpack.c.h.b16 %v1380
    %v2274 = vunpack.c.l.b16 %v1381
    %v2275 = vunpack.c.h.b16 %v1381
    %v2276 = vunpack.c.l.b16 %v1382
    %v2277 = vunpack.c.h.b16 %v1382
    %v2278 = vunpack.c.l.b16 %v1383
    %v2279 = vunpack.c.h.b16 %v1383
    %v2280 = vunpack.c.l.b16 %v1384
    %v2281 = vunpack.c.h.b16 %v1384
    %v2282 = vunpack.c.l.b16 %v1385
    %v2283 = vunpack.c.h.b16 %v1385
    %v2284 = vunpack.c.l.b16 %v1386
    %v2285 = vunpack.c.h.b16 %v1386
    %v2286 = vunpack.c.l.b16 %v1387
    %v2287 = vunpack.c.h.b16 %v1387
    %v2288 = vunpack.c.l.b16 %v1388
    %v2289 = vunpack.c.h.b16 %v1388
    %v2290 = vunpack.c.l.b16 %v1389
    %v2291 = vunpack.c.h.b16 %v1389
    %v2292 = vunpack.c.l.b16 %v1390
    %v2293 = vunpack.c.h.b16 %v1390
    %v2294 = vunpack.c.l.b16 %v1391
    %v2295 = vunpack.c.h.b16 %v1391
    %v2296 = vunpack.c.l.b16 %v1392
    %v2297 = vunpack.c.h.b16 %v1392
    %v2298 = vunpack.c.l.b16 %v1393
    %v2299 = vunpack.c.h.b16 %v1393
    %v2300 = vunpack.c.l.b16 %v1394
    %v2301 = vunpack.c.h.b16 %v1394
    %v2302 = vunpack.c.l.b16 %v1395
    %v2303 = vunpack.c.h.b16 %v1395
    %v2304 = vunpack.c.l.b16 %v1396
    %v2305 = vunpack.c.h.b16 %v1396
    %v2306 = vunpack.c.l.b16 %v1397
    %v2307 = vunpack.c.h.b16 %v1397
    %v2308 = vunpack.c.l.b16 %v1398
    %v2309 = vunpack.c.h.b16 %v1398
    %v2310 = vunpack.c.l.b16 %v1399
    %v2311 = vunpack.c.h.b16 %v1399
    %v2312 = vunpack.c.l.b16 %v1400
    %v2313 = vunpack.c.h.b16 %v1400
    %v2314 = vunpack.c.l.b16 %v1401
    %v2315 = vunpack.c.h.b16 %v1401
    %v2316 = vunpack.c.l.b16 %v1402
    %v2317 = vunpack.c.h.b16 %v1402
    %v2318 = vunpack.c.l.b16 %v1403
    %v2319 = vunpack.c.h.b16 %v1403
    %v2320 = vunpack.c.l.b16 %v1404
    %v2321 = vunpack.c.h.b16 %v1404
    %v2322 = vunpack.c.l.b16 %v1405
    %v2323 = vunpack.c.h.b16 %v1405
    %v2324 = vunpack.c.l.b16 %v1406
    %v2325 = vunpack.c.h.b16 %v1406
    %v2326 = vunpack.c.l.b16 %v1407
    %v2327 = vunpack.c.h.b16 %v1407
    %v2328 = vunpack.c.l.b16 %v1408
    %v2329 = vunpack.c.h.b16 %v1408
    %v2330 = vunpack.c.l.b16 %v1409
    %v2331 = vunpack.c.h.b16 %v1409
    %v2332 = vunpack.c.l.b16 %v1410
    %v2333 = vunpack.c.h.b16 %v1410
    %v2334 = vunpack.c.l.b16 %v1411
    %v2335 = vunpack.c.h.b16 %v1411
    %v2336 = vunpack.c.l.b16 %v1412
    %v2337 = vunpack.c.h.b16 %v1412
    %v2338 = vunpack.c.l.b16 %v1413
    %v2339 = vunpack.c.h.b16 %v1413
    %v2340 = vunpack.c.l.b16 %v1414
    %v2341 = vunpack.c.h.b16 %v1414
    %v2342 = vunpack.c.l.b16 %v1415
    %v2343 = vunpack.c.h.b16 %v1415
    %v2344 = vunpack.c.l.b16 %v1416
    %v2345 = vunpack.c.h.b16 %v1416
    %v2346 = vunpack.c.l.b16 %v1417
    %v2347 = vunpack.c.h.b16 %v1417
    %v2348 = vunpack.c.l.b16 %v1418
    %v2349 = vunpack.c.h.b16 %v1418
    %v2350 = vunpack.c.l.b16 %v1419
    %v2351 = vunpack.c.h.b16 %v1419
    %v2352 = vunpack.c.l.b16 %v1420
    %v2353 = vunpack.c.h.b16 %v1420
    %v2354 = vunpack.c.l.b16 %v1421
    %v2355 = vunpack.c.h.b16 %v1421
    %v2356 = vunpack.c.l.b16 %v1422
    %v2357 = vunpack.c.h.b16 %v1422
    %v2358 = vunpack.c.l.b16 %v1423
    %v2359 = vunpack.c.h.b16 %v1423
    %v2360 = vunpack.c.l.b16 %v1424
    %v2361 = vunpack.c.h.b16 %v1424
    %v2362 = vunpack.c.l.b16 %v1425
    %v2363 = vunpack.c.h.b16 %v1425
    %v2364 = vunpack.c.l.b16 %v1426
    %v2365 = vunpack.c.h.b16 %v1426
    %v2366 = vunpack.c.l.b16 %v1427
    %v2367 = vunpack.c.h.b16 %v1427
    %v2368 = vunpack.c.l.b16 %v1428
    %v2369 = vunpack.c.h.b16 %v1428
    %v2370 = vunpack.c.l.b16 %v1429
    %v2371 = vunpack.c.h.b16 %v1429
    %v2372 = vunpack.c.l.b16 %v1430
    %v2373 = vunpack.c.h.b16 %v1430
    %v2374 = vunpack.c.l.b16 %v1431
    %v2375 = vunpack.c.h.b16 %v1431
    %v2376 = vunpack.c.l.b16 %v1432
    %v2377 = vunpack.c.h.b16 %v1432
    %v2378 = vunpack.c.l.b16 %v1433
    %v2379 = vunpack.c.h.b16 %v1433
    %v2380 = vunpack.c.l.b16 %v1434
    %v2381 = vunpack.c.h.b16 %v1434
    %v2382 = vunpack.c.l.b16 %v1435
    %v2383 = vunpack.c.h.b16 %v1435
    %v2384 = vunpack.c.l.b16 %v1436
    %v2385 = vunpack.c.h.b16 %v1436
    %v2386 = vunpack.c.l.b16 %v1437
    %v2387 = vunpack.c.h.b16 %v1437
    %v2388 = vunpack.c.l.b16 %v1438
    %v2389 = vunpack.c.h.b16 %v1438
    %v2390 = vunpack.c.l.b16 %v1439
    %v2391 = vunpack.c.h.b16 %v1439
    %v2392 = vunpack.c.l.b16 %v1440
    %v2393 = vunpack.c.h.b16 %v1440
    %v2394 = vunpack.c.l.b16 %v1441
    %v2395 = vunpack.c.h.b16 %v1441
    %v2396 = vunpack.c.l.b16 %v1442
    %v2397 = vunpack.c.h.b16 %v1442
    %v2398 = vunpack.c.l.b16 %v1443
    %v2399 = vunpack.c.h.b16 %v1443
    %v2400 = vunpack.c.l.b16 %v1444
    %v2401 = vunpack.c.h.b16 %v1444
    %v2402 = vunpack.c.l.b16 %v1445
    %v2403 = vunpack.c.h.b16 %v1445
    %v2404 = vunpack.c.l.b16 %v1446
    %v2405 = vunpack.c.h.b16 %v1446
    %v2406 = vunpack.c.l.b16 %v1447
    %v2407 = vunpack.c.h.b16 %v1447
    %v2408 = vunpack.c.l.b16 %v1448
    %v2409 = vunpack.c.h.b16 %v1448
    %v2410 = vunpack.c.l.b16 %v1449
    %v2411 = vunpack.c.h.b16 %v1449
    %v2412 = vunpack.c.l.b16 %v1450
    %v2413 = vunpack.c.h.b16 %v1450
    %v2414 = vunpack.c.l.b16 %v1451
    %v2415 = vunpack.c.h.b16 %v1451
    %v2416 = vunpack.c.l.b16 %v1452
    %v2417 = vunpack.c.h.b16 %v1452
    %v2418 = vunpack.c.l.b16 %v1453
    %v2419 = vunpack.c.h.b16 %v1453
    %v2420 = vunpack.c.l.b16 %v1454
    %v2421 = vunpack.c.h.b16 %v1454
    %v2422 = vunpack.c.l.b16 %v1455
    %v2423 = vunpack.c.h.b16 %v1455
    %v2424 = vunpack.c.l.b16 %v1456
    %v2425 = vunpack.c.h.b16 %v1456
    %v2426 = vunpack.c.l.b16 %v1457
    %v2427 = vunpack.c.h.b16 %v1457
    %v2428 = vunpack.c.l.b16 %v1458
    %v2429 = vunpack.c.h.b16 %v1458
    %v2430 = vunpack.c.l.b16 %v1459
    %v2431 = vunpack.c.h.b16 %v1459
    %v2432 = vunpack.c.l.b16 %v1460
    %v2433 = vunpack.c.h.b16 %v1460
    %v2434 = vunpack.c.l.b16 %v1461
    %v2435 = vunpack.c.h.b16 %v1461
    %v2436 = vunpack.c.l.b16 %v1462
    %v2437 = vunpack.c.h.b16 %v1462
    %v2438 = vunpack.c.l.b16 %v1463
    %v2439 = vunpack.c.h.b16 %v1463
    %v2440 = vunpack.c.l.b16 %v1464
    %v2441 = vunpack.c.h.b16 %v1464
    %v2442 = vunpack.c.l.b16 %v1465
    %v2443 = vunpack.c.h.b16 %v1465
    %v2444 = vunpack.c.l.b16 %v1466
    %v2445 = vunpack.c.h.b16 %v1466
    %v2446 = vunpack.c.l.b16 %v1467
    %v2447 = vunpack.c.h.b16 %v1467
    %v2448 = vunpack.c.l.b16 %v1468
    %v2449 = vunpack.c.h.b16 %v1468
    %v2450 = vunpack.c.l.b16 %v1469
    %v2451 = vunpack.c.h.b16 %v1469
    %v2452 = vunpack.c.l.b16 %v1470
    %v2453 = vunpack.c.h.b16 %v1470
    %v2454 = vunpack.c.l.b16 %v1471
    %v2455 = vunpack.c.h.b16 %v1471
    %v2456 = vunpack.c.l.b16 %v1472
    %v2457 = vunpack.c.h.b16 %v1472
    %v2458 = vunpack.c.l.b16 %v1473
    %v2459 = vunpack.c.h.b16 %v1473
    %v2460 = vunpack.c.l.b16 %v1474
    %v2461 = vunpack.c.h.b16 %v1474
    %v2462 = vunpack.c.l.b16 %v1475
    %v2463 = vunpack.c.h.b16 %v1475
    %v2464 = vunpack.c.l.b16 %v1476
    %v2465 = vunpack.c.h.b16 %v1476
    %v2466 = vunpack.c.l.b16 %v1477
    %v2467 = vunpack.c.h.b16 %v1477
    %v2468 = vunpack.c.l.b16 %v1478
    %v2469 = vunpack.c.h.b16 %v1478
    %v2470 = vunpack.c.l.b16 %v1479
    %v2471 = vunpack.c.h.b16 %v1479
    %v2472 = vunpack.c.l.b16 %v1480
    %v2473 = vunpack.c.h.b16 %v1480
    %v2474 = vunpack.c.l.b16 %v1481
    %v2475 = vunpack.c.h.b16 %v1481
    %v2476 = vunpack.c.l.b16 %v1482
    %v2477 = vunpack.c.h.b16 %v1482
    %v2478 = vunpack.c.l.b16 %v1483
    %v2479 = vunpack.c.h.b16 %v1483
    %v2480 = vunpack.c.l.b16 %v1484
    %v2481 = vunpack.c.h.b16 %v1484
    %v2482 = vunpack.c.l.b16 %v1485
    %v2483 = vunpack.c.h.b16 %v1485
    %v2484 = vunpack.c.l.b16 %v1486
    %v2485 = vunpack.c.h.b16 %v1486
    %v2486 = vunpack.c.l.b16 %v1487
    %v2487 = vunpack.c.h.b16 %v1487
    %v2488 = vunpack.c.l.b16 %v1488
    %v2489 = vunpack.c.h.b16 %v1488
    %v2490 = vunpack.c.l.b16 %v1489
    %v2491 = vunpack.c.h.b16 %v1489
    %v2492 = vunpack.c.l.b16 %v1490
    %v2493 = vunpack.c.h.b16 %v1490
    %v2494 = vunpack.c.l.b16 %v1491
    %v2495 = vunpack.c.h.b16 %v1491
    %v2496 = vunpack.c.l.b16 %v1492
    %v2497 = vunpack.c.h.b16 %v1492
    %v2498 = vunpack.c.l.b16 %v1493
    %v2499 = vunpack.c.h.b16 %v1493
    %v2500 = vunpack.c.l.b16 %v1494
    %v2501 = vunpack.c.h.b16 %v1494
    %v2502 = vunpack.c.l.b16 %v1495
    %v2503 = vunpack.c.h.b16 %v1495
    %v2504 = vunpack.c.l.b16 %v1496
    %v2505 = vunpack.c.h.b16 %v1496
    %v2506 = vunpack.c.l.b16 %v1497
    %v2507 = vunpack.c.h.b16 %v1497
    %v2508 = vunpack.c.l.b16 %v1498
    %v2509 = vunpack.c.h.b16 %v1498
    %v2510 = vunpack.c.l.b16 %v1499
    %v2511 = vunpack.c.h.b16 %v1499
    %v2512 = vunpack.c.l.b16 %v1500
    %v2513 = vunpack.c.h.b16 %v1500
    %v2514 = vunpack.c.l.b16 %v1501
    %v2515 = vunpack.c.h.b16 %v1501
    %v2516 = vunpack.c.l.b16 %v1502
    %v2517 = vunpack.c.h.b16 %v1502
    %v2518 = vunpack.c.l.b16 %v1503
    %v2519 = vunpack.c.h.b16 %v1503
    %v2520 = vunpack.c.l.b16 %v1504
    %v2521 = vunpack.c.h.b16 %v1504
    %v2522 = vunpack.c.l.b16 %v1505
    %v2523 = vunpack.c.h.b16 %v1505
    %v2524 = vunpack.c.l.b16 %v1506
    %v2525 = vunpack.c.h.b16 %v1506
    %v2526 = vunpack.c.l.b16 %v1507
    %v2527 = vunpack.c.h.b16 %v1507
    %v2528 = vunpack.c.l.b16 %v1508
    %v2529 = vunpack.c.h.b16 %v1508
    %v2530 = vunpack.c.l.b16 %v1509
    %v2531 = vunpack.c.h.b16 %v1509
    %v2532 = vunpack.c.l.b16 %v1510
    %v2533 = vunpack.c.h.b16 %v1510
    %v2534 = vunpack.c.l.b16 %v1511
    %v2535 = vunpack.c.h.b16 %v1511
    %v2536 = vunpack.c.l.b16 %v1512
    %v2537 = vunpack.c.h.b16 %v1512
    %v2538 = vunpack.c.l.b16 %v1513
    %v2539 = vunpack.c.h.b16 %v1513
    %v2540 = vunpack.c.l.b16 %v1514
    %v2541 = vunpack.c.h.b16 %v1514
    %v2542 = vunpack.c.l.b16 %v1515
    %v2543 = vunpack.c.h.b16 %v1515
    %v2544 = vunpack.c.l.b16 %v1516
    %v2545 = vunpack.c.h.b16 %v1516
    %v2546 = vunpack.c.l.b16 %v1517
    %v2547 = vunpack.c.h.b16 %v1517
    %v2548 = vunpack.c.l.b16 %v1518
    %v2549 = vunpack.c.h.b16 %v1518
    %v2550 = vunpack.c.l.b16 %v1519
    %v2551 = vunpack.c.h.b16 %v1519
    %v2552 = vunpack.c.l.b16 %v1520
    %v2553 = vunpack.c.h.b16 %v1520
    %v2554 = vunpack.c.l.b16 %v1521
    %v2555 = vunpack.c.h.b16 %v1521
    %v2556 = vunpack.c.l.b16 %v1522
    %v2557 = vunpack.c.h.b16 %v1522
    %v2558 = vunpack.c.l.b16 %v1523
    %v2559 = vunpack.c.h.b16 %v1523
    %v2560 = vunpack.c.l.b16 %v1524
    %v2561 = vunpack.c.h.b16 %v1524
    %v2562 = vunpack.c.l.b16 %v1525
    %v2563 = vunpack.c.h.b16 %v1525
    %v2564 = vunpack.c.l.b16 %v1526
    %v2565 = vunpack.c.h.b16 %v1526
    %v2566 = vunpack.c.l.b16 %v1527
    %v2567 = vunpack.c.h.b16 %v1527
    %v2568 = vunpack.c.l.b16 %v1528
    %v2569 = vunpack.c.h.b16 %v1528
    %v2570 = vunpack.c.l.b16 %v1529
    %v2571 = vunpack.c.h.b16 %v1529
    %v2572 = vunpack.c.l.b16 %v1530
    %v2573 = vunpack.c.h.b16 %v1530
    %v2574 = vunpack.c.l.b16 %v1531
    %v2575 = vunpack.c.h.b16 %v1531
    %v2576 = vunpack.c.l.b16 %v1532
    %v2577 = vunpack.c.h.b16 %v1532
    %v2578 = vunpack.c.l.b16 %v1533
    %v2579 = vunpack.c.h.b16 %v1533
    %v2580 = vunpack.c.l.b16 %v1534
    %v2581 = vunpack.c.h.b16 %v1534
    %v2582 = vunpack.c.l.b16 %v1535
    %v2583 = vunpack.c.h.b16 %v1535
    %v2584 = vunpack.c.l.b16 %v1536
    %v2585 = vunpack.c.h.b16 %v1536
    %v2586 = vunpack.c.l.b16 %v1537
    %v2587 = vunpack.c.h.b16 %v1537
    %v2588 = vunpack.c.l.b16 %v1538
    %v2589 = vunpack.c.h.b16 %v1538
    %v2590 = vunpack.c.l.b16 %v1539
    %v2591 = vunpack.c.h.b16 %v1539
    %v2592 = vunpack.c.l.b16 %v1540
    %v2593 = vunpack.c.h.b16 %v1540
    %v2594 = vunpack.c.l.b16 %v1541
    %v2595 = vunpack.c.h.b16 %v1541
    %v2596 = vunpack.c.l.b16 %v1542
    %v2597 = vunpack.c.h.b16 %v1542
    %v2598 = vunpack.c.l.b16 %v1543
    %v2599 = vunpack.c.h.b16 %v1543
    %v2600 = vunpack.c.l.b16 %v1544
    %v2601 = vunpack.c.h.b16 %v1544
    %v2602 = vunpack.c.l.b16 %v1545
    %v2603 = vunpack.c.h.b16 %v1545
    %v2604 = vunpack.c.l.b16 %v1546
    %v2605 = vunpack.c.h.b16 %v1546
    %v2606 = vunpack.c.l.b16 %v1547
    %v2607 = vunpack.c.h.b16 %v1547
    %v2608 = vunpack.c.l.b16 %v1548
    %v2609 = vunpack.c.h.b16 %v1548
    %v2610 = vunpack.c.l.b16 %v1549
    %v2611 = vunpack.c.h.b16 %v1549
    %v2612 = vunpack.c.l.b16 %v1550
    %v2613 = vunpack.c.h.b16 %v1550
    %v2614 = vunpack.c.l.b16 %v1551
    %v2615 = vunpack.c.h.b16 %v1551
    %v2616 = vunpack.c.l.b16 %v1552
    %v2617 = vunpack.c.h.b16 %v1552
    %v2618 = vunpack.c.l.b16 %v1553
    %v2619 = vunpack.c.h.b16 %v1553
    %v2620 = vunpack.c.l.b16 %v1554
    %v2621 = vunpack.c.h.b16 %v1554
    %v2622 = vunpack.c.l.b16 %v1555
    %v2623 = vunpack.c.h.b16 %v1555
    %v2624 = vunpack.c.l.b16 %v1556
    %v2625 = vunpack.c.h.b16 %v1556
    %v2626 = vunpack.c.l.b16 %v1557
    %v2627 = vunpack.c.h.b16 %v1557
    %v2628 = vunpack.c.l.b16 %v1558
    %v2629 = vunpack.c.h.b16 %v1558
    %v2630 = vunpack.c.l.b16 %v1559
    %v2631 = vunpack.c.h.b16 %v1559
    %v2632 = vunpack.c.l.b16 %v1560
    %v2633 = vunpack.c.h.b16 %v1560
    %v2634 = vunpack.c.l.b16 %v1561
    %v2635 = vunpack.c.h.b16 %v1561
    %v2636 = vunpack.c.l.b16 %v1562
    %v2637 = vunpack.c.h.b16 %v1562
    %v2638 = vunpack.c.l.b16 %v1563
    %v2639 = vunpack.c.h.b16 %v1563
    %v2640 = vunpack.c.l.b16 %v1564
    %v2641 = vunpack.c.h.b16 %v1564
    %v2642 = vunpack.c.l.b16 %v1565
    %v2643 = vunpack.c.h.b16 %v1565
    %v2644 = vunpack.c.l.b16 %v1566
    %v2645 = vunpack.c.h.b16 %v1566
    %v2646 = vunpack.c.l.b16 %v1567
    %v2647 = vunpack.c.h.b16 %v1567
    %v2648 = vunpack.c.l.b16 %v1568
    %v2649 = vunpack.c.h.b16 %v1568
    %v2650 = vunpack.c.l.b16 %v1569
    %v2651 = vunpack.c.h.b16 %v1569
    %v2652 = vunpack.c.l.b16 %v1570
    %v2653 = vunpack.c.h.b16 %v1570
    %v2654 = vunpack.c.l.b16 %v1571
    %v2655 = vunpack.c.h.b16 %v1571
    %v2656 = vunpack.c.l.b16 %v1572
    %v2657 = vunpack.c.h.b16 %v1572
    %v2658 = vunpack.c.l.b16 %v1573
    %v2659 = vunpack.c.h.b16 %v1573
    %v2660 = vunpack.c.l.b16 %v1574
    %v2661 = vunpack.c.h.b16 %v1574
    %v2662 = vunpack.c.l.b16 %v1575
    %v2663 = vunpack.c.h.b16 %v1575
    %v2664 = vunpack.c.l.b16 %v1576
    %v2665 = vunpack.c.h.b16 %v1576
    %v2666 = vunpack.c.l.b16 %v1577
    %v2667 = vunpack.c.h.b16 %v1577
    %v2668 = vunpack.c.l.b16 %v1578
    %v2669 = vunpack.c.h.b16 %v1578
    %v2670 = vunpack.c.l.b16 %v1579
    %v2671 = vunpack.c.h.b16 %v1579
    %v2672 = vunpack.c.l.b16 %v1580
    %v2673 = vunpack.c.h.b16 %v1580
    %v2674 = vunpack.c.l.b16 %v1581
    %v2675 = vunpack.c.h.b16 %v1581
    %v2676 = vunpack.c.l.b16 %v1582
    %v2677 = vunpack.c.h.b16 %v1582
    %v2678 = vunpack.c.l.b16 %v1583
    %v2679 = vunpack.c.h.b16 %v1583
    %v2680 = vunpack.c.l.b16 %v1584
    %v2681 = vunpack.c.h.b16 %v1584
    %v2682 = vunpack.c.l.b16 %v1585
    %v2683 = vunpack.c.h.b16 %v1585
    %v2684 = vunpack.c.l.b16 %v1586
    %v2685 = vunpack.c.h.b16 %v1586
    %v2686 = vunpack.c.l.b16 %v1587
    %v2687 = vunpack.c.h.b16 %v1587
    %v2688 = vunpack.c.l.b16 %v1588
    %v2689 = vunpack.c.h.b16 %v1588
    %v2690 = vunpack.c.l.b16 %v1589
    %v2691 = vunpack.c.h.b16 %v1589
    %v2692 = vunpack.c.l.b16 %v1590
    %v2693 = vunpack.c.h.b16 %v1590
    %v2694 = vunpack.c.l.b16 %v1591
    %v2695 = vunpack.c.h.b16 %v1591
    %v2696 = vunpack.c.l.b16 %v1592
    %v2697 = vunpack.c.h.b16 %v1592
    %v2698 = vunpack.c.l.b16 %v1593
    %v2699 = vunpack.c.h.b16 %v1593
    %v2700 = vunpack.c.l.b16 %v1594
    %v2701 = vunpack.c.h.b16 %v1594
    %v2702 = vunpack.c.l.b16 %v1595
    %v2703 = vunpack.c.h.b16 %v1595
    %v2704 = vunpack.c.l.b16 %v1596
    %v2705 = vunpack.c.h.b16 %v1596
    %v2706 = vunpack.c.l.b16 %v1597
    %v2707 = vunpack.c.h.b16 %v1597
    %v2708 = vunpack.c.l.b16 %v1598
    %v2709 = vunpack.c.h.b16 %v1598
    %v2710 = vunpack.c.l.b16 %v1599
    %v2711 = vunpack.c.h.b16 %v1599
    %v2712 = vunpack.c.l.b16 %v1600
    %v2713 = vunpack.c.h.b16 %v1600
    %v2714 = vunpack.c.l.b16 %v1601
    %v2715 = vunpack.c.h.b16 %v1601
    %v2716 = vunpack.c.l.b16 %v1602
    %v2717 = vunpack.c.h.b16 %v1602
    %v2718 = vunpack.c.l.b16 %v1603
    %v2719 = vunpack.c.h.b16 %v1603
    %v2720 = vunpack.c.l.b16 %v1604
    %v2721 = vunpack.c.h.b16 %v1604
    %v2722 = vunpack.c.l.b16 %v1605
    %v2723 = vunpack.c.h.b16 %v1605
    %v2724 = vunpack.c.l.b16 %v1606
    %v2725 = vunpack.c.h.b16 %v1606
    %v2726 = vunpack.c.l.b16 %v1607
    %v2727 = vunpack.c.h.b16 %v1607
    %v2728 = vunpack.c.l.b16 %v1608
    %v2729 = vunpack.c.h.b16 %v1608
    %v2730 = vunpack.c.l.b16 %v1609
    %v2731 = vunpack.c.h.b16 %v1609
    %v2732 = vunpack.c.l.b16 %v1610
    %v2733 = vunpack.c.h.b16 %v1610
    %v2734 = vunpack.c.l.b16 %v1611
    %v2735 = vunpack.c.h.b16 %v1611
    %v2736 = vunpack.c.l.b16 %v1612
    %v2737 = vunpack.c.h.b16 %v1612
    %v2738 = vunpack.c.l.b16 %v1613
    %v2739 = vunpack.c.h.b16 %v1613
    %v2740 = vunpack.c.l.b16 %v1614
    %v2741 = vunpack.c.h.b16 %v1614
    %v2742 = vunpack.c.l.b16 %v1615
    %v2743 = vunpack.c.h.b16 %v1615
    %v2744 = vunpack.c.l.b16 %v1616
    %v2745 = vunpack.c.h.b16 %v1616
    %v2746 = vunpack.c.l.b16 %v1617
    %v2747 = vunpack.c.h.b16 %v1617
    %v2748 = vunpack.c.l.b16 %v1618
    %v2749 = vunpack.c.h.b16 %v1618
    %v2750 = vunpack.c.l.b16 %v1619
    %v2751 = vunpack.c.h.b16 %v1619
    %v2752 = vunpack.c.l.b16 %v1620
    %v2753 = vunpack.c.h.b16 %v1620
    %v2754 = vunpack.c.l.b16 %v1621
    %v2755 = vunpack.c.h.b16 %v1621
    %v2756 = vunpack.c.l.b16 %v1622
    %v2757 = vunpack.c.h.b16 %v1622
    %v2758 = vunpack.c.l.b16 %v1623
    %v2759 = vunpack.c.h.b16 %v1623
    %v2760 = vunpack.c.l.b16 %v1624
    %v2761 = vunpack.c.h.b16 %v1624
    %v2762 = vunpack.c.l.b16 %v1625
    %v2763 = vunpack.c.h.b16 %v1625
    %v2764 = vunpack.c.l.b16 %v1626
    %v2765 = vunpack.c.h.b16 %v1626
    %v2766 = vunpack.c.l.b16 %v1627
    %v2767 = vunpack.c.h.b16 %v1627
    %v2768 = vunpack.c.l.b16 %v1628
    %v2769 = vunpack.c.h.b16 %v1628
    %v2770 = vunpack.c.l.b16 %v1629
    %v2771 = vunpack.c.h.b16 %v1629
    %v2772 = vunpack.c.l.b16 %v1630
    %v2773 = vunpack.c.h.b16 %v1630
    %v2774 = vunpack.c.l.b16 %v1631
    %v2775 = vunpack.c.h.b16 %v1631
    %v2776 = vunpack.c.l.b16 %v1632
    %v2777 = vunpack.c.h.b16 %v1632
    %v2778 = vunpack.c.l.b16 %v1633
    %v2779 = vunpack.c.h.b16 %v1633
    %v2780 = vunpack.c.l.b16 %v1634
    %v2781 = vunpack.c.h.b16 %v1634
    %v2782 = vunpack.c.l.b16 %v1635
    %v2783 = vunpack.c.h.b16 %v1635
    %v2784 = vunpack.c.l.b16 %v1636
    %v2785 = vunpack.c.h.b16 %v1636
    %v2786 = vunpack.c.l.b16 %v1637
    %v2787 = vunpack.c.h.b16 %v1637
    %v2788 = vunpack.c.l.b16 %v1638
    %v2789 = vunpack.c.h.b16 %v1638
    %v2790 = vunpack.c.l.b16 %v1639
    %v2791 = vunpack.c.h.b16 %v1639
    %v2792 = vunpack.c.l.b16 %v1640
    %v2793 = vunpack.c.h.b16 %v1640
    %v2794 = vunpack.c.l.b16 %v1641
    %v2795 = vunpack.c.h.b16 %v1641
    %v2796 = vunpack.c.l.b16 %v1642
    %v2797 = vunpack.c.h.b16 %v1642
    %v2798 = vunpack.c.l.b16 %v1643
    %v2799 = vunpack.c.h.b16 %v1643
    %v2800 = vunpack.c.l.b16 %v1644
    %v2801 = vunpack.c.h.b16 %v1644
    %v2802 = vunpack.c.l.b16 %v1645
    %v2803 = vunpack.c.h.b16 %v1645
    %v2804 = vunpack.c.l.b16 %v1646
    %v2805 = vunpack.c.h.b16 %v1646
    %v2806 = vunpack.c.l.b16 %v1647
    %v2807 = vunpack.c.h.b16 %v1647
    %v2808 = vunpack.c.l.b16 %v1648
    %v2809 = vunpack.c.h.b16 %v1648
    %v2810 = vunpack.c.l.b16 %v1649
    %v2811 = vunpack.c.h.b16 %v1649
    %v2812 = vunpack.c.l.b16 %v1650
    %v2813 = vunpack.c.h.b16 %v1650
    %v2814 = vunpack.c.l.b16 %v1651
    %v2815 = vunpack.c.h.b16 %v1651
    %v2816 = vunpack.c.l.b16 %v1652
    %v2817 = vunpack.c.h.b16 %v1652
    %v2818 = vunpack.c.l.b16 %v1653
    %v2819 = vunpack.c.h.b16 %v1653
    %v2820 = vunpack.c.l.b16 %v1654
    %v2821 = vunpack.c.h.b16 %v1654
    %v2822 = vunpack.c.l.b16 %v1655
    %v2823 = vunpack.c.h.b16 %v1655
    %v2824 = vunpack.c.l.b16 %v1656
    %v2825 = vunpack.c.h.b16 %v1656
    %v2826 = vunpack.c.l.b16 %v1657
    %v2827 = vunpack.c.h.b16 %v1657
    %v2828 = vunpack.c.l.b16 %v1658
    %v2829 = vunpack.c.h.b16 %v1658
    %v2830 = vunpack.c.l.b16 %v1659
    %v2831 = vunpack.c.h.b16 %v1659
    %v2832 = vunpack.c.l.b16 %v1660
    %v2833 = vunpack.c.h.b16 %v1660
    %v2834 = vunpack.c.l.b16 %v1661
    %v2835 = vunpack.c.h.b16 %v1661
    %v2836 = vunpack.c.l.b16 %v1662
    %v2837 = vunpack.c.h.b16 %v1662
    %v2838 = vunpack.c.l.b16 %v1663
    %v2839 = vunpack.c.h.b16 %v1663
    %v2840 = vunpack.c.l.b16 %v1664
    %v2841 = vunpack.c.h.b16 %v1664
    %v2842 = vunpack.c.l.b16 %v1665
    %v2843 = vunpack.c.h.b16 %v1665
    %v2844 = vunpack.c.l.b16 %v1666
    %v2845 = vunpack.c.h.b16 %v1666
    %v2846 = vunpack.c.l.b16 %v1667
    %v2847 = vunpack.c.h.b16 %v1667
    %v2848 = vunpack.c.l.b16 %v1668
    %v2849 = vunpack.c.h.b16 %v1668
    %v2850 = vunpack.c.l.b16 %v1669
    %v2851 = vunpack.c.h.b16 %v1669
    %v2852 = vunpack.c.l.b16 %v1670
    %v2853 = vunpack.c.h.b16 %v1670
    %v2854 = vunpack.c.l.b16 %v1671
    %v2855 = vunpack.c.h.b16 %v1671
    %v2856 = vunpack.c.l.b16 %v1672
    %v2857 = vunpack.c.h.b16 %v1672
    %v2858 = vunpack.c.l.b16 %v1673
    %v2859 = vunpack.c.h.b16 %v1673
    %v2860 = vunpack.c.l.b16 %v1674
    %v2861 = vunpack.c.h.b16 %v1674
    %v2862 = vunpack.c.l.b16 %v1675
    %v2863 = vunpack.c.h.b16 %v1675
    %v2864 = vunpack.c.l.b16 %v1676
    %v2865 = vunpack.c.h.b16 %v1676
    %v2866 = vunpack.c.l.b16 %v1677
    %v2867 = vunpack.c.h.b16 %v1677
    %v2868 = vunpack.c.l.b16 %v1678
    %v2869 = vunpack.c.h.b16 %v1678
    %v2870 = vunpack.c.l.b16 %v1679
    %v2871 = vunpack.c.h.b16 %v1679
    %v2872 = vunpack.c.l.b16 %v1680
    %v2873 = vunpack.c.h.b16 %v1680
    %v2874 = vunpack.c.l.b16 %v1681
    %v2875 = vunpack.c.h.b16 %v1681
    %v2876 = vpack.c.b16 %v2116, %v2108
    %v2877 = vpack.c.b16 %v2117, %v2109
    %v2878 = vpack.c.b16 %v2118, %v2110
    %v2879 = vpack.c.b16 %v2119, %v2111
    %v2880 = vpack.c.b16 %v2120, %v2112
    %v2881 = vpack.c.b16 %v2121, %v2113
    %v2882 = vpack.c.b16 %v2122, %v2114
    %v2883 = vpack.c.b16 %v2123, %v2115
    %v2884 = vpack.c.b16 %v2132, %v2124
    %v2885 = vpack.c.b16 %v2133, %v2125
    %v2886 = vpack.c.b16 %v2134, %v2126
    %v2887 = vpack.c.b16 %v2135, %v2127
    %v2888 = vpack.c.b16 %v2136, %v2128
    %v2889 = vpack.c.b16 %v2137, %v2129
    %v2890 = vpack.c.b16 %v2138, %v2130
    %v2891 = vpack.c.b16 %v2139, %v2131
    %v2892 = vpack.c.b16 %v2148, %v2140
    %v2893 = vpack.c.b16 %v2149, %v2141
    %v2894 = vpack.c.b16 %v2150, %v2142
    %v2895 = vpack.c.b16 %v2151, %v2143
    %v2896 = vpack.c.b16 %v2152, %v2144
    %v2897 = vpack.c.b16 %v2153, %v2145
    %v2898 = vpack.c.b16 %v2154, %v2146
    %v2899 = vpack.c.b16 %v2155, %v2147
    %v2900 = vpack.c.b16 %v2164, %v2156
    %v2901 = vpack.c.b16 %v2165, %v2157
    %v2902 = vpack.c.b16 %v2166, %v2158
    %v2903 = vpack.c.b16 %v2167, %v2159
    %v2904 = vpack.c.b16 %v2168, %v2160
    %v2905 = vpack.c.b16 %v2169, %v2161
    %v2906 = vpack.c.b16 %v2170, %v2162
    %v2907 = vpack.c.b16 %v2171, %v2163
    %v2908 = vpack.c.b16 %v2180, %v2172
    %v2909 = vpack.c.b16 %v2181, %v2173
    %v2910 = vpack.c.b16 %v2182, %v2174
    %v2911 = vpack.c.b16 %v2183, %v2175
    %v2912 = vpack.c.b16 %v2184, %v2176
    %v2913 = vpack.c.b16 %v2185, %v2177
    %v2914 = vpack.c.b16 %v2186, %v2178
    %v2915 = vpack.c.b16 %v2187, %v2179
    %v2916 = vpack.c.b16 %v2196, %v2188
    %v2917 = vpack.c.b16 %v2197, %v2189
    %v2918 = vpack.c.b16 %v2198, %v2190
    %v2919 = vpack.c.b16 %v2199, %v2191
    %v2920 = vpack.c.b16 %v2200, %v2192
    %v2921 = vpack.c.b16 %v2201, %v2193
    %v2922 = vpack.c.b16 %v2202, %v2194
    %v2923 = vpack.c.b16 %v2203, %v2195
    %v2924 = vpack.c.b16 %v2212, %v2204
    %v2925 = vpack.c.b16 %v2213, %v2205
    %v2926 = vpack.c.b16 %v2214, %v2206
    %v2927 = vpack.c.b16 %v2215, %v2207
    %v2928 = vpack.c.b16 %v2216, %v2208
    %v2929 = vpack.c.b16 %v2217, %v2209
    %v2930 = vpack.c.b16 %v2218, %v2210
    %v2931 = vpack.c.b16 %v2219, %v2211
    %v2932 = vpack.c.b16 %v2228, %v2220
    %v2933 = vpack.c.b16 %v2229, %v2221
    %v2934 = vpack.c.b16 %v2230, %v2222
    %v2935 = vpack.c.b16 %v2231, %v2223
    %v2936 = vpack.c.b16 %v2232, %v2224
    %v2937 = vpack.c.b16 %v2233, %v2225
    %v2938 = vpack.c.b16 %v2234, %v2226
    %v2939 = vpack.c.b16 %v2235, %v2227
    %v2940 = vpack.c.b16 %v2244, %v2236
    %v2941 = vpack.c.b16 %v2245, %v2237
    %v2942 = vpack.c.b16 %v2246, %v2238
    %v2943 = vpack.c.b16 %v2247, %v2239
    %v2944 = vpack.c.b16 %v2248, %v2240
    %v2945 = vpack.c.b16 %v2249, %v2241
    %v2946 = vpack.c.b16 %v2250, %v2242
    %v2947 = vpack.c.b16 %v2251, %v2243
    %v2948 = vpack.c.b16 %v2260, %v2252
    %v2949 = vpack.c.b16 %v2261, %v2253
    %v2950 = vpack.c.b16 %v2262, %v2254
    %v2951 = vpack.c.b16 %v2263, %v2255
    %v2952 = vpack.c.b16 %v2264, %v2256
    %v2953 = vpack.c.b16 %v2265, %v2257
    %v2954 = vpack.c.b16 %v2266, %v2258
    %v2955 = vpack.c.b16 %v2267, %v2259
    %v2956 = vpack.c.b16 %v2276, %v2268
    %v2957 = vpack.c.b16 %v2277, %v2269
    %v2958 = vpack.c.b16 %v2278, %v2270
    %v2959 = vpack.c.b16 %v2279, %v2271
    %v2960 = vpack.c.b16 %v2280, %v2272
    %v2961 = vpack.c.b16 %v2281, %v2273
    %v2962 = vpack.c.b16 %v2282, %v2274
    %v2963 = vpack.c.b16 %v2283, %v2275
    %v2964 = vpack.c.b16 %v2292, %v2284
    %v2965 = vpack.c.b16 %v2293, %v2285
    %v2966 = vpack.c.b16 %v2294, %v2286
    %v2967 = vpack.c.b16 %v2295, %v2287
    %v2968 = vpack.c.b16 %v2296, %v2288
    %v2969 = vpack.c.b16 %v2297, %v2289
    %v2970 = vpack.c.b16 %v2298, %v2290
    %v2971 = vpack.c.b16 %v2299, %v2291
    %v2972 = vpack.c.b16 %v2308, %v2300
    %v2973 = vpack.c.b16 %v2309, %v2301
    %v2974 = vpack.c.b16 %v2310, %v2302
    %v2975 = vpack.c.b16 %v2311, %v2303
    %v2976 = vpack.c.b16 %v2312, %v2304
    %v2977 = vpack.c.b16 %v2313, %v2305
    %v2978 = vpack.c.b16 %v2314, %v2306
    %v2979 = vpack.c.b16 %v2315, %v2307
    %v2980 = vpack.c.b16 %v2324, %v2316
    %v2981 = vpack.c.b16 %v2325, %v2317
    %v2982 = vpack.c.b16 %v2326, %v2318
    %v2983 = vpack.c.b16 %v2327, %v2319
    %v2984 = vpack.c.b16 %v2328, %v2320
    %v2985 = vpack.c.b16 %v2329, %v2321
    %v2986 = vpack.c.b16 %v2330, %v2322
    %v2987 = vpack.c.b16 %v2331, %v2323
    %v2988 = vpack.c.b16 %v2340, %v2332
    %v2989 = vpack.c.b16 %v2341, %v2333
    %v2990 = vpack.c.b16 %v2342, %v2334
    %v2991 = vpack.c.b16 %v2343, %v2335
    %v2992 = vpack.c.b16 %v2344, %v2336
    %v2993 = vpack.c.b16 %v2345, %v2337
    %v2994 = vpack.c.b16 %v2346, %v2338
    %v2995 = vpack.c.b16 %v2347, %v2339
    %v2996 = vpack.c.b16 %v2356, %v2348
    %v2997 = vpack.c.b16 %v2357, %v2349
    %v2998 = vpack.c.b16 %v2358, %v2350
    %v2999 = vpack.c.b16 %v2359, %v2351
    %v3000 = vpack.c.b16 %v2360, %v2352
    %v3001 = vpack.c.b16 %v2361, %v2353
    %v3002 = vpack.c.b16 %v2362, %v2354
    %v3003 = vpack.c.b16 %v2363, %v2355
    %v3004 = vpack.c.b16 %v2372, %v2364
    %v3005 = vpack.c.b16 %v2373, %v2365
    %v3006 = vpack.c.b16 %v2374, %v2366
    %v3007 = vpack.c.b16 %v2375, %v2367
    %v3008 = vpack.c.b16 %v2376, %v2368
    %v3009 = vpack.c.b16 %v2377, %v2369
    %v3010 = vpack.c.b16 %v2378, %v2370
    %v3011 = vpack.c.b16 %v2379, %v2371
    %v3012 = vpack.c.b16 %v2388, %v2380
    %v3013 = vpack.c.b16 %v2389, %v2381
    %v3014 = vpack.c.b16 %v2390, %v2382
    %v3015 = vpack.c.b16 %v2391, %v2383
    %v3016 = vpack.c.b16 %v2392, %v2384
    %v3017 = vpack.c.b16 %v2393, %v2385
    %v3018 = vpack.c.b16 %v2394, %v2386
    %v3019 = vpack.c.b16 %v2395, %v2387
    %v3020 = vpack.c.b16 %v2404, %v2396
    %v3021 = vpack.c.b16 %v2405, %v2397
    %v3022 = vpack.c.b16 %v2406, %v2398
    %v3023 = vpack.c.b16 %v2407, %v2399
    %v3024 = vpack.c.b16 %v2408, %v2400
    %v3025 = vpack.c.b16 %v2409, %v2401
    %v3026 = vpack.c.b16 %v2410, %v2402
    %v3027 = vpack.c.b16 %v2411, %v2403
    %v3028 = vpack.c.b16 %v2420, %v2412
    %v3029 = vpack.c.b16 %v2421, %v2413
    %v3030 = vpack.c.b16 %v2422, %v2414
    %v3031 = vpack.c.b16 %v2423, %v2415
    %v3032 = vpack.c.b16 %v2424, %v2416
    %v3033 = vpack.c.b16 %v2425, %v2417
    %v3034 = vpack.c.b16 %v2426, %v2418
    %v3035 = vpack.c.b16 %v2427, %v2419
    %v3036 = vpack.c.b16 %v2436, %v2428
    %v3037 = vpack.c.b16 %v2437, %v2429
    %v3038 = vpack.c.b16 %v2438, %v2430
    %v3039 = vpack.c.b16 %v2439, %v2431
    %v3040 = vpack.c.b16 %v2440, %v2432
    %v3041 = vpack.c.b16 %v2441, %v2433
    %v3042 = vpack.c.b16 %v2442, %v2434
    %v3043 = vpack.c.b16 %v2443, %v2435
    %v3044 = vpack.c.b16 %v2452, %v2444
    %v3045 = vpack.c.b16 %v2453, %v2445
    %v3046 = vpack.c.b16 %v2454, %v2446
    %v3047 = vpack.c.b16 %v2455, %v2447
    %v3048 = vpack.c.b16 %v2456, %v2448
    %v3049 = vpack.c.b16 %v2457, %v2449
    %v3050 = vpack.c.b16 %v2458, %v2450
    %v3051 = vpack.c.b16 %v2459, %v2451
    %v3052 = vpack.c.b16 %v2468, %v2460
    %v3053 = vpack.c.b16 %v2469, %v2461
    %v3054 = vpack.c.b16 %v2470, %v2462
    %v3055 = vpack.c.b16 %v2471, %v2463
    %v3056 = vpack.c.b16 %v2472, %v2464
    %v3057 = vpack.c.b16 %v2473, %v2465
    %v3058 = vpack.c.b16 %v2474, %v2466
    %v3059 = vpack.c.b16 %v2475, %v2467
    %v3060 = vpack.c.b16 %v2484, %v2476
    %v3061 = vpack.c.b16 %v2485, %v2477
    %v3062 = vpack.c.b16 %v2486, %v2478
    %v3063 = vpack.c.b16 %v2487, %v2479
    %v3064 = vpack.c.b16 %v2488, %v2480
    %v3065 = vpack.c.b16 %v2489, %v2481
    %v3066 = vpack.c.b16 %v2490, %v2482
    %v3067 = vpack.c.b16 %v2491, %v2483
    %v3068 = vpack.c.b16 %v2500, %v2492
    %v3069 = vpack.c.b16 %v2501, %v2493
    %v3070 = vpack.c.b16 %v2502, %v2494
    %v3071 = vpack.c.b16 %v2503, %v2495
    %v3072 = vpack.c.b16 %v2504, %v2496
    %v3073 = vpack.c.b16 %v2505, %v2497
    %v3074 = vpack.c.b16 %v2506, %v2498
    %v3075 = vpack.c.b16 %v2507, %v2499
    %v3076 = vpack.c.b16 %v2516, %v2508
    %v3077 = vpack.c.b16 %v2517, %v2509
    %v3078 = vpack.c.b16 %v2518, %v2510
    %v3079 = vpack.c.b16 %v2519, %v2511
    %v3080 = vpack.c.b16 %v2520, %v2512
    %v3081 = vpack.c.b16 %v2521, %v2513
    %v3082 = vpack.c.b16 %v2522, %v2514
    %v3083 = vpack.c.b16 %v2523, %v2515
    %v3084 = vpack.c.b16 %v2532, %v2524
    %v3085 = vpack.c.b16 %v2533, %v2525
    %v3086 = vpack.c.b16 %v2534, %v2526
    %v3087 = vpack.c.b16 %v2535, %v2527
    %v3088 = vpack.c.b16 %v2536, %v2528
    %v3089 = vpack.c.b16 %v2537, %v2529
    %v3090 = vpack.c.b16 %v2538, %v2530
    %v3091 = vpack.c.b16 %v2539, %v2531
    %v3092 = vpack.c.b16 %v2548, %v2540
    %v3093 = vpack.c.b16 %v2549, %v2541
    %v3094 = vpack.c.b16 %v2550, %v2542
    %v3095 = vpack.c.b16 %v2551, %v2543
    %v3096 = vpack.c.b16 %v2552, %v2544
    %v3097 = vpack.c.b16 %v2553, %v2545
    %v3098 = vpack.c.b16 %v2554, %v2546
    %v3099 = vpack.c.b16 %v2555, %v2547
    %v3100 = vpack.c.b16 %v2564, %v2556
    %v3101 = vpack.c.b16 %v2565, %v2557
    %v3102 = vpack.c.b16 %v2566, %v2558
    %v3103 = vpack.c.b16 %v2567, %v2559
    %v3104 = vpack.c.b16 %v2568, %v2560
    %v3105 = vpack.c.b16 %v2569, %v2561
    %v3106 = vpack.c.b16 %v2570, %v2562
    %v3107 = vpack.c.b16 %v2571, %v2563
    %v3108 = vpack.c.b16 %v2580, %v2572
    %v3109 = vpack.c.b16 %v2581, %v2573
    %v3110 = vpack.c.b16 %v2582, %v2574
    %v3111 = vpack.c.b16 %v2583, %v2575
    %v3112 = vpack.c.b16 %v2584, %v2576
    %v3113 = vpack.c.b16 %v2585, %v2577
    %v3114 = vpack.c.b16 %v2586, %v2578
    %v3115 = vpack.c.b16 %v2587, %v2579
    %v3116 = vpack.c.b16 %v2596, %v2588
    %v3117 = vpack.c.b16 %v2597, %v2589
    %v3118 = vpack.c.b16 %v2598, %v2590
    %v3119 = vpack.c.b16 %v2599, %v2591
    %v3120 = vpack.c.b16 %v2600, %v2592
    %v3121 = vpack.c.b16 %v2601, %v2593
    %v3122 = vpack.c.b16 %v2602, %v2594
    %v3123 = vpack.c.b16 %v2603, %v2595
    %v3124 = vpack.c.b16 %v2612, %v2604
    %v3125 = vpack.c.b16 %v2613, %v2605
    %v3126 = vpack.c.b16 %v2614, %v2606
    %v3127 = vpack.c.b16 %v2615, %v2607
    %v3128 = vpack.c.b16 %v2616, %v2608
    %v3129 = vpack.c.b16 %v2617, %v2609
    %v3130 = vpack.c.b16 %v2618, %v2610
    %v3131 = vpack.c.b16 %v2619, %v2611
    %v3132 = vpack.c.b16 %v2628, %v2620
    %v3133 = vpack.c.b16 %v2629, %v2621
    %v3134 = vpack.c.b16 %v2630, %v2622
    %v3135 = vpack.c.b16 %v2631, %v2623
    %v3136 = vpack.c.b16 %v2632, %v2624
    %v3137 = vpack.c.b16 %v2633, %v2625
    %v3138 = vpack.c.b16 %v2634, %v2626
    %v3139 = vpack.c.b16 %v2635, %v2627
    %v3140 = vpack.c.b16 %v2644, %v2636
    %v3141 = vpack.c.b16 %v2645, %v2637
    %v3142 = vpack.c.b16 %v2646, %v2638
    %v3143 = vpack.c.b16 %v2647, %v2639
    %v3144 = vpack.c.b16 %v2648, %v2640
    %v3145 = vpack.c.b16 %v2649, %v2641
    %v3146 = vpack.c.b16 %v2650, %v2642
    %v3147 = vpack.c.b16 %v2651, %v2643
    %v3148 = vpack.c.b16 %v2660, %v2652
    %v3149 = vpack.c.b16 %v2661, %v2653
    %v3150 = vpack.c.b16 %v2662, %v2654
    %v3151 = vpack.c.b16 %v2663, %v2655
    %v3152 = vpack.c.b16 %v2664, %v2656
    %v3153 = vpack.c.b16 %v2665, %v2657
    %v3154 = vpack.c.b16 %v2666, %v2658
    %v3155 = vpack.c.b16 %v2667, %v2659
    %v3156 = vpack.c.b16 %v2676, %v2668
    %v3157 = vpack.c.b16 %v2677, %v2669
    %v3158 = vpack.c.b16 %v2678, %v2670
    %v3159 = vpack.c.b16 %v2679, %v2671
    %v3160 = vpack.c.b16 %v2680, %v2672
    %v3161 = vpack.c.b16 %v2681, %v2673
    %v3162 = vpack.c.b16 %v2682, %v2674
    %v3163 = vpack.c.b16 %v2683, %v2675
    %v3164 = vpack.c.b16 %v2692, %v2684
    %v3165 = vpack.c.b16 %v2693, %v2685
    %v3166 = vpack.c.b16 %v2694, %v2686
    %v3167 = vpack.c.b16 %v2695, %v2687
    %v3168 = vpack.c.b16 %v2696, %v2688
    %v3169 = vpack.c.b16 %v2697, %v2689
    %v3170 = vpack.c.b16 %v2698, %v2690
    %v3171 = vpack.c.b16 %v2699, %v2691
    %v3172 = vpack.c.b16 %v2708, %v2700
    %v3173 = vpack.c.b16 %v2709, %v2701
    %v3174 = vpack.c.b16 %v2710, %v2702
    %v3175 = vpack.c.b16 %v2711, %v2703
    %v3176 = vpack.c.b16 %v2712, %v2704
    %v3177 = vpack.c.b16 %v2713, %v2705
    %v3178 = vpack.c.b16 %v2714, %v2706
    %v3179 = vpack.c.b16 %v2715, %v2707
    %v3180 = vpack.c.b16 %v2724, %v2716
    %v3181 = vpack.c.b16 %v2725, %v2717
    %v3182 = vpack.c.b16 %v2726, %v2718
    %v3183 = vpack.c.b16 %v2727, %v2719
    %v3184 = vpack.c.b16 %v2728, %v2720
    %v3185 = vpack.c.b16 %v2729, %v2721
    %v3186 = vpack.c.b16 %v2730, %v2722
    %v3187 = vpack.c.b16 %v2731, %v2723
    %v3188 = vpack.c.b16 %v2740, %v2732
    %v3189 = vpack.c.b16 %v2741, %v2733
    %v3190 = vpack.c.b16 %v2742, %v2734
    %v3191 = vpack.c.b16 %v2743, %v2735
    %v3192 = vpack.c.b16 %v2744, %v2736
    %v3193 = vpack.c.b16 %v2745, %v2737
    %v3194 = vpack.c.b16 %v2746, %v2738
    %v3195 = vpack.c.b16 %v2747, %v2739
    %v3196 = vpack.c.b16 %v2756, %v2748
    %v3197 = vpack.c.b16 %v2757, %v2749
    %v3198 = vpack.c.b16 %v2758, %v2750
    %v3199 = vpack.c.b16 %v2759, %v2751
    %v3200 = vpack.c.b16 %v2760, %v2752
    %v3201 = vpack.c.b16 %v2761, %v2753
    %v3202 = vpack.c.b16 %v2762, %v2754
    %v3203 = vpack.c.b16 %v2763, %v2755
    %v3204 = vpack.c.b16 %v2772, %v2764
    %v3205 = vpack.c.b16 %v2773, %v2765
    %v3206 = vpack.c.b16 %v2774, %v2766
    %v3207 = vpack.c.b16 %v2775, %v2767
    %v3208 = vpack.c.b16 %v2776, %v2768
    %v3209 = vpack.c.b16 %v2777, %v2769
    %v3210 = vpack.c.b16 %v2778, %v2770
    %v3211 = vpack.c.b16 %v2779, %v2771
    %v3212 = vpack.c.b16 %v2788, %v2780
    %v3213 = vpack.c.b16 %v2789, %v2781
    %v3214 = vpack.c.b16 %v2790, %v2782
    %v3215 = vpack.c.b16 %v2791, %v2783
    %v3216 = vpack.c.b16 %v2792, %v2784
    %v3217 = vpack.c.b16 %v2793, %v2785
    %v3218 = vpack.c.b16 %v2794, %v2786
    %v3219 = vpack.c.b16 %v2795, %v2787
    %v3220 = vpack.c.b16 %v2804, %v2796
    %v3221 = vpack.c.b16 %v2805, %v2797
    %v3222 = vpack.c.b16 %v2806, %v2798
    %v3223 = vpack.c.b16 %v2807, %v2799
    %v3224 = vpack.c.b16 %v2808, %v2800
    %v3225 = vpack.c.b16 %v2809, %v2801
    %v3226 = vpack.c.b16 %v2810, %v2802
    %v3227 = vpack.c.b16 %v2811, %v2803
    %v3228 = vpack.c.b16 %v2820, %v2812
    %v3229 = vpack.c.b16 %v2821, %v2813
    %v3230 = vpack.c.b16 %v2822, %v2814
    %v3231 = vpack.c.b16 %v2823, %v2815
    %v3232 = vpack.c.b16 %v2824, %v2816
    %v3233 = vpack.c.b16 %v2825, %v2817
    %v3234 = vpack.c.b16 %v2826, %v2818
    %v3235 = vpack.c.b16 %v2827, %v2819
    %v3236 = vpack.c.b16 %v2836, %v2828
    %v3237 = vpack.c.b16 %v2837, %v2829
    %v3238 = vpack.c.b16 %v2838, %v2830
    %v3239 = vpack.c.b16 %v2839, %v2831
    %v3240 = vpack.c.b16 %v2840, %v2832
    %v3241 = vpack.c.b16 %v2841, %v2833
    %v3242 = vpack.c.b16 %v2842, %v2834
    %v3243 = vpack.c.b16 %v2843, %v2835
    %v3244 = vpack.c.b16 %v2852, %v2844
    %v3245 = vpack.c.b16 %v2853, %v2845
    %v3246 = vpack.c.b16 %v2854, %v2846
    %v3247 = vpack.c.b16 %v2855, %v2847
    %v3248 = vpack.c.b16 %v2856, %v2848
    %v3249 = vpack.c.b16 %v2857, %v2849
    %v3250 = vpack.c.b16 %v2858, %v2850
    %v3251 = vpack.c.b16 %v2859, %v2851
    %v3252 = vpack.c.b16 %v2868, %v2860
    %v3253 = vpack.c.b16 %v2869, %v2861
    %v3254 = vpack.c.b16 %v2870, %v2862
    %v3255 = vpack.c.b16 %v2871, %v2863
    %v3256 = vpack.c.b16 %v2872, %v2864
    %v3257 = vpack.c.b16 %v2873, %v2865
    %v3258 = vpack.c.b16 %v2874, %v2866
    %v3259 = vpack.c.b16 %v2875, %v2867
    %3644 = vmatprep.subr.bf16.mxu0 %v2877
    %3645 = vmatpush1.bf16.msra.mxu0 %v2876
    %3646 = vmatprep.subr.bf16.mxu0 %v2885
    %3647 = vmatpush1.bf16.msra.mxu0 %v2884
    %3648 = vmatprep.subr.bf16.mxu0 %v2893
    %3649 = vmatpush1.bf16.msra.mxu0 %v2892
    %3650 = vmatprep.subr.bf16.mxu0 %v2901
    %3651 = vmatpush1.bf16.msra.mxu0 %v2900
    %3652 = vmatprep.subr.bf16.mxu0 %v2909
    %3653 = vmatpush1.bf16.msra.mxu0 %v2908
    %3654 = vmatprep.subr.bf16.mxu0 %v2917
    %3655 = vmatpush1.bf16.msra.mxu0 %v2916
    %3656 = vmatprep.subr.bf16.mxu0 %v2925
    %3657 = vmatpush1.bf16.msra.mxu0 %v2924
    %3658 = vmatprep.subr.bf16.mxu0 %v2933
    %3659 = vmatpush1.bf16.msra.mxu0 %v2932
    %3660 = vmatprep.subr.bf16.mxu0 %v2941
    %3661 = vmatpush1.bf16.msra.mxu0 %v2940
    %3662 = vmatprep.subr.bf16.mxu0 %v2949
    %3663 = vmatpush1.bf16.msra.mxu0 %v2948
    %3664 = vmatprep.subr.bf16.mxu0 %v2957
    %3665 = vmatpush1.bf16.msra.mxu0 %v2956
    %3666 = vmatprep.subr.bf16.mxu0 %v2965
    %3667 = vmatpush1.bf16.msra.mxu0 %v2964
    %3668 = vmatprep.subr.bf16.mxu0 %v2973
    %3669 = vmatpush1.bf16.msra.mxu0 %v2972
    %3670 = vmatprep.subr.bf16.mxu0 %v2981
    %3671 = vmatpush1.bf16.msra.mxu0 %v2980
    %3672 = vmatprep.subr.bf16.mxu0 %v2989
    %3673 = vmatpush1.bf16.msra.mxu0 %v2988
    %3674 = vmatprep.subr.bf16.mxu0 %v2997
    %3675 = vmatpush1.bf16.msra.mxu0 %v2996
    %3676 = vmatprep.mubr.bf16.mxu0 %v1293
    %3677 = vmatmul.mubr.bf16.gmra.mrb[0].mxu0 %v1292
    %v3678 = vpop.f32.mrb[0].mxu0
    %v3679 = vadd.f32 %v1687, %v3678
    %v3680 = vpop.f32.mrb[0].mxu0
    %v3681 = vadd.f32 %v1691, %v3680
    %v3682 = vpop.f32.mrb[0].mxu0
    %v3683 = vpop.f32.mrb[0].mxu0
    %3684 = vdwg.mxu0
    %3685 = vmatprep.subr.bf16.mxu0 %v3005
    %3686 = vmatpush1.bf16.msra.mxu0 %v3004
    %3687 = vmatprep.subr.bf16.mxu0 %v3013
    %3688 = vmatpush1.bf16.msra.mxu0 %v3012
    %3689 = vmatprep.subr.bf16.mxu0 %v3021
    %3690 = vmatpush1.bf16.msra.mxu0 %v3020
    %3691 = vmatprep.subr.bf16.mxu0 %v3029
    %3692 = vmatpush1.bf16.msra.mxu0 %v3028
    %3693 = vmatprep.subr.bf16.mxu0 %v3037
    %3694 = vmatpush1.bf16.msra.mxu0 %v3036
    %3695 = vmatprep.subr.bf16.mxu0 %v3045
    %3696 = vmatpush1.bf16.msra.mxu0 %v3044
    %3697 = vmatprep.subr.bf16.mxu0 %v3053
    %3698 = vmatpush1.bf16.msra.mxu0 %v3052
    %3699 = vmatprep.subr.bf16.mxu0 %v3061
    %3700 = vmatpush1.bf16.msra.mxu0 %v3060
    %3701 = vmatprep.subr.bf16.mxu0 %v3069
    %3702 = vmatpush1.bf16.msra.mxu0 %v3068
    %3703 = vmatprep.subr.bf16.mxu0 %v3077
    %3704 = vmatpush1.bf16.msra.mxu0 %v3076
    %3705 = vmatprep.subr.bf16.mxu0 %v3085
    %3706 = vmatpush1.bf16.msra.mxu0 %v3084
    %3707 = vmatprep.subr.bf16.mxu0 %v3093
    %3708 = vmatpush1.bf16.msra.mxu0 %v3092
    %3709 = vmatprep.subr.bf16.mxu0 %v3101
    %3710 = vmatpush1.bf16.msra.mxu0 %v3100
    %3711 = vmatprep.subr.bf16.mxu0 %v3109
    %3712 = vmatpush1.bf16.msra.mxu0 %v3108
    %3713 = vmatprep.subr.bf16.mxu0 %v3117
    %3714 = vmatpush1.bf16.msra.mxu0 %v3116
    %3715 = vmatprep.subr.bf16.mxu0 %v3125
    %3716 = vmatpush1.bf16.msra.mxu0 %v3124
    %3717 = vmatprep.mubr.bf16.mxu0 %v1295
    %3718 = vmatmul.mubr.bf16.gmra.mrb[0].mxu0 %v1294
    %v3719 = vpop.f32.mrb[0].mxu0
    %v3720 = vadd.f32 %v3679, %v3719
    %v3721 = vpop.f32.mrb[0].mxu0
    %v3722 = vadd.f32 %v3681, %v3721
    %v3723 = vpop.f32.mrb[0].mxu0
    %v3724 = vpop.f32.mrb[0].mxu0
    %3725 = vdwg.mxu0
    %3726 = vmatprep.subr.bf16.mxu0 %v3133
    %3727 = vmatpush1.bf16.msra.mxu0 %v3132
    %3728 = vmatprep.subr.bf16.mxu0 %v3141
    %3729 = vmatpush1.bf16.msra.mxu0 %v3140
    %3730 = vmatprep.subr.bf16.mxu0 %v3149
    %3731 = vmatpush1.bf16.msra.mxu0 %v3148
    %3732 = vmatprep.subr.bf16.mxu0 %v3157
    %3733 = vmatpush1.bf16.msra.mxu0 %v3156
    %3734 = vmatprep.subr.bf16.mxu0 %v3165
    %3735 = vmatpush1.bf16.msra.mxu0 %v3164
    %3736 = vmatprep.subr.bf16.mxu0 %v3173
    %3737 = vmatpush1.bf16.msra.mxu0 %v3172
    %3738 = vmatprep.subr.bf16.mxu0 %v3181
    %3739 = vmatpush1.bf16.msra.mxu0 %v3180
    %3740 = vmatprep.subr.bf16.mxu0 %v3189
    %3741 = vmatpush1.bf16.msra.mxu0 %v3188
    %3742 = vmatprep.subr.bf16.mxu0 %v3197
    %3743 = vmatpush1.bf16.msra.mxu0 %v3196
    %3744 = vmatprep.subr.bf16.mxu0 %v3205
    %3745 = vmatpush1.bf16.msra.mxu0 %v3204
    %3746 = vmatprep.subr.bf16.mxu0 %v3213
    %3747 = vmatpush1.bf16.msra.mxu0 %v3212
    %3748 = vmatprep.subr.bf16.mxu0 %v3221
    %3749 = vmatpush1.bf16.msra.mxu0 %v3220
    %3750 = vmatprep.subr.bf16.mxu0 %v3229
    %3751 = vmatpush1.bf16.msra.mxu0 %v3228
    %3752 = vmatprep.subr.bf16.mxu0 %v3237
    %3753 = vmatpush1.bf16.msra.mxu0 %v3236
    %3754 = vmatprep.subr.bf16.mxu0 %v3245
    %3755 = vmatpush1.bf16.msra.mxu0 %v3244
    %3756 = vmatprep.subr.bf16.mxu0 %v3253
    %3757 = vmatpush1.bf16.msra.mxu0 %v3252
    %3758 = vmatprep.mubr.bf16.mxu0 %v1297
    %3759 = vmatmul.mubr.bf16.gmra.mrb[0].mxu0 %v1296
    %v3760 = vpop.f32.mrb[0].mxu0
    %v3761 = vadd.f32 %v3720, %v3760
    %v3762 = vpop.f32.mrb[0].mxu0
    %v3763 = vadd.f32 %v3722, %v3762
    %v3764 = vpop.f32.mrb[0].mxu0
    %v3765 = vpop.f32.mrb[0].mxu0
    %3766 = vdwg.mxu0
    %3767 = vmatprep.subr.bf16.mxu0 %v2879
    %3768 = vmatpush1.bf16.msra.mxu0 %v2878
    %3769 = vmatprep.subr.bf16.mxu0 %v2887
    %3770 = vmatpush1.bf16.msra.mxu0 %v2886
    %3771 = vmatprep.subr.bf16.mxu0 %v2895
    %3772 = vmatpush1.bf16.msra.mxu0 %v2894
    %3773 = vmatprep.subr.bf16.mxu0 %v2903
    %3774 = vmatpush1.bf16.msra.mxu0 %v2902
    %3775 = vmatprep.subr.bf16.mxu0 %v2911
    %3776 = vmatpush1.bf16.msra.mxu0 %v2910
    %3777 = vmatprep.subr.bf16.mxu0 %v2919
    %3778 = vmatpush1.bf16.msra.mxu0 %v2918
    %3779 = vmatprep.subr.bf16.mxu0 %v2927
    %3780 = vmatpush1.bf16.msra.mxu0 %v2926
    %3781 = vmatprep.subr.bf16.mxu0 %v2935
    %3782 = vmatpush1.bf16.msra.mxu0 %v2934
    %3783 = vmatprep.subr.bf16.mxu0 %v2943
    %3784 = vmatpush1.bf16.msra.mxu0 %v2942
    %3785 = vmatprep.subr.bf16.mxu0 %v2951
    %3786 = vmatpush1.bf16.msra.mxu0 %v2950
    %3787 = vmatprep.subr.bf16.mxu0 %v2959
    %3788 = vmatpush1.bf16.msra.mxu0 %v2958
    %3789 = vmatprep.subr.bf16.mxu0 %v2967
    %3790 = vmatpush1.bf16.msra.mxu0 %v2966
    %3791 = vmatprep.subr.bf16.mxu0 %v2975
    %3792 = vmatpush1.bf16.msra.mxu0 %v2974
    %3793 = vmatprep.subr.bf16.mxu0 %v2983
    %3794 = vmatpush1.bf16.msra.mxu0 %v2982
    %3795 = vmatprep.subr.bf16.mxu0 %v2991
    %3796 = vmatpush1.bf16.msra.mxu0 %v2990
    %3797 = vmatprep.subr.bf16.mxu0 %v2999
    %3798 = vmatpush1.bf16.msra.mxu0 %v2998
    %3799 = vmatprep.mubr.bf16.mxu0 %v1293
    %3800 = vmatmul.mubr.bf16.gmra.mrb[0].mxu0 %v1292
    %v3801 = vpop.f32.mrb[0].mxu0
    %v3802 = vadd.f32 %v1695, %v3801
    %v3803 = vpop.f32.mrb[0].mxu0
    %v3804 = vadd.f32 %v1699, %v3803
    %v3805 = vpop.f32.mrb[0].mxu0
    %v3806 = vpop.f32.mrb[0].mxu0
    %3807 = vdwg.mxu0
    %3808 = vmatprep.subr.bf16.mxu0 %v3007
    %3809 = vmatpush1.bf16.msra.mxu0 %v3006
    %3810 = vmatprep.subr.bf16.mxu0 %v3015
    %3811 = vmatpush1.bf16.msra.mxu0 %v3014
    %3812 = vmatprep.subr.bf16.mxu0 %v3023
    %3813 = vmatpush1.bf16.msra.mxu0 %v3022
    %3814 = vmatprep.subr.bf16.mxu0 %v3031
    %3815 = vmatpush1.bf16.msra.mxu0 %v3030
    %3816 = vmatprep.subr.bf16.mxu0 %v3039
    %3817 = vmatpush1.bf16.msra.mxu0 %v3038
    %3818 = vmatprep.subr.bf16.mxu0 %v3047
    %3819 = vmatpush1.bf16.msra.mxu0 %v3046
    %3820 = vmatprep.subr.bf16.mxu0 %v3055
    %3821 = vmatpush1.bf16.msra.mxu0 %v3054
    %3822 = vmatprep.subr.bf16.mxu0 %v3063
    %3823 = vmatpush1.bf16.msra.mxu0 %v3062
    %3824 = vmatprep.subr.bf16.mxu0 %v3071
    %3825 = vmatpush1.bf16.msra.mxu0 %v3070
    %3826 = vmatprep.subr.bf16.mxu0 %v3079
    %3827 = vmatpush1.bf16.msra.mxu0 %v3078
    %3828 = vmatprep.subr.bf16.mxu0 %v3087
    %3829 = vmatpush1.bf16.msra.mxu0 %v3086
    %3830 = vmatprep.subr.bf16.mxu0 %v3095
    %3831 = vmatpush1.bf16.msra.mxu0 %v3094
    %3832 = vmatprep.subr.bf16.mxu0 %v3103
    %3833 = vmatpush1.bf16.msra.mxu0 %v3102
    %3834 = vmatprep.subr.bf16.mxu0 %v3111
    %3835 = vmatpush1.bf16.msra.mxu0 %v3110
    %3836 = vmatprep.subr.bf16.mxu0 %v3119
    %3837 = vmatpush1.bf16.msra.mxu0 %v3118
    %3838 = vmatprep.subr.bf16.mxu0 %v3127
    %3839 = vmatpush1.bf16.msra.mxu0 %v3126
    %3840 = vmatprep.mubr.bf16.mxu0 %v1295
    %3841 = vmatmul.mubr.bf16.gmra.mrb[0].mxu0 %v1294
    %v3842 = vpop.f32.mrb[0].mxu0
    %v3843 = vadd.f32 %v3802, %v3842
    %v3844 = vpop.f32.mrb[0].mxu0
    %v3845 = vadd.f32 %v3804, %v3844
    %v3846 = vpop.f32.mrb[0].mxu0
    %v3847 = vpop.f32.mrb[0].mxu0
    %3848 = vdwg.mxu0
    %3849 = vmatprep.subr.bf16.mxu0 %v3135
    %3850 = vmatpush1.bf16.msra.mxu0 %v3134
    %3851 = vmatprep.subr.bf16.mxu0 %v3143
    %3852 = vmatpush1.bf16.msra.mxu0 %v3142
    %3853 = vmatprep.subr.bf16.mxu0 %v3151
    %3854 = vmatpush1.bf16.msra.mxu0 %v3150
    %3855 = vmatprep.subr.bf16.mxu0 %v3159
    %3856 = vmatpush1.bf16.msra.mxu0 %v3158
    %3857 = vmatprep.subr.bf16.mxu0 %v3167
    %3858 = vmatpush1.bf16.msra.mxu0 %v3166
    %3859 = vmatprep.subr.bf16.mxu0 %v3175
    %3860 = vmatpush1.bf16.msra.mxu0 %v3174
    %3861 = vmatprep.subr.bf16.mxu0 %v3183
    %3862 = vmatpush1.bf16.msra.mxu0 %v3182
    %3863 = vmatprep.subr.bf16.mxu0 %v3191
    %3864 = vmatpush1.bf16.msra.mxu0 %v3190
    %3865 = vmatprep.subr.bf16.mxu0 %v3199
    %3866 = vmatpush1.bf16.msra.mxu0 %v3198
    %3867 = vmatprep.subr.bf16.mxu0 %v3207
    %3868 = vmatpush1.bf16.msra.mxu0 %v3206
    %3869 = vmatprep.subr.bf16.mxu0 %v3215
    %3870 = vmatpush1.bf16.msra.mxu0 %v3214
    %3871 = vmatprep.subr.bf16.mxu0 %v3223
    %3872 = vmatpush1.bf16.msra.mxu0 %v3222
    %3873 = vmatprep.subr.bf16.mxu0 %v3231
    %3874 = vmatpush1.bf16.msra.mxu0 %v3230
    %3875 = vmatprep.subr.bf16.mxu0 %v3239
    %3876 = vmatpush1.bf16.msra.mxu0 %v3238
    %3877 = vmatprep.subr.bf16.mxu0 %v3247
    %3878 = vmatpush1.bf16.msra.mxu0 %v3246
    %3879 = vmatprep.subr.bf16.mxu0 %v3255
    %3880 = vmatpush1.bf16.msra.mxu0 %v3254
    %3881 = vmatprep.mubr.bf16.mxu0 %v1297
    %3882 = vmatmul.mubr.bf16.gmra.mrb[0].mxu0 %v1296
    %v3883 = vpop.f32.mrb[0].mxu0
    %v3884 = vadd.f32 %v3843, %v3883
    %v3885 = vpop.f32.mrb[0].mxu0
    %v3886 = vadd.f32 %v3845, %v3885
    %v3887 = vpop.f32.mrb[0].mxu0
    %v3888 = vpop.f32.mrb[0].mxu0
    %3889 = vdwg.mxu0
    %3890 = vmatprep.subr.bf16.mxu0 %v2881
    %3891 = vmatpush1.bf16.msra.mxu0 %v2880
    %3892 = vmatprep.subr.bf16.mxu0 %v2889
    %3893 = vmatpush1.bf16.msra.mxu0 %v2888
    %3894 = vmatprep.subr.bf16.mxu0 %v2897
    %3895 = vmatpush1.bf16.msra.mxu0 %v2896
    %3896 = vmatprep.subr.bf16.mxu0 %v2905
    %3897 = vmatpush1.bf16.msra.mxu0 %v2904
    %3898 = vmatprep.subr.bf16.mxu0 %v2913
    %3899 = vmatpush1.bf16.msra.mxu0 %v2912
    %3900 = vmatprep.subr.bf16.mxu0 %v2921
    %3901 = vmatpush1.bf16.msra.mxu0 %v2920
    %3902 = vmatprep.subr.bf16.mxu0 %v2929
    %3903 = vmatpush1.bf16.msra.mxu0 %v2928
    %3904 = vmatprep.subr.bf16.mxu0 %v2937
    %3905 = vmatpush1.bf16.msra.mxu0 %v2936
    %3906 = vmatprep.subr.bf16.mxu0 %v2945
    %3907 = vmatpush1.bf16.msra.mxu0 %v2944
    %3908 = vmatprep.subr.bf16.mxu0 %v2953
    %3909 = vmatpush1.bf16.msra.mxu0 %v2952
    %3910 = vmatprep.subr.bf16.mxu0 %v2961
    %3911 = vmatpush1.bf16.msra.mxu0 %v2960
    %3912 = vmatprep.subr.bf16.mxu0 %v2969
    %3913 = vmatpush1.bf16.msra.mxu0 %v2968
    %3914 = vmatprep.subr.bf16.mxu0 %v2977
    %3915 = vmatpush1.bf16.msra.mxu0 %v2976
    %3916 = vmatprep.subr.bf16.mxu0 %v2985
    %3917 = vmatpush1.bf16.msra.mxu0 %v2984
    %3918 = vmatprep.subr.bf16.mxu0 %v2993
    %3919 = vmatpush1.bf16.msra.mxu0 %v2992
    %3920 = vmatprep.subr.bf16.mxu0 %v3001
    %3921 = vmatpush1.bf16.msra.mxu0 %v3000
    %3922 = vmatprep.mubr.bf16.mxu0 %v1293
    %3923 = vmatmul.mubr.bf16.gmra.mrb[0].mxu0 %v1292
    %v3924 = vpop.f32.mrb[0].mxu0
    %v3925 = vadd.f32 %v1703, %v3924
    %v3926 = vpop.f32.mrb[0].mxu0
    %v3927 = vadd.f32 %v1707, %v3926
    %v3928 = vpop.f32.mrb[0].mxu0
    %v3929 = vpop.f32.mrb[0].mxu0
    %3930 = vdwg.mxu0
    %3931 = vmatprep.subr.bf16.mxu0 %v3009
    %3932 = vmatpush1.bf16.msra.mxu0 %v3008
    %3933 = vmatprep.subr.bf16.mxu0 %v3017
    %3934 = vmatpush1.bf16.msra.mxu0 %v3016
    %3935 = vmatprep.subr.bf16.mxu0 %v3025
    %3936 = vmatpush1.bf16.msra.mxu0 %v3024
    %3937 = vmatprep.subr.bf16.mxu0 %v3033
    %3938 = vmatpush1.bf16.msra.mxu0 %v3032
    %3939 = vmatprep.subr.bf16.mxu0 %v3041
    %3940 = vmatpush1.bf16.msra.mxu0 %v3040
    %3941 = vmatprep.subr.bf16.mxu0 %v3049
    %3942 = vmatpush1.bf16.msra.mxu0 %v3048
    %3943 = vmatprep.subr.bf16.mxu0 %v3057
    %3944 = vmatpush1.bf16.msra.mxu0 %v3056
    %3945 = vmatprep.subr.bf16.mxu0 %v3065
    %3946 = vmatpush1.bf16.msra.mxu0 %v3064
    %3947 = vmatprep.subr.bf16.mxu0 %v3073
    %3948 = vmatpush1.bf16.msra.mxu0 %v3072
    %3949 = vmatprep.subr.bf16.mxu0 %v3081
    %3950 = vmatpush1.bf16.msra.mxu0 %v3080
    %3951 = vmatprep.subr.bf16.mxu0 %v3089
    %3952 = vmatpush1.bf16.msra.mxu0 %v3088
    %3953 = vmatprep.subr.bf16.mxu0 %v3097
    %3954 = vmatpush1.bf16.msra.mxu0 %v3096
    %3955 = vmatprep.subr.bf16.mxu0 %v3105
    %3956 = vmatpush1.bf16.msra.mxu0 %v3104
    %3957 = vmatprep.subr.bf16.mxu0 %v3113
    %3958 = vmatpush1.bf16.msra.mxu0 %v3112
    %3959 = vmatprep.subr.bf16.mxu0 %v3121
    %3960 = vmatpush1.bf16.msra.mxu0 %v3120
    %3961 = vmatprep.subr.bf16.mxu0 %v3129
    %3962 = vmatpush1.bf16.msra.mxu0 %v3128
    %3963 = vmatprep.mubr.bf16.mxu0 %v1295
    %3964 = vmatmul.mubr.bf16.gmra.mrb[0].mxu0 %v1294
    %v3965 = vpop.f32.mrb[0].mxu0
    %v3966 = vadd.f32 %v3925, %v3965
    %v3967 = vpop.f32.mrb[0].mxu0
    %v3968 = vadd.f32 %v3927, %v3967
    %v3969 = vpop.f32.mrb[0].mxu0
    %v3970 = vpop.f32.mrb[0].mxu0
    %3971 = vdwg.mxu0
    %3972 = vmatprep.subr.bf16.mxu0 %v3137
    %3973 = vmatpush1.bf16.msra.mxu0 %v3136
    %3974 = vmatprep.subr.bf16.mxu0 %v3145
    %3975 = vmatpush1.bf16.msra.mxu0 %v3144
    %3976 = vmatprep.subr.bf16.mxu0 %v3153
    %3977 = vmatpush1.bf16.msra.mxu0 %v3152
    %3978 = vmatprep.subr.bf16.mxu0 %v3161
    %3979 = vmatpush1.bf16.msra.mxu0 %v3160
    %3980 = vmatprep.subr.bf16.mxu0 %v3169
    %3981 = vmatpush1.bf16.msra.mxu0 %v3168
    %3982 = vmatprep.subr.bf16.mxu0 %v3177
    %3983 = vmatpush1.bf16.msra.mxu0 %v3176
    %3984 = vmatprep.subr.bf16.mxu0 %v3185
    %3985 = vmatpush1.bf16.msra.mxu0 %v3184
    %3986 = vmatprep.subr.bf16.mxu0 %v3193
    %3987 = vmatpush1.bf16.msra.mxu0 %v3192
    %3988 = vmatprep.subr.bf16.mxu0 %v3201
    %3989 = vmatpush1.bf16.msra.mxu0 %v3200
    %3990 = vmatprep.subr.bf16.mxu0 %v3209
    %3991 = vmatpush1.bf16.msra.mxu0 %v3208
    %3992 = vmatprep.subr.bf16.mxu0 %v3217
    %3993 = vmatpush1.bf16.msra.mxu0 %v3216
    %3994 = vmatprep.subr.bf16.mxu0 %v3225
    %3995 = vmatpush1.bf16.msra.mxu0 %v3224
    %3996 = vmatprep.subr.bf16.mxu0 %v3233
    %3997 = vmatpush1.bf16.msra.mxu0 %v3232
    %3998 = vmatprep.subr.bf16.mxu0 %v3241
    %3999 = vmatpush1.bf16.msra.mxu0 %v3240
    %4000 = vmatprep.subr.bf16.mxu0 %v3249
    %4001 = vmatpush1.bf16.msra.mxu0 %v3248
    %4002 = vmatprep.subr.bf16.mxu0 %v3257
    %4003 = vmatpush1.bf16.msra.mxu0 %v3256
    %4004 = vmatprep.mubr.bf16.mxu0 %v1297
    %4005 = vmatmul.mubr.bf16.gmra.mrb[0].mxu0 %v1296
    %v4006 = vpop.f32.mrb[0].mxu0
    %v4007 = vadd.f32 %v3966, %v4006
    %v4008 = vpop.f32.mrb[0].mxu0
    %v4009 = vadd.f32 %v3968, %v4008
    %v4010 = vpop.f32.mrb[0].mxu0
    %v4011 = vpop.f32.mrb[0].mxu0
    %4012 = vdwg.mxu0
    %4013 = vmatprep.subr.bf16.mxu0 %v2883
    %4014 = vmatpush1.bf16.msra.mxu0 %v2882
    %4015 = vmatprep.subr.bf16.mxu0 %v2891
    %4016 = vmatpush1.bf16.msra.mxu0 %v2890
    %4017 = vmatprep.subr.bf16.mxu0 %v2899
    %4018 = vmatpush1.bf16.msra.mxu0 %v2898
    %4019 = vmatprep.subr.bf16.mxu0 %v2907
    %4020 = vmatpush1.bf16.msra.mxu0 %v2906
    %4021 = vmatprep.subr.bf16.mxu0 %v2915
    %4022 = vmatpush1.bf16.msra.mxu0 %v2914
    %4023 = vmatprep.subr.bf16.mxu0 %v2923
    %4024 = vmatpush1.bf16.msra.mxu0 %v2922
    %4025 = vmatprep.subr.bf16.mxu0 %v2931
    %4026 = vmatpush1.bf16.msra.mxu0 %v2930
    %4027 = vmatprep.subr.bf16.mxu0 %v2939
    %4028 = vmatpush1.bf16.msra.mxu0 %v2938
    %4029 = vmatprep.subr.bf16.mxu0 %v2947
    %4030 = vmatpush1.bf16.msra.mxu0 %v2946
    %4031 = vmatprep.subr.bf16.mxu0 %v2955
    %4032 = vmatpush1.bf16.msra.mxu0 %v2954
    %4033 = vmatprep.subr.bf16.mxu0 %v2963
    %4034 = vmatpush1.bf16.msra.mxu0 %v2962
    %4035 = vmatprep.subr.bf16.mxu0 %v2971
    %4036 = vmatpush1.bf16.msra.mxu0 %v2970
    %4037 = vmatprep.subr.bf16.mxu0 %v2979
    %4038 = vmatpush1.bf16.msra.mxu0 %v2978
    %4039 = vmatprep.subr.bf16.mxu0 %v2987
    %4040 = vmatpush1.bf16.msra.mxu0 %v2986
    %4041 = vmatprep.subr.bf16.mxu0 %v2995
    %4042 = vmatpush1.bf16.msra.mxu0 %v2994
    %4043 = vmatprep.subr.bf16.mxu0 %v3003
    %4044 = vmatpush1.bf16.msra.mxu0 %v3002
    %4045 = vmatprep.mubr.bf16.mxu0 %v1293
    %4046 = vmatmul.mubr.bf16.gmra.mrb[0].mxu0 %v1292
    %v4047 = vpop.f32.mrb[0].mxu0
    %v4048 = vadd.f32 %v1711, %v4047
    %v4049 = vpop.f32.mrb[0].mxu0
    %v4050 = vadd.f32 %v1715, %v4049
    %v4051 = vpop.f32.mrb[0].mxu0
    %v4052 = vpop.f32.mrb[0].mxu0
    %4053 = vdwg.mxu0
    %4054 = vmatprep.subr.bf16.mxu0 %v3011
    %4055 = vmatpush1.bf16.msra.mxu0 %v3010
    %4056 = vmatprep.subr.bf16.mxu0 %v3019
    %4057 = vmatpush1.bf16.msra.mxu0 %v3018
    %4058 = vmatprep.subr.bf16.mxu0 %v3027
    %4059 = vmatpush1.bf16.msra.mxu0 %v3026
    %4060 = vmatprep.subr.bf16.mxu0 %v3035
    %4061 = vmatpush1.bf16.msra.mxu0 %v3034
    %4062 = vmatprep.subr.bf16.mxu0 %v3043
    %4063 = vmatpush1.bf16.msra.mxu0 %v3042
    %4064 = vmatprep.subr.bf16.mxu0 %v3051
    %4065 = vmatpush1.bf16.msra.mxu0 %v3050
    %4066 = vmatprep.subr.bf16.mxu0 %v3059
    %4067 = vmatpush1.bf16.msra.mxu0 %v3058
    %4068 = vmatprep.subr.bf16.mxu0 %v3067
    %4069 = vmatpush1.bf16.msra.mxu0 %v3066
    %4070 = vmatprep.subr.bf16.mxu0 %v3075
    %4071 = vmatpush1.bf16.msra.mxu0 %v3074
    %4072 = vmatprep.subr.bf16.mxu0 %v3083
    %4073 = vmatpush1.bf16.msra.mxu0 %v3082
    %4074 = vmatprep.subr.bf16.mxu0 %v3091
    %4075 = vmatpush1.bf16.msra.mxu0 %v3090
    %4076 = vmatprep.subr.bf16.mxu0 %v3099
    %4077 = vmatpush1.bf16.msra.mxu0 %v3098
    %4078 = vmatprep.subr.bf16.mxu0 %v3107
    %4079 = vmatpush1.bf16.msra.mxu0 %v3106
    %4080 = vmatprep.subr.bf16.mxu0 %v3115
    %4081 = vmatpush1.bf16.msra.mxu0 %v3114
    %4082 = vmatprep.subr.bf16.mxu0 %v3123
    %4083 = vmatpush1.bf16.msra.mxu0 %v3122
    %4084 = vmatprep.subr.bf16.mxu0 %v3131
    %4085 = vmatpush1.bf16.msra.mxu0 %v3130
    %4086 = vmatprep.mubr.bf16.mxu0 %v1295
    %4087 = vmatmul.mubr.bf16.gmra.mrb[0].mxu0 %v1294
    %v4088 = vpop.f32.mrb[0].mxu0
    %v4089 = vadd.f32 %v4048, %v4088
    %v4090 = vpop.f32.mrb[0].mxu0
    %v4091 = vadd.f32 %v4050, %v4090
    %v4092 = vpop.f32.mrb[0].mxu0
    %v4093 = vpop.f32.mrb[0].mxu0
    %4094 = vdwg.mxu0
    %4095 = vmatprep.subr.bf16.mxu0 %v3139
    %4096 = vmatpush1.bf16.msra.mxu0 %v3138
    %4097 = vmatprep.subr.bf16.mxu0 %v3147
    %4098 = vmatpush1.bf16.msra.mxu0 %v3146
    %4099 = vmatprep.subr.bf16.mxu0 %v3155
    %4100 = vmatpush1.bf16.msra.mxu0 %v3154
    %4101 = vmatprep.subr.bf16.mxu0 %v3163
    %4102 = vmatpush1.bf16.msra.mxu0 %v3162
    %4103 = vmatprep.subr.bf16.mxu0 %v3171
    %4104 = vmatpush1.bf16.msra.mxu0 %v3170
    %4105 = vmatprep.subr.bf16.mxu0 %v3179
    %4106 = vmatpush1.bf16.msra.mxu0 %v3178
    %4107 = vmatprep.subr.bf16.mxu0 %v3187
    %4108 = vmatpush1.bf16.msra.mxu0 %v3186
    %4109 = vmatprep.subr.bf16.mxu0 %v3195
    %4110 = vmatpush1.bf16.msra.mxu0 %v3194
    %4111 = vmatprep.subr.bf16.mxu0 %v3203
    %4112 = vmatpush1.bf16.msra.mxu0 %v3202
    %4113 = vmatprep.subr.bf16.mxu0 %v3211
    %4114 = vmatpush1.bf16.msra.mxu0 %v3210
    %4115 = vmatprep.subr.bf16.mxu0 %v3219
    %4116 = vmatpush1.bf16.msra.mxu0 %v3218
    %4117 = vmatprep.subr.bf16.mxu0 %v3227
    %4118 = vmatpush1.bf16.msra.mxu0 %v3226
    %4119 = vmatprep.subr.bf16.mxu0 %v3235
    %4120 = vmatpush1.bf16.msra.mxu0 %v3234
    %4121 = vmatprep.subr.bf16.mxu0 %v3243
    %4122 = vmatpush1.bf16.msra.mxu0 %v3242
    %4123 = vmatprep.subr.bf16.mxu0 %v3251
    %4124 = vmatpush1.bf16.msra.mxu0 %v3250
    %4125 = vmatprep.subr.bf16.mxu0 %v3259
    %4126 = vmatpush1.bf16.msra.mxu0 %v3258
    %4127 = vmatprep.mubr.bf16.mxu0 %v1297
    %4128 = vmatmul.mubr.bf16.gmra.mrb[0].mxu0 %v1296
    %v4129 = vpop.f32.mrb[0].mxu0
    %v4130 = vadd.f32 %v4089, %v4129
    %v4131 = vpop.f32.mrb[0].mxu0
    %v4132 = vadd.f32 %v4091, %v4131
    %v4133 = vpop.f32.mrb[0].mxu0
    %v4134 = vpop.f32.mrb[0].mxu0
    %4135 = vdwg.mxu0
    %v4136 = vmax.f32 %v3761, 0.0
    %v4137 = vmax.f32 %v3763, 0.0
    %v4138 = vmax.f32 %v3884, 0.0
    %v4139 = vmax.f32 %v3886, 0.0
    %v4140 = vmax.f32 %v4007, 0.0
    %v4141 = vmax.f32 %v4009, 0.0
    %v4142 = vmax.f32 %v4130, 0.0
    %v4143 = vmax.f32 %v4132, 0.0
    %v4144 = vpack.c.bf16 %v4136, %v4136
    %v4145 = vpack.c.bf16 %v4137, %v4137
    %v4146 = vpack.c.bf16 %v4138, %v4138
    %v4147 = vpack.c.bf16 %v4139, %v4139
    %v4148 = vpack.c.bf16 %v4140, %v4140
    %v4149 = vpack.c.bf16 %v4141, %v4141
    %v4150 = vld [vmem:[#allocation12] sm:$0xff]
    %v4151 = vld [vmem:[#allocation12 + $0x8] sm:$0xff]
    %v4152 = vld [vmem:[#allocation12 + $0x10] sm:$0xff]
    %v4153 = vld [vmem:[#allocation12 + $0x18] sm:$0xff]
    %v4154 = vld [vmem:[#allocation12 + $0x20] sm:$0xff]
    %v4155 = vld [vmem:[#allocation12 + $0x28] sm:$0xff]
    %v4156 = vld [vmem:[#allocation12 + $0x30] sm:$0xff]
    %v4157 = vld [vmem:[#allocation12 + $0x38] sm:$0xff]
    %v4158 = vld [vmem:[#allocation12 + $0x40] sm:$0xff]
    %v4159 = vld [vmem:[#allocation12 + $0x48] sm:$0xff]
    %v4160 = vld [vmem:[#allocation12 + $0x50] sm:$0xff]
    %v4161 = vld [vmem:[#allocation12 + $0x58] sm:$0xff]
    %v4162 = vld [vmem:[#allocation12 + $0x60] sm:$0xff]
    %v4163 = vld [vmem:[#allocation12 + $0x68] sm:$0xff]
    %v4164 = vld [vmem:[#allocation12 + $0x70] sm:$0xff]
    %v4165 = vld [vmem:[#allocation12 + $0x78] sm:$0xff]
    %v4166 = vld [vmem:[#allocation12 + $0x80] sm:$0xff]
    %v4167 = vld [vmem:[#allocation12 + $0x88] sm:$0xff]
    %v4168 = vld [vmem:[#allocation12 + $0x90] sm:$0xff]
    %v4169 = vld [vmem:[#allocation12 + $0x98] sm:$0xff]
    %v4170 = vld [vmem:[#allocation12 + $0xa0] sm:$0xff]
    %v4171 = vld [vmem:[#allocation12 + $0xa8] sm:$0xff]
    %v4172 = vld [vmem:[#allocation12 + $0xb0] sm:$0xff]
    %v4173 = vld [vmem:[#allocation12 + $0xb8] sm:$0xff]
    %v4174 = vld [vmem:[#allocation12 + $0xc0] sm:$0xff]
    %v4175 = vld [vmem:[#allocation12 + $0xc8] sm:$0xff]
    %v4176 = vld [vmem:[#allocation12 + $0xd0] sm:$0xff]
    %v4177 = vld [vmem:[#allocation12 + $0xd8] sm:$0xff]
    %v4178 = vld [vmem:[#allocation12 + $0xe0] sm:$0xff]
    %v4179 = vld [vmem:[#allocation12 + $0xe8] sm:$0xff]
    %v4180 = vld [vmem:[#allocation12 + $0xf0] sm:$0xff]
    %v4181 = vld [vmem:[#allocation12 + $0xf8] sm:$0xff]
    %v4182 = vld [vmem:[#allocation12 + $0x100] sm:$0xff]
    %v4183 = vld [vmem:[#allocation12 + $0x108] sm:$0xff]
    %v4184 = vld [vmem:[#allocation12 + $0x110] sm:$0xff]
    %v4185 = vld [vmem:[#allocation12 + $0x118] sm:$0xff]
    %v4186 = vld [vmem:[#allocation12 + $0x120] sm:$0xff]
    %v4187 = vld [vmem:[#allocation12 + $0x128] sm:$0xff]
    %v4188 = vld [vmem:[#allocation12 + $0x130] sm:$0xff]
    %v4189 = vld [vmem:[#allocation12 + $0x138] sm:$0xff]
    %v4190 = vld [vmem:[#allocation12 + $0x140] sm:$0xff]
    %v4191 = vld [vmem:[#allocation12 + $0x148] sm:$0xff]
    %v4192 = vld [vmem:[#allocation12 + $0x150] sm:$0xff]
    %v4193 = vld [vmem:[#allocation12 + $0x158] sm:$0xff]
    %v4194 = vld [vmem:[#allocation12 + $0x160] sm:$0xff]
    %v4195 = vld [vmem:[#allocation12 + $0x168] sm:$0xff]
    %v4196 = vld [vmem:[#allocation12 + $0x170] sm:$0xff]
    %v4197 = vld [vmem:[#allocation12 + $0x178] sm:$0xff]
    %v4198 = vld [vmem:[#allocation12 + $0x180] sm:$0xff]
    %v4199 = vld [vmem:[#allocation12 + $0x188] sm:$0xff]
    %v4200 = vld [vmem:[#allocation12 + $0x190] sm:$0xff]
    %v4201 = vld [vmem:[#allocation12 + $0x198] sm:$0xff]
    %v4202 = vld [vmem:[#allocation12 + $0x1a0] sm:$0xff]
    %v4203 = vld [vmem:[#allocation12 + $0x1a8] sm:$0xff]
    %v4204 = vld [vmem:[#allocation12 + $0x1b0] sm:$0xff]
    %v4205 = vld [vmem:[#allocation12 + $0x1b8] sm:$0xff]
    %v4206 = vld [vmem:[#allocation12 + $0x1c0] sm:$0xff]
    %v4207 = vld [vmem:[#allocation12 + $0x1c8] sm:$0xff]
    %v4208 = vld [vmem:[#allocation12 + $0x1d0] sm:$0xff]
    %v4209 = vld [vmem:[#allocation12 + $0x1d8] sm:$0xff]
    %v4210 = vld [vmem:[#allocation12 + $0x1e0] sm:$0xff]
    %v4211 = vld [vmem:[#allocation12 + $0x1e8] sm:$0xff]
    %v4212 = vld [vmem:[#allocation12 + $0x1f0] sm:$0xff]
    %v4213 = vld [vmem:[#allocation12 + $0x1f8] sm:$0xff]
    %v4214 = vld [vmem:[#allocation12 + $0x200] sm:$0xff]
    %v4215 = vld [vmem:[#allocation12 + $0x208] sm:$0xff]
    %v4216 = vld [vmem:[#allocation12 + $0x210] sm:$0xff]
    %v4217 = vld [vmem:[#allocation12 + $0x218] sm:$0xff]
    %v4218 = vld [vmem:[#allocation12 + $0x220] sm:$0xff]
    %v4219 = vld [vmem:[#allocation12 + $0x228] sm:$0xff]
    %v4220 = vld [vmem:[#allocation12 + $0x230] sm:$0xff]
    %v4221 = vld [vmem:[#allocation12 + $0x238] sm:$0xff]
    %v4222 = vld [vmem:[#allocation12 + $0x240] sm:$0xff]
    %v4223 = vld [vmem:[#allocation12 + $0x248] sm:$0xff]
    %v4224 = vld [vmem:[#allocation12 + $0x250] sm:$0xff]
    %v4225 = vld [vmem:[#allocation12 + $0x258] sm:$0xff]
    %v4226 = vld [vmem:[#allocation12 + $0x260] sm:$0xff]
    %v4227 = vld [vmem:[#allocation12 + $0x268] sm:$0xff]
    %v4228 = vld [vmem:[#allocation12 + $0x270] sm:$0xff]
    %v4229 = vld [vmem:[#allocation12 + $0x278] sm:$0xff]
    %v4230 = vld [vmem:[#allocation12 + $0x280] sm:$0xff]
    %v4231 = vld [vmem:[#allocation12 + $0x288] sm:$0xff]
    %v4232 = vld [vmem:[#allocation12 + $0x290] sm:$0xff]
    %v4233 = vld [vmem:[#allocation12 + $0x298] sm:$0xff]
    %v4234 = vld [vmem:[#allocation12 + $0x2a0] sm:$0xff]
    %v4235 = vld [vmem:[#allocation12 + $0x2a8] sm:$0xff]
    %v4236 = vld [vmem:[#allocation12 + $0x2b0] sm:$0xff]
    %v4237 = vld [vmem:[#allocation12 + $0x2b8] sm:$0xff]
    %v4238 = vld [vmem:[#allocation12 + $0x2c0] sm:$0xff]
    %v4239 = vld [vmem:[#allocation12 + $0x2c8] sm:$0xff]
    %v4240 = vld [vmem:[#allocation12 + $0x2d0] sm:$0xff]
    %v4241 = vld [vmem:[#allocation12 + $0x2d8] sm:$0xff]
    %v4242 = vld [vmem:[#allocation12 + $0x2e0] sm:$0xff]
    %v4243 = vld [vmem:[#allocation12 + $0x2e8] sm:$0xff]
    %v4244 = vld [vmem:[#allocation12 + $0x2f0] sm:$0xff]
    %v4245 = vld [vmem:[#allocation12 + $0x2f8] sm:$0xff]
    %v4246 = vld [vmem:[#allocation12 + $0x300] sm:$0xff]
    %v4247 = vld [vmem:[#allocation12 + $0x308] sm:$0xff]
    %v4248 = vld [vmem:[#allocation12 + $0x310] sm:$0xff]
    %v4249 = vld [vmem:[#allocation12 + $0x318] sm:$0xff]
    %v4250 = vld [vmem:[#allocation12 + $0x320] sm:$0xff]
    %v4251 = vld [vmem:[#allocation12 + $0x328] sm:$0xff]
    %v4252 = vld [vmem:[#allocation12 + $0x330] sm:$0xff]
    %v4253 = vld [vmem:[#allocation12 + $0x338] sm:$0xff]
    %v4254 = vld [vmem:[#allocation12 + $0x340] sm:$0xff]
    %v4255 = vld [vmem:[#allocation12 + $0x348] sm:$0xff]
    %v4256 = vld [vmem:[#allocation12 + $0x350] sm:$0xff]
    %v4257 = vld [vmem:[#allocation12 + $0x358] sm:$0xff]
    %v4258 = vld [vmem:[#allocation12 + $0x360] sm:$0xff]
    %v4259 = vld [vmem:[#allocation12 + $0x368] sm:$0xff]
    %v4260 = vld [vmem:[#allocation12 + $0x370] sm:$0xff]
    %v4261 = vld [vmem:[#allocation12 + $0x378] sm:$0xff]
    %v4262 = vld [vmem:[#allocation12 + $0x380] sm:$0xff]
    %v4263 = vld [vmem:[#allocation12 + $0x388] sm:$0xff]
    %v4264 = vld [vmem:[#allocation12 + $0x390] sm:$0xff]
    %v4265 = vld [vmem:[#allocation12 + $0x398] sm:$0xff]
    %v4266 = vld [vmem:[#allocation12 + $0x3a0] sm:$0xff]
    %v4267 = vld [vmem:[#allocation12 + $0x3a8] sm:$0xff]
    %v4268 = vld [vmem:[#allocation12 + $0x3b0] sm:$0xff]
    %v4269 = vld [vmem:[#allocation12 + $0x3b8] sm:$0xff]
    %v4270 = vld [vmem:[#allocation12 + $0x3c0] sm:$0xff]
    %v4271 = vld [vmem:[#allocation12 + $0x3c8] sm:$0xff]
    %v4272 = vld [vmem:[#allocation12 + $0x3d0] sm:$0xff]
    %v4273 = vld [vmem:[#allocation12 + $0x3d8] sm:$0xff]
    %v4274 = vld [vmem:[#allocation12 + $0x3e0] sm:$0xff]
    %v4275 = vld [vmem:[#allocation12 + $0x3e8] sm:$0xff]
    %v4276 = vld [vmem:[#allocation12 + $0x3f0] sm:$0xff]
    %v4277 = vld [vmem:[#allocation12 + $0x3f8] sm:$0xff]
    %v4278 = vld [vmem:[#allocation12 + $0x400] sm:$0xff]
    %v4279 = vld [vmem:[#allocation12 + $0x408] sm:$0xff]
    %v4280 = vld [vmem:[#allocation12 + $0x410] sm:$0xff]
    %v4281 = vld [vmem:[#allocation12 + $0x418] sm:$0xff]
    %v4282 = vld [vmem:[#allocation12 + $0x420] sm:$0xff]
    %v4283 = vld [vmem:[#allocation12 + $0x428] sm:$0xff]
    %v4284 = vld [vmem:[#allocation12 + $0x430] sm:$0xff]
    %v4285 = vld [vmem:[#allocation12 + $0x438] sm:$0xff]
    %v4286 = vld [vmem:[#allocation12 + $0x440] sm:$0xff]
    %v4287 = vld [vmem:[#allocation12 + $0x448] sm:$0xff]
    %v4288 = vld [vmem:[#allocation12 + $0x450] sm:$0xff]
    %v4289 = vld [vmem:[#allocation12 + $0x458] sm:$0xff]
    %v4290 = vld [vmem:[#allocation12 + $0x460] sm:$0xff]
    %v4291 = vld [vmem:[#allocation12 + $0x468] sm:$0xff]
    %v4292 = vld [vmem:[#allocation12 + $0x470] sm:$0xff]
    %v4293 = vld [vmem:[#allocation12 + $0x478] sm:$0xff]
    %v4294 = vld [vmem:[#allocation12 + $0x480] sm:$0xff]
    %v4295 = vld [vmem:[#allocation12 + $0x488] sm:$0xff]
    %v4296 = vld [vmem:[#allocation12 + $0x490] sm:$0xff]
    %v4297 = vld [vmem:[#allocation12 + $0x498] sm:$0xff]
    %v4298 = vld [vmem:[#allocation12 + $0x4a0] sm:$0xff]
    %v4299 = vld [vmem:[#allocation12 + $0x4a8] sm:$0xff]
    %v4300 = vld [vmem:[#allocation12 + $0x4b0] sm:$0xff]
    %v4301 = vld [vmem:[#allocation12 + $0x4b8] sm:$0xff]
    %v4302 = vld [vmem:[#allocation12 + $0x4c0] sm:$0xff]
    %v4303 = vld [vmem:[#allocation12 + $0x4c8] sm:$0xff]
    %v4304 = vld [vmem:[#allocation12 + $0x4d0] sm:$0xff]
    %v4305 = vld [vmem:[#allocation12 + $0x4d8] sm:$0xff]
    %v4306 = vld [vmem:[#allocation12 + $0x4e0] sm:$0xff]
    %v4307 = vld [vmem:[#allocation12 + $0x4e8] sm:$0xff]
    %v4308 = vld [vmem:[#allocation12 + $0x4f0] sm:$0xff]
    %v4309 = vld [vmem:[#allocation12 + $0x4f8] sm:$0xff]
    %v4310 = vld [vmem:[#allocation12 + $0x500] sm:$0xff]
    %v4311 = vld [vmem:[#allocation12 + $0x508] sm:$0xff]
    %v4312 = vld [vmem:[#allocation12 + $0x510] sm:$0xff]
    %v4313 = vld [vmem:[#allocation12 + $0x518] sm:$0xff]
    %v4314 = vld [vmem:[#allocation12 + $0x520] sm:$0xff]
    %v4315 = vld [vmem:[#allocation12 + $0x528] sm:$0xff]
    %v4316 = vld [vmem:[#allocation12 + $0x530] sm:$0xff]
    %v4317 = vld [vmem:[#allocation12 + $0x538] sm:$0xff]
    %v4318 = vld [vmem:[#allocation12 + $0x540] sm:$0xff]
    %v4319 = vld [vmem:[#allocation12 + $0x548] sm:$0xff]
    %v4320 = vld [vmem:[#allocation12 + $0x550] sm:$0xff]
    %v4321 = vld [vmem:[#allocation12 + $0x558] sm:$0xff]
    %v4322 = vld [vmem:[#allocation12 + $0x560] sm:$0xff]
    %v4323 = vld [vmem:[#allocation12 + $0x568] sm:$0xff]
    %v4324 = vld [vmem:[#allocation12 + $0x570] sm:$0xff]
    %v4325 = vld [vmem:[#allocation12 + $0x578] sm:$0xff]
    %v4326 = vld [vmem:[#allocation12 + $0x580] sm:$0xff]
    %v4327 = vld [vmem:[#allocation12 + $0x588] sm:$0xff]
    %v4328 = vld [vmem:[#allocation12 + $0x590] sm:$0xff]
    %v4329 = vld [vmem:[#allocation12 + $0x598] sm:$0xff]
    %v4330 = vld [vmem:[#allocation12 + $0x5a0] sm:$0xff]
    %v4331 = vld [vmem:[#allocation12 + $0x5a8] sm:$0xff]
    %v4332 = vld [vmem:[#allocation12 + $0x5b0] sm:$0xff]
    %v4333 = vld [vmem:[#allocation12 + $0x5b8] sm:$0xff]
    %v4334 = vld [vmem:[#allocation12 + $0x5c0] sm:$0xff]
    %v4335 = vld [vmem:[#allocation12 + $0x5c8] sm:$0xff]
    %v4336 = vld [vmem:[#allocation12 + $0x5d0] sm:$0xff]
    %v4337 = vld [vmem:[#allocation12 + $0x5d8] sm:$0xff]
    %v4338 = vld [vmem:[#allocation12 + $0x5e0] sm:$0xff]
    %v4339 = vld [vmem:[#allocation12 + $0x5e8] sm:$0xff]
    %v4340 = vld [vmem:[#allocation12 + $0x5f0] sm:$0xff]
    %v4341 = vld [vmem:[#allocation12 + $0x5f8] sm:$0xff]
    %v4342 = vld [vmem:[#allocation12 + $0x600] sm:$0xff]
    %v4343 = vld [vmem:[#allocation12 + $0x608] sm:$0xff]
    %v4344 = vld [vmem:[#allocation12 + $0x610] sm:$0xff]
    %v4345 = vld [vmem:[#allocation12 + $0x618] sm:$0xff]
    %v4346 = vld [vmem:[#allocation12 + $0x620] sm:$0xff]
    %v4347 = vld [vmem:[#allocation12 + $0x628] sm:$0xff]
    %v4348 = vld [vmem:[#allocation12 + $0x630] sm:$0xff]
    %v4349 = vld [vmem:[#allocation12 + $0x638] sm:$0xff]
    %v4350 = vld [vmem:[#allocation12 + $0x640] sm:$0xff]
    %v4351 = vld [vmem:[#allocation12 + $0x648] sm:$0xff]
    %v4352 = vld [vmem:[#allocation12 + $0x650] sm:$0xff]
    %v4353 = vld [vmem:[#allocation12 + $0x658] sm:$0xff]
    %v4354 = vld [vmem:[#allocation12 + $0x660] sm:$0xff]
    %v4355 = vld [vmem:[#allocation12 + $0x668] sm:$0xff]
    %v4356 = vld [vmem:[#allocation12 + $0x670] sm:$0xff]
    %v4357 = vld [vmem:[#allocation12 + $0x678] sm:$0xff]
    %v4358 = vld [vmem:[#allocation12 + $0x680] sm:$0xff]
    %v4359 = vld [vmem:[#allocation12 + $0x688] sm:$0xff]
    %v4360 = vld [vmem:[#allocation12 + $0x690] sm:$0xff]
    %v4361 = vld [vmem:[#allocation12 + $0x698] sm:$0xff]
    %v4362 = vld [vmem:[#allocation12 + $0x6a0] sm:$0xff]
    %v4363 = vld [vmem:[#allocation12 + $0x6a8] sm:$0xff]
    %v4364 = vld [vmem:[#allocation12 + $0x6b0] sm:$0xff]
    %v4365 = vld [vmem:[#allocation12 + $0x6b8] sm:$0xff]
    %v4366 = vld [vmem:[#allocation12 + $0x6c0] sm:$0xff]
    %v4367 = vld [vmem:[#allocation12 + $0x6c8] sm:$0xff]
    %v4368 = vld [vmem:[#allocation12 + $0x6d0] sm:$0xff]
    %v4369 = vld [vmem:[#allocation12 + $0x6d8] sm:$0xff]
    %v4370 = vld [vmem:[#allocation12 + $0x6e0] sm:$0xff]
    %v4371 = vld [vmem:[#allocation12 + $0x6e8] sm:$0xff]
    %v4372 = vld [vmem:[#allocation12 + $0x6f0] sm:$0xff]
    %v4373 = vld [vmem:[#allocation12 + $0x6f8] sm:$0xff]
    %v4374 = vld [vmem:[#allocation12 + $0x700] sm:$0xff]
    %v4375 = vld [vmem:[#allocation12 + $0x708] sm:$0xff]
    %v4376 = vld [vmem:[#allocation12 + $0x710] sm:$0xff]
    %v4377 = vld [vmem:[#allocation12 + $0x718] sm:$0xff]
    %v4378 = vld [vmem:[#allocation12 + $0x720] sm:$0xff]
    %v4379 = vld [vmem:[#allocation12 + $0x728] sm:$0xff]
    %v4380 = vld [vmem:[#allocation12 + $0x730] sm:$0xff]
    %v4381 = vld [vmem:[#allocation12 + $0x738] sm:$0xff]
    %v4382 = vld [vmem:[#allocation12 + $0x740] sm:$0xff]
    %v4383 = vld [vmem:[#allocation12 + $0x748] sm:$0xff]
    %v4384 = vld [vmem:[#allocation12 + $0x750] sm:$0xff]
    %v4385 = vld [vmem:[#allocation12 + $0x758] sm:$0xff]
    %v4386 = vld [vmem:[#allocation12 + $0x760] sm:$0xff]
    %v4387 = vld [vmem:[#allocation12 + $0x768] sm:$0xff]
    %v4388 = vld [vmem:[#allocation12 + $0x770] sm:$0xff]
    %v4389 = vld [vmem:[#allocation12 + $0x778] sm:$0xff]
    %v4390 = vld [vmem:[#allocation12 + $0x780] sm:$0xff]
    %v4391 = vld [vmem:[#allocation12 + $0x788] sm:$0xff]
    %v4392 = vld [vmem:[#allocation12 + $0x790] sm:$0xff]
    %v4393 = vld [vmem:[#allocation12 + $0x798] sm:$0xff]
    %v4394 = vld [vmem:[#allocation12 + $0x7a0] sm:$0xff]
    %v4395 = vld [vmem:[#allocation12 + $0x7a8] sm:$0xff]
    %v4396 = vld [vmem:[#allocation12 + $0x7b0] sm:$0xff]
    %v4397 = vld [vmem:[#allocation12 + $0x7b8] sm:$0xff]
    %v4398 = vld [vmem:[#allocation12 + $0x7c0] sm:$0xff]
    %v4399 = vld [vmem:[#allocation12 + $0x7c8] sm:$0xff]
    %v4400 = vld [vmem:[#allocation12 + $0x7d0] sm:$0xff]
    %v4401 = vld [vmem:[#allocation12 + $0x7d8] sm:$0xff]
    %v4402 = vld [vmem:[#allocation12 + $0x7e0] sm:$0xff]
    %v4403 = vld [vmem:[#allocation12 + $0x7e8] sm:$0xff]
    %v4404 = vld [vmem:[#allocation12 + $0x7f0] sm:$0xff]
    %v4405 = vld [vmem:[#allocation12 + $0x7f8] sm:$0xff]
    %v4406 = vld [vmem:[#allocation12 + $0x800] sm:$0xff]
    %v4407 = vld [vmem:[#allocation12 + $0x808] sm:$0xff]
    %v4408 = vld [vmem:[#allocation12 + $0x810] sm:$0xff]
    %v4409 = vld [vmem:[#allocation12 + $0x818] sm:$0xff]
    %v4410 = vld [vmem:[#allocation12 + $0x820] sm:$0xff]
    %v4411 = vld [vmem:[#allocation12 + $0x828] sm:$0xff]
    %v4412 = vld [vmem:[#allocation12 + $0x830] sm:$0xff]
    %v4413 = vld [vmem:[#allocation12 + $0x838] sm:$0xff]
    %v4414 = vld [vmem:[#allocation12 + $0x840] sm:$0xff]
    %v4415 = vld [vmem:[#allocation12 + $0x848] sm:$0xff]
    %v4416 = vld [vmem:[#allocation12 + $0x850] sm:$0xff]
    %v4417 = vld [vmem:[#allocation12 + $0x858] sm:$0xff]
    %v4418 = vld [vmem:[#allocation12 + $0x860] sm:$0xff]
    %v4419 = vld [vmem:[#allocation12 + $0x868] sm:$0xff]
    %v4420 = vld [vmem:[#allocation12 + $0x870] sm:$0xff]
    %v4421 = vld [vmem:[#allocation12 + $0x878] sm:$0xff]
    %v4422 = vld [vmem:[#allocation12 + $0x880] sm:$0xff]
    %v4423 = vld [vmem:[#allocation12 + $0x888] sm:$0xff]
    %v4424 = vld [vmem:[#allocation12 + $0x890] sm:$0xff]
    %v4425 = vld [vmem:[#allocation12 + $0x898] sm:$0xff]
    %v4426 = vld [vmem:[#allocation12 + $0x8a0] sm:$0xff]
    %v4427 = vld [vmem:[#allocation12 + $0x8a8] sm:$0xff]
    %v4428 = vld [vmem:[#allocation12 + $0x8b0] sm:$0xff]
    %v4429 = vld [vmem:[#allocation12 + $0x8b8] sm:$0xff]
    %v4430 = vld [vmem:[#allocation12 + $0x8c0] sm:$0xff]
    %v4431 = vld [vmem:[#allocation12 + $0x8c8] sm:$0xff]
    %v4432 = vld [vmem:[#allocation12 + $0x8d0] sm:$0xff]
    %v4433 = vld [vmem:[#allocation12 + $0x8d8] sm:$0xff]
    %v4434 = vld [vmem:[#allocation12 + $0x8e0] sm:$0xff]
    %v4435 = vld [vmem:[#allocation12 + $0x8e8] sm:$0xff]
    %v4436 = vld [vmem:[#allocation12 + $0x8f0] sm:$0xff]
    %v4437 = vld [vmem:[#allocation12 + $0x8f8] sm:$0xff]
    %v4438 = vld [vmem:[#allocation14] sm:$0x3f]
    %v4440 = vlaneseq
    %v4441 = vshrl.u32 %v4440, 7
    %v4442 = vsub.s32 0, %v4441
    %v4443 = vrot.slane %v4438, %v4442
    %v4444 = vlaneseq
    %v4445 = vshrl.u32 %v4444, 7
    %v4446 = vsub.s32 1, %v4445
    %v4447 = vrot.slane %v4438, %v4446
    %v4448 = vlaneseq
    %v4449 = vshrl.u32 %v4448, 7
    %v4450 = vsub.s32 2, %v4449
    %v4451 = vrot.slane %v4438, %v4450
    %v4452 = vlaneseq
    %v4453 = vshrl.u32 %v4452, 7
    %v4454 = vsub.s32 3, %v4453
    %v4455 = vrot.slane %v4438, %v4454
    %v4456 = vlaneseq
    %v4457 = vshrl.u32 %v4456, 7
    %v4458 = vsub.s32 4, %v4457
    %v4459 = vrot.slane %v4438, %v4458
    %v4460 = vlaneseq
    %v4461 = vshrl.u32 %v4460, 7
    %v4462 = vsub.s32 5, %v4461
    %v4463 = vrot.slane %v4438, %v4462
    %v4758 = vunpack.c.l.b16 %v4150
    %v4759 = vunpack.c.h.b16 %v4150
    %v4760 = vunpack.c.l.b16 %v4151
    %v4761 = vunpack.c.h.b16 %v4151
    %v4762 = vunpack.c.l.b16 %v4152
    %v4763 = vunpack.c.h.b16 %v4152
    %v4764 = vunpack.c.l.b16 %v4153
    %v4765 = vunpack.c.h.b16 %v4153
    %v4766 = vunpack.c.l.b16 %v4154
    %v4767 = vunpack.c.h.b16 %v4154
    %v4768 = vunpack.c.l.b16 %v4155
    %v4769 = vunpack.c.h.b16 %v4155
    %v4770 = vunpack.c.l.b16 %v4156
    %v4771 = vunpack.c.h.b16 %v4156
    %v4772 = vunpack.c.l.b16 %v4157
    %v4773 = vunpack.c.h.b16 %v4157
    %v4774 = vunpack.c.l.b16 %v4158
    %v4775 = vunpack.c.h.b16 %v4158
    %v4776 = vunpack.c.l.b16 %v4159
    %v4777 = vunpack.c.h.b16 %v4159
    %v4778 = vunpack.c.l.b16 %v4160
    %v4779 = vunpack.c.h.b16 %v4160
    %v4780 = vunpack.c.l.b16 %v4161
    %v4781 = vunpack.c.h.b16 %v4161
    %v4782 = vunpack.c.l.b16 %v4162
    %v4783 = vunpack.c.h.b16 %v4162
    %v4784 = vunpack.c.l.b16 %v4163
    %v4785 = vunpack.c.h.b16 %v4163
    %v4786 = vunpack.c.l.b16 %v4164
    %v4787 = vunpack.c.h.b16 %v4164
    %v4788 = vunpack.c.l.b16 %v4165
    %v4789 = vunpack.c.h.b16 %v4165
    %v4790 = vunpack.c.l.b16 %v4166
    %v4791 = vunpack.c.h.b16 %v4166
    %v4792 = vunpack.c.l.b16 %v4167
    %v4793 = vunpack.c.h.b16 %v4167
    %v4794 = vunpack.c.l.b16 %v4168
    %v4795 = vunpack.c.h.b16 %v4168
    %v4796 = vunpack.c.l.b16 %v4169
    %v4797 = vunpack.c.h.b16 %v4169
    %v4798 = vunpack.c.l.b16 %v4170
    %v4799 = vunpack.c.h.b16 %v4170
    %v4800 = vunpack.c.l.b16 %v4171
    %v4801 = vunpack.c.h.b16 %v4171
    %v4802 = vunpack.c.l.b16 %v4172
    %v4803 = vunpack.c.h.b16 %v4172
    %v4804 = vunpack.c.l.b16 %v4173
    %v4805 = vunpack.c.h.b16 %v4173
    %v4806 = vunpack.c.l.b16 %v4174
    %v4807 = vunpack.c.h.b16 %v4174
    %v4808 = vunpack.c.l.b16 %v4175
    %v4809 = vunpack.c.h.b16 %v4175
    %v4810 = vunpack.c.l.b16 %v4176
    %v4811 = vunpack.c.h.b16 %v4176
    %v4812 = vunpack.c.l.b16 %v4177
    %v4813 = vunpack.c.h.b16 %v4177
    %v4814 = vunpack.c.l.b16 %v4178
    %v4815 = vunpack.c.h.b16 %v4178
    %v4816 = vunpack.c.l.b16 %v4179
    %v4817 = vunpack.c.h.b16 %v4179
    %v4818 = vunpack.c.l.b16 %v4180
    %v4819 = vunpack.c.h.b16 %v4180
    %v4820 = vunpack.c.l.b16 %v4181
    %v4821 = vunpack.c.h.b16 %v4181
    %v4822 = vunpack.c.l.b16 %v4182
    %v4823 = vunpack.c.h.b16 %v4182
    %v4824 = vunpack.c.l.b16 %v4183
    %v4825 = vunpack.c.h.b16 %v4183
    %v4826 = vunpack.c.l.b16 %v4184
    %v4827 = vunpack.c.h.b16 %v4184
    %v4828 = vunpack.c.l.b16 %v4185
    %v4829 = vunpack.c.h.b16 %v4185
    %v4830 = vunpack.c.l.b16 %v4186
    %v4831 = vunpack.c.h.b16 %v4186
    %v4832 = vunpack.c.l.b16 %v4187
    %v4833 = vunpack.c.h.b16 %v4187
    %v4834 = vunpack.c.l.b16 %v4188
    %v4835 = vunpack.c.h.b16 %v4188
    %v4836 = vunpack.c.l.b16 %v4189
    %v4837 = vunpack.c.h.b16 %v4189
    %v4838 = vunpack.c.l.b16 %v4190
    %v4839 = vunpack.c.h.b16 %v4190
    %v4840 = vunpack.c.l.b16 %v4191
    %v4841 = vunpack.c.h.b16 %v4191
    %v4842 = vunpack.c.l.b16 %v4192
    %v4843 = vunpack.c.h.b16 %v4192
    %v4844 = vunpack.c.l.b16 %v4193
    %v4845 = vunpack.c.h.b16 %v4193
    %v4846 = vunpack.c.l.b16 %v4194
    %v4847 = vunpack.c.h.b16 %v4194
    %v4848 = vunpack.c.l.b16 %v4195
    %v4849 = vunpack.c.h.b16 %v4195
    %v4850 = vunpack.c.l.b16 %v4196
    %v4851 = vunpack.c.h.b16 %v4196
    %v4852 = vunpack.c.l.b16 %v4197
    %v4853 = vunpack.c.h.b16 %v4197
    %v4854 = vunpack.c.l.b16 %v4198
    %v4855 = vunpack.c.h.b16 %v4198
    %v4856 = vunpack.c.l.b16 %v4199
    %v4857 = vunpack.c.h.b16 %v4199
    %v4858 = vunpack.c.l.b16 %v4200
    %v4859 = vunpack.c.h.b16 %v4200
    %v4860 = vunpack.c.l.b16 %v4201
    %v4861 = vunpack.c.h.b16 %v4201
    %v4862 = vunpack.c.l.b16 %v4202
    %v4863 = vunpack.c.h.b16 %v4202
    %v4864 = vunpack.c.l.b16 %v4203
    %v4865 = vunpack.c.h.b16 %v4203
    %v4866 = vunpack.c.l.b16 %v4204
    %v4867 = vunpack.c.h.b16 %v4204
    %v4868 = vunpack.c.l.b16 %v4205
    %v4869 = vunpack.c.h.b16 %v4205
    %v4870 = vunpack.c.l.b16 %v4206
    %v4871 = vunpack.c.h.b16 %v4206
    %v4872 = vunpack.c.l.b16 %v4207
    %v4873 = vunpack.c.h.b16 %v4207
    %v4874 = vunpack.c.l.b16 %v4208
    %v4875 = vunpack.c.h.b16 %v4208
    %v4876 = vunpack.c.l.b16 %v4209
    %v4877 = vunpack.c.h.b16 %v4209
    %v4878 = vunpack.c.l.b16 %v4210
    %v4879 = vunpack.c.h.b16 %v4210
    %v4880 = vunpack.c.l.b16 %v4211
    %v4881 = vunpack.c.h.b16 %v4211
    %v4882 = vunpack.c.l.b16 %v4212
    %v4883 = vunpack.c.h.b16 %v4212
    %v4884 = vunpack.c.l.b16 %v4213
    %v4885 = vunpack.c.h.b16 %v4213
    %v4886 = vunpack.c.l.b16 %v4214
    %v4887 = vunpack.c.h.b16 %v4214
    %v4888 = vunpack.c.l.b16 %v4215
    %v4889 = vunpack.c.h.b16 %v4215
    %v4890 = vunpack.c.l.b16 %v4216
    %v4891 = vunpack.c.h.b16 %v4216
    %v4892 = vunpack.c.l.b16 %v4217
    %v4893 = vunpack.c.h.b16 %v4217
    %v4894 = vunpack.c.l.b16 %v4218
    %v4895 = vunpack.c.h.b16 %v4218
    %v4896 = vunpack.c.l.b16 %v4219
    %v4897 = vunpack.c.h.b16 %v4219
    %v4898 = vunpack.c.l.b16 %v4220
    %v4899 = vunpack.c.h.b16 %v4220
    %v4900 = vunpack.c.l.b16 %v4221
    %v4901 = vunpack.c.h.b16 %v4221
    %v4902 = vunpack.c.l.b16 %v4222
    %v4903 = vunpack.c.h.b16 %v4222
    %v4904 = vunpack.c.l.b16 %v4223
    %v4905 = vunpack.c.h.b16 %v4223
    %v4906 = vunpack.c.l.b16 %v4224
    %v4907 = vunpack.c.h.b16 %v4224
    %v4908 = vunpack.c.l.b16 %v4225
    %v4909 = vunpack.c.h.b16 %v4225
    %v4910 = vunpack.c.l.b16 %v4226
    %v4911 = vunpack.c.h.b16 %v4226
    %v4912 = vunpack.c.l.b16 %v4227
    %v4913 = vunpack.c.h.b16 %v4227
    %v4914 = vunpack.c.l.b16 %v4228
    %v4915 = vunpack.c.h.b16 %v4228
    %v4916 = vunpack.c.l.b16 %v4229
    %v4917 = vunpack.c.h.b16 %v4229
    %v4918 = vunpack.c.l.b16 %v4230
    %v4919 = vunpack.c.h.b16 %v4230
    %v4920 = vunpack.c.l.b16 %v4231
    %v4921 = vunpack.c.h.b16 %v4231
    %v4922 = vunpack.c.l.b16 %v4232
    %v4923 = vunpack.c.h.b16 %v4232
    %v4924 = vunpack.c.l.b16 %v4233
    %v4925 = vunpack.c.h.b16 %v4233
    %v4926 = vunpack.c.l.b16 %v4234
    %v4927 = vunpack.c.h.b16 %v4234
    %v4928 = vunpack.c.l.b16 %v4235
    %v4929 = vunpack.c.h.b16 %v4235
    %v4930 = vunpack.c.l.b16 %v4236
    %v4931 = vunpack.c.h.b16 %v4236
    %v4932 = vunpack.c.l.b16 %v4237
    %v4933 = vunpack.c.h.b16 %v4237
    %v4934 = vunpack.c.l.b16 %v4238
    %v4935 = vunpack.c.h.b16 %v4238
    %v4936 = vunpack.c.l.b16 %v4239
    %v4937 = vunpack.c.h.b16 %v4239
    %v4938 = vunpack.c.l.b16 %v4240
    %v4939 = vunpack.c.h.b16 %v4240
    %v4940 = vunpack.c.l.b16 %v4241
    %v4941 = vunpack.c.h.b16 %v4241
    %v4942 = vunpack.c.l.b16 %v4242
    %v4943 = vunpack.c.h.b16 %v4242
    %v4944 = vunpack.c.l.b16 %v4243
    %v4945 = vunpack.c.h.b16 %v4243
    %v4946 = vunpack.c.l.b16 %v4244
    %v4947 = vunpack.c.h.b16 %v4244
    %v4948 = vunpack.c.l.b16 %v4245
    %v4949 = vunpack.c.h.b16 %v4245
    %v4950 = vunpack.c.l.b16 %v4246
    %v4951 = vunpack.c.h.b16 %v4246
    %v4952 = vunpack.c.l.b16 %v4247
    %v4953 = vunpack.c.h.b16 %v4247
    %v4954 = vunpack.c.l.b16 %v4248
    %v4955 = vunpack.c.h.b16 %v4248
    %v4956 = vunpack.c.l.b16 %v4249
    %v4957 = vunpack.c.h.b16 %v4249
    %v4958 = vunpack.c.l.b16 %v4250
    %v4959 = vunpack.c.h.b16 %v4250
    %v4960 = vunpack.c.l.b16 %v4251
    %v4961 = vunpack.c.h.b16 %v4251
    %v4962 = vunpack.c.l.b16 %v4252
    %v4963 = vunpack.c.h.b16 %v4252
    %v4964 = vunpack.c.l.b16 %v4253
    %v4965 = vunpack.c.h.b16 %v4253
    %v4966 = vunpack.c.l.b16 %v4254
    %v4967 = vunpack.c.h.b16 %v4254
    %v4968 = vunpack.c.l.b16 %v4255
    %v4969 = vunpack.c.h.b16 %v4255
    %v4970 = vunpack.c.l.b16 %v4256
    %v4971 = vunpack.c.h.b16 %v4256
    %v4972 = vunpack.c.l.b16 %v4257
    %v4973 = vunpack.c.h.b16 %v4257
    %v4974 = vunpack.c.l.b16 %v4258
    %v4975 = vunpack.c.h.b16 %v4258
    %v4976 = vunpack.c.l.b16 %v4259
    %v4977 = vunpack.c.h.b16 %v4259
    %v4978 = vunpack.c.l.b16 %v4260
    %v4979 = vunpack.c.h.b16 %v4260
    %v4980 = vunpack.c.l.b16 %v4261
    %v4981 = vunpack.c.h.b16 %v4261
    %v4982 = vunpack.c.l.b16 %v4262
    %v4983 = vunpack.c.h.b16 %v4262
    %v4984 = vunpack.c.l.b16 %v4263
    %v4985 = vunpack.c.h.b16 %v4263
    %v4986 = vunpack.c.l.b16 %v4264
    %v4987 = vunpack.c.h.b16 %v4264
    %v4988 = vunpack.c.l.b16 %v4265
    %v4989 = vunpack.c.h.b16 %v4265
    %v4990 = vunpack.c.l.b16 %v4266
    %v4991 = vunpack.c.h.b16 %v4266
    %v4992 = vunpack.c.l.b16 %v4267
    %v4993 = vunpack.c.h.b16 %v4267
    %v4994 = vunpack.c.l.b16 %v4268
    %v4995 = vunpack.c.h.b16 %v4268
    %v4996 = vunpack.c.l.b16 %v4269
    %v4997 = vunpack.c.h.b16 %v4269
    %v4998 = vunpack.c.l.b16 %v4270
    %v4999 = vunpack.c.h.b16 %v4270
    %v5000 = vunpack.c.l.b16 %v4271
    %v5001 = vunpack.c.h.b16 %v4271
    %v5002 = vunpack.c.l.b16 %v4272
    %v5003 = vunpack.c.h.b16 %v4272
    %v5004 = vunpack.c.l.b16 %v4273
    %v5005 = vunpack.c.h.b16 %v4273
    %v5006 = vunpack.c.l.b16 %v4274
    %v5007 = vunpack.c.h.b16 %v4274
    %v5008 = vunpack.c.l.b16 %v4275
    %v5009 = vunpack.c.h.b16 %v4275
    %v5010 = vunpack.c.l.b16 %v4276
    %v5011 = vunpack.c.h.b16 %v4276
    %v5012 = vunpack.c.l.b16 %v4277
    %v5013 = vunpack.c.h.b16 %v4277
    %v5014 = vunpack.c.l.b16 %v4278
    %v5015 = vunpack.c.h.b16 %v4278
    %v5016 = vunpack.c.l.b16 %v4279
    %v5017 = vunpack.c.h.b16 %v4279
    %v5018 = vunpack.c.l.b16 %v4280
    %v5019 = vunpack.c.h.b16 %v4280
    %v5020 = vunpack.c.l.b16 %v4281
    %v5021 = vunpack.c.h.b16 %v4281
    %v5022 = vunpack.c.l.b16 %v4282
    %v5023 = vunpack.c.h.b16 %v4282
    %v5024 = vunpack.c.l.b16 %v4283
    %v5025 = vunpack.c.h.b16 %v4283
    %v5026 = vunpack.c.l.b16 %v4284
    %v5027 = vunpack.c.h.b16 %v4284
    %v5028 = vunpack.c.l.b16 %v4285
    %v5029 = vunpack.c.h.b16 %v4285
    %v5030 = vunpack.c.l.b16 %v4286
    %v5031 = vunpack.c.h.b16 %v4286
    %v5032 = vunpack.c.l.b16 %v4287
    %v5033 = vunpack.c.h.b16 %v4287
    %v5034 = vunpack.c.l.b16 %v4288
    %v5035 = vunpack.c.h.b16 %v4288
    %v5036 = vunpack.c.l.b16 %v4289
    %v5037 = vunpack.c.h.b16 %v4289
    %v5038 = vunpack.c.l.b16 %v4290
    %v5039 = vunpack.c.h.b16 %v4290
    %v5040 = vunpack.c.l.b16 %v4291
    %v5041 = vunpack.c.h.b16 %v4291
    %v5042 = vunpack.c.l.b16 %v4292
    %v5043 = vunpack.c.h.b16 %v4292
    %v5044 = vunpack.c.l.b16 %v4293
    %v5045 = vunpack.c.h.b16 %v4293
    %v5046 = vunpack.c.l.b16 %v4294
    %v5047 = vunpack.c.h.b16 %v4294
    %v5048 = vunpack.c.l.b16 %v4295
    %v5049 = vunpack.c.h.b16 %v4295
    %v5050 = vunpack.c.l.b16 %v4296
    %v5051 = vunpack.c.h.b16 %v4296
    %v5052 = vunpack.c.l.b16 %v4297
    %v5053 = vunpack.c.h.b16 %v4297
    %v5054 = vunpack.c.l.b16 %v4298
    %v5055 = vunpack.c.h.b16 %v4298
    %v5056 = vunpack.c.l.b16 %v4299
    %v5057 = vunpack.c.h.b16 %v4299
    %v5058 = vunpack.c.l.b16 %v4300
    %v5059 = vunpack.c.h.b16 %v4300
    %v5060 = vunpack.c.l.b16 %v4301
    %v5061 = vunpack.c.h.b16 %v4301
    %v5062 = vunpack.c.l.b16 %v4302
    %v5063 = vunpack.c.h.b16 %v4302
    %v5064 = vunpack.c.l.b16 %v4303
    %v5065 = vunpack.c.h.b16 %v4303
    %v5066 = vunpack.c.l.b16 %v4304
    %v5067 = vunpack.c.h.b16 %v4304
    %v5068 = vunpack.c.l.b16 %v4305
    %v5069 = vunpack.c.h.b16 %v4305
    %v5070 = vunpack.c.l.b16 %v4306
    %v5071 = vunpack.c.h.b16 %v4306
    %v5072 = vunpack.c.l.b16 %v4307
    %v5073 = vunpack.c.h.b16 %v4307
    %v5074 = vunpack.c.l.b16 %v4308
    %v5075 = vunpack.c.h.b16 %v4308
    %v5076 = vunpack.c.l.b16 %v4309
    %v5077 = vunpack.c.h.b16 %v4309
    %v5078 = vunpack.c.l.b16 %v4310
    %v5079 = vunpack.c.h.b16 %v4310
    %v5080 = vunpack.c.l.b16 %v4311
    %v5081 = vunpack.c.h.b16 %v4311
    %v5082 = vunpack.c.l.b16 %v4312
    %v5083 = vunpack.c.h.b16 %v4312
    %v5084 = vunpack.c.l.b16 %v4313
    %v5085 = vunpack.c.h.b16 %v4313
    %v5086 = vunpack.c.l.b16 %v4314
    %v5087 = vunpack.c.h.b16 %v4314
    %v5088 = vunpack.c.l.b16 %v4315
    %v5089 = vunpack.c.h.b16 %v4315
    %v5090 = vunpack.c.l.b16 %v4316
    %v5091 = vunpack.c.h.b16 %v4316
    %v5092 = vunpack.c.l.b16 %v4317
    %v5093 = vunpack.c.h.b16 %v4317
    %v5094 = vunpack.c.l.b16 %v4318
    %v5095 = vunpack.c.h.b16 %v4318
    %v5096 = vunpack.c.l.b16 %v4319
    %v5097 = vunpack.c.h.b16 %v4319
    %v5098 = vunpack.c.l.b16 %v4320
    %v5099 = vunpack.c.h.b16 %v4320
    %v5100 = vunpack.c.l.b16 %v4321
    %v5101 = vunpack.c.h.b16 %v4321
    %v5102 = vunpack.c.l.b16 %v4322
    %v5103 = vunpack.c.h.b16 %v4322
    %v5104 = vunpack.c.l.b16 %v4323
    %v5105 = vunpack.c.h.b16 %v4323
    %v5106 = vunpack.c.l.b16 %v4324
    %v5107 = vunpack.c.h.b16 %v4324
    %v5108 = vunpack.c.l.b16 %v4325
    %v5109 = vunpack.c.h.b16 %v4325
    %v5110 = vunpack.c.l.b16 %v4326
    %v5111 = vunpack.c.h.b16 %v4326
    %v5112 = vunpack.c.l.b16 %v4327
    %v5113 = vunpack.c.h.b16 %v4327
    %v5114 = vunpack.c.l.b16 %v4328
    %v5115 = vunpack.c.h.b16 %v4328
    %v5116 = vunpack.c.l.b16 %v4329
    %v5117 = vunpack.c.h.b16 %v4329
    %v5118 = vunpack.c.l.b16 %v4330
    %v5119 = vunpack.c.h.b16 %v4330
    %v5120 = vunpack.c.l.b16 %v4331
    %v5121 = vunpack.c.h.b16 %v4331
    %v5122 = vunpack.c.l.b16 %v4332
    %v5123 = vunpack.c.h.b16 %v4332
    %v5124 = vunpack.c.l.b16 %v4333
    %v5125 = vunpack.c.h.b16 %v4333
    %v5126 = vunpack.c.l.b16 %v4334
    %v5127 = vunpack.c.h.b16 %v4334
    %v5128 = vunpack.c.l.b16 %v4335
    %v5129 = vunpack.c.h.b16 %v4335
    %v5130 = vunpack.c.l.b16 %v4336
    %v5131 = vunpack.c.h.b16 %v4336
    %v5132 = vunpack.c.l.b16 %v4337
    %v5133 = vunpack.c.h.b16 %v4337
    %v5134 = vunpack.c.l.b16 %v4338
    %v5135 = vunpack.c.h.b16 %v4338
    %v5136 = vunpack.c.l.b16 %v4339
    %v5137 = vunpack.c.h.b16 %v4339
    %v5138 = vunpack.c.l.b16 %v4340
    %v5139 = vunpack.c.h.b16 %v4340
    %v5140 = vunpack.c.l.b16 %v4341
    %v5141 = vunpack.c.h.b16 %v4341
    %v5142 = vunpack.c.l.b16 %v4342
    %v5143 = vunpack.c.h.b16 %v4342
    %v5144 = vunpack.c.l.b16 %v4343
    %v5145 = vunpack.c.h.b16 %v4343
    %v5146 = vunpack.c.l.b16 %v4344
    %v5147 = vunpack.c.h.b16 %v4344
    %v5148 = vunpack.c.l.b16 %v4345
    %v5149 = vunpack.c.h.b16 %v4345
    %v5150 = vunpack.c.l.b16 %v4346
    %v5151 = vunpack.c.h.b16 %v4346
    %v5152 = vunpack.c.l.b16 %v4347
    %v5153 = vunpack.c.h.b16 %v4347
    %v5154 = vunpack.c.l.b16 %v4348
    %v5155 = vunpack.c.h.b16 %v4348
    %v5156 = vunpack.c.l.b16 %v4349
    %v5157 = vunpack.c.h.b16 %v4349
    %v5158 = vunpack.c.l.b16 %v4350
    %v5159 = vunpack.c.h.b16 %v4350
    %v5160 = vunpack.c.l.b16 %v4351
    %v5161 = vunpack.c.h.b16 %v4351
    %v5162 = vunpack.c.l.b16 %v4352
    %v5163 = vunpack.c.h.b16 %v4352
    %v5164 = vunpack.c.l.b16 %v4353
    %v5165 = vunpack.c.h.b16 %v4353
    %v5166 = vunpack.c.l.b16 %v4354
    %v5167 = vunpack.c.h.b16 %v4354
    %v5168 = vunpack.c.l.b16 %v4355
    %v5169 = vunpack.c.h.b16 %v4355
    %v5170 = vunpack.c.l.b16 %v4356
    %v5171 = vunpack.c.h.b16 %v4356
    %v5172 = vunpack.c.l.b16 %v4357
    %v5173 = vunpack.c.h.b16 %v4357
    %v5174 = vunpack.c.l.b16 %v4358
    %v5175 = vunpack.c.h.b16 %v4358
    %v5176 = vunpack.c.l.b16 %v4359
    %v5177 = vunpack.c.h.b16 %v4359
    %v5178 = vunpack.c.l.b16 %v4360
    %v5179 = vunpack.c.h.b16 %v4360
    %v5180 = vunpack.c.l.b16 %v4361
    %v5181 = vunpack.c.h.b16 %v4361
    %v5182 = vunpack.c.l.b16 %v4362
    %v5183 = vunpack.c.h.b16 %v4362
    %v5184 = vunpack.c.l.b16 %v4363
    %v5185 = vunpack.c.h.b16 %v4363
    %v5186 = vunpack.c.l.b16 %v4364
    %v5187 = vunpack.c.h.b16 %v4364
    %v5188 = vunpack.c.l.b16 %v4365
    %v5189 = vunpack.c.h.b16 %v4365
    %v5190 = vunpack.c.l.b16 %v4366
    %v5191 = vunpack.c.h.b16 %v4366
    %v5192 = vunpack.c.l.b16 %v4367
    %v5193 = vunpack.c.h.b16 %v4367
    %v5194 = vunpack.c.l.b16 %v4368
    %v5195 = vunpack.c.h.b16 %v4368
    %v5196 = vunpack.c.l.b16 %v4369
    %v5197 = vunpack.c.h.b16 %v4369
    %v5198 = vunpack.c.l.b16 %v4370
    %v5199 = vunpack.c.h.b16 %v4370
    %v5200 = vunpack.c.l.b16 %v4371
    %v5201 = vunpack.c.h.b16 %v4371
    %v5202 = vunpack.c.l.b16 %v4372
    %v5203 = vunpack.c.h.b16 %v4372
    %v5204 = vunpack.c.l.b16 %v4373
    %v5205 = vunpack.c.h.b16 %v4373
    %v5206 = vunpack.c.l.b16 %v4374
    %v5207 = vunpack.c.h.b16 %v4374
    %v5208 = vunpack.c.l.b16 %v4375
    %v5209 = vunpack.c.h.b16 %v4375
    %v5210 = vunpack.c.l.b16 %v4376
    %v5211 = vunpack.c.h.b16 %v4376
    %v5212 = vunpack.c.l.b16 %v4377
    %v5213 = vunpack.c.h.b16 %v4377
    %v5214 = vunpack.c.l.b16 %v4378
    %v5215 = vunpack.c.h.b16 %v4378
    %v5216 = vunpack.c.l.b16 %v4379
    %v5217 = vunpack.c.h.b16 %v4379
    %v5218 = vunpack.c.l.b16 %v4380
    %v5219 = vunpack.c.h.b16 %v4380
    %v5220 = vunpack.c.l.b16 %v4381
    %v5221 = vunpack.c.h.b16 %v4381
    %v5222 = vunpack.c.l.b16 %v4382
    %v5223 = vunpack.c.h.b16 %v4382
    %v5224 = vunpack.c.l.b16 %v4383
    %v5225 = vunpack.c.h.b16 %v4383
    %v5226 = vunpack.c.l.b16 %v4384
    %v5227 = vunpack.c.h.b16 %v4384
    %v5228 = vunpack.c.l.b16 %v4385
    %v5229 = vunpack.c.h.b16 %v4385
    %v5230 = vunpack.c.l.b16 %v4386
    %v5231 = vunpack.c.h.b16 %v4386
    %v5232 = vunpack.c.l.b16 %v4387
    %v5233 = vunpack.c.h.b16 %v4387
    %v5234 = vunpack.c.l.b16 %v4388
    %v5235 = vunpack.c.h.b16 %v4388
    %v5236 = vunpack.c.l.b16 %v4389
    %v5237 = vunpack.c.h.b16 %v4389
    %v5238 = vunpack.c.l.b16 %v4390
    %v5239 = vunpack.c.h.b16 %v4390
    %v5240 = vunpack.c.l.b16 %v4391
    %v5241 = vunpack.c.h.b16 %v4391
    %v5242 = vunpack.c.l.b16 %v4392
    %v5243 = vunpack.c.h.b16 %v4392
    %v5244 = vunpack.c.l.b16 %v4393
    %v5245 = vunpack.c.h.b16 %v4393
    %v5246 = vunpack.c.l.b16 %v4394
    %v5247 = vunpack.c.h.b16 %v4394
    %v5248 = vunpack.c.l.b16 %v4395
    %v5249 = vunpack.c.h.b16 %v4395
    %v5250 = vunpack.c.l.b16 %v4396
    %v5251 = vunpack.c.h.b16 %v4396
    %v5252 = vunpack.c.l.b16 %v4397
    %v5253 = vunpack.c.h.b16 %v4397
    %v5254 = vunpack.c.l.b16 %v4398
    %v5255 = vunpack.c.h.b16 %v4398
    %v5256 = vunpack.c.l.b16 %v4399
    %v5257 = vunpack.c.h.b16 %v4399
    %v5258 = vunpack.c.l.b16 %v4400
    %v5259 = vunpack.c.h.b16 %v4400
    %v5260 = vunpack.c.l.b16 %v4401
    %v5261 = vunpack.c.h.b16 %v4401
    %v5262 = vunpack.c.l.b16 %v4402
    %v5263 = vunpack.c.h.b16 %v4402
    %v5264 = vunpack.c.l.b16 %v4403
    %v5265 = vunpack.c.h.b16 %v4403
    %v5266 = vunpack.c.l.b16 %v4404
    %v5267 = vunpack.c.h.b16 %v4404
    %v5268 = vunpack.c.l.b16 %v4405
    %v5269 = vunpack.c.h.b16 %v4405
    %v5270 = vunpack.c.l.b16 %v4406
    %v5271 = vunpack.c.h.b16 %v4406
    %v5272 = vunpack.c.l.b16 %v4407
    %v5273 = vunpack.c.h.b16 %v4407
    %v5274 = vunpack.c.l.b16 %v4408
    %v5275 = vunpack.c.h.b16 %v4408
    %v5276 = vunpack.c.l.b16 %v4409
    %v5277 = vunpack.c.h.b16 %v4409
    %v5278 = vunpack.c.l.b16 %v4410
    %v5279 = vunpack.c.h.b16 %v4410
    %v5280 = vunpack.c.l.b16 %v4411
    %v5281 = vunpack.c.h.b16 %v4411
    %v5282 = vunpack.c.l.b16 %v4412
    %v5283 = vunpack.c.h.b16 %v4412
    %v5284 = vunpack.c.l.b16 %v4413
    %v5285 = vunpack.c.h.b16 %v4413
    %v5286 = vunpack.c.l.b16 %v4414
    %v5287 = vunpack.c.h.b16 %v4414
    %v5288 = vunpack.c.l.b16 %v4415
    %v5289 = vunpack.c.h.b16 %v4415
    %v5290 = vunpack.c.l.b16 %v4416
    %v5291 = vunpack.c.h.b16 %v4416
    %v5292 = vunpack.c.l.b16 %v4417
    %v5293 = vunpack.c.h.b16 %v4417
    %v5294 = vunpack.c.l.b16 %v4418
    %v5295 = vunpack.c.h.b16 %v4418
    %v5296 = vunpack.c.l.b16 %v4419
    %v5297 = vunpack.c.h.b16 %v4419
    %v5298 = vunpack.c.l.b16 %v4420
    %v5299 = vunpack.c.h.b16 %v4420
    %v5300 = vunpack.c.l.b16 %v4421
    %v5301 = vunpack.c.h.b16 %v4421
    %v5302 = vunpack.c.l.b16 %v4422
    %v5303 = vunpack.c.h.b16 %v4422
    %v5304 = vunpack.c.l.b16 %v4423
    %v5305 = vunpack.c.h.b16 %v4423
    %v5306 = vunpack.c.l.b16 %v4424
    %v5307 = vunpack.c.h.b16 %v4424
    %v5308 = vunpack.c.l.b16 %v4425
    %v5309 = vunpack.c.h.b16 %v4425
    %v5310 = vunpack.c.l.b16 %v4426
    %v5311 = vunpack.c.h.b16 %v4426
    %v5312 = vunpack.c.l.b16 %v4427
    %v5313 = vunpack.c.h.b16 %v4427
    %v5314 = vunpack.c.l.b16 %v4428
    %v5315 = vunpack.c.h.b16 %v4428
    %v5316 = vunpack.c.l.b16 %v4429
    %v5317 = vunpack.c.h.b16 %v4429
    %v5318 = vunpack.c.l.b16 %v4430
    %v5319 = vunpack.c.h.b16 %v4430
    %v5320 = vunpack.c.l.b16 %v4431
    %v5321 = vunpack.c.h.b16 %v4431
    %v5322 = vunpack.c.l.b16 %v4432
    %v5323 = vunpack.c.h.b16 %v4432
    %v5324 = vunpack.c.l.b16 %v4433
    %v5325 = vunpack.c.h.b16 %v4433
    %v5326 = vunpack.c.l.b16 %v4434
    %v5327 = vunpack.c.h.b16 %v4434
    %v5328 = vunpack.c.l.b16 %v4435
    %v5329 = vunpack.c.h.b16 %v4435
    %v5330 = vunpack.c.l.b16 %v4436
    %v5331 = vunpack.c.h.b16 %v4436
    %v5332 = vunpack.c.l.b16 %v4437
    %v5333 = vunpack.c.h.b16 %v4437
    %v5334 = vpack.c.b16 %v4764, %v4758
    %v5335 = vpack.c.b16 %v4765, %v4759
    %v5336 = vpack.c.b16 %v4766, %v4760
    %v5337 = vpack.c.b16 %v4767, %v4761
    %v5338 = vpack.c.b16 %v4768, %v4762
    %v5339 = vpack.c.b16 %v4769, %v4763
    %v5340 = vpack.c.b16 %v4776, %v4770
    %v5341 = vpack.c.b16 %v4777, %v4771
    %v5342 = vpack.c.b16 %v4778, %v4772
    %v5343 = vpack.c.b16 %v4779, %v4773
    %v5344 = vpack.c.b16 %v4780, %v4774
    %v5345 = vpack.c.b16 %v4781, %v4775
    %v5346 = vpack.c.b16 %v4788, %v4782
    %v5347 = vpack.c.b16 %v4789, %v4783
    %v5348 = vpack.c.b16 %v4790, %v4784
    %v5349 = vpack.c.b16 %v4791, %v4785
    %v5350 = vpack.c.b16 %v4792, %v4786
    %v5351 = vpack.c.b16 %v4793, %v4787
    %v5352 = vpack.c.b16 %v4800, %v4794
    %v5353 = vpack.c.b16 %v4801, %v4795
    %v5354 = vpack.c.b16 %v4802, %v4796
    %v5355 = vpack.c.b16 %v4803, %v4797
    %v5356 = vpack.c.b16 %v4804, %v4798
    %v5357 = vpack.c.b16 %v4805, %v4799
    %v5358 = vpack.c.b16 %v4812, %v4806
    %v5359 = vpack.c.b16 %v4813, %v4807
    %v5360 = vpack.c.b16 %v4814, %v4808
    %v5361 = vpack.c.b16 %v4815, %v4809
    %v5362 = vpack.c.b16 %v4816, %v4810
    %v5363 = vpack.c.b16 %v4817, %v4811
    %v5364 = vpack.c.b16 %v4824, %v4818
    %v5365 = vpack.c.b16 %v4825, %v4819
    %v5366 = vpack.c.b16 %v4826, %v4820
    %v5367 = vpack.c.b16 %v4827, %v4821
    %v5368 = vpack.c.b16 %v4828, %v4822
    %v5369 = vpack.c.b16 %v4829, %v4823
    %v5370 = vpack.c.b16 %v4836, %v4830
    %v5371 = vpack.c.b16 %v4837, %v4831
    %v5372 = vpack.c.b16 %v4838, %v4832
    %v5373 = vpack.c.b16 %v4839, %v4833
    %v5374 = vpack.c.b16 %v4840, %v4834
    %v5375 = vpack.c.b16 %v4841, %v4835
    %v5376 = vpack.c.b16 %v4848, %v4842
    %v5377 = vpack.c.b16 %v4849, %v4843
    %v5378 = vpack.c.b16 %v4850, %v4844
    %v5379 = vpack.c.b16 %v4851, %v4845
    %v5380 = vpack.c.b16 %v4852, %v4846
    %v5381 = vpack.c.b16 %v4853, %v4847
    %v5382 = vpack.c.b16 %v4860, %v4854
    %v5383 = vpack.c.b16 %v4861, %v4855
    %v5384 = vpack.c.b16 %v4862, %v4856
    %v5385 = vpack.c.b16 %v4863, %v4857
    %v5386 = vpack.c.b16 %v4864, %v4858
    %v5387 = vpack.c.b16 %v4865, %v4859
    %v5388 = vpack.c.b16 %v4872, %v4866
    %v5389 = vpack.c.b16 %v4873, %v4867
    %v5390 = vpack.c.b16 %v4874, %v4868
    %v5391 = vpack.c.b16 %v4875, %v4869
    %v5392 = vpack.c.b16 %v4876, %v4870
    %v5393 = vpack.c.b16 %v4877, %v4871
    %v5394 = vpack.c.b16 %v4884, %v4878
    %v5395 = vpack.c.b16 %v4885, %v4879
    %v5396 = vpack.c.b16 %v4886, %v4880
    %v5397 = vpack.c.b16 %v4887, %v4881
    %v5398 = vpack.c.b16 %v4888, %v4882
    %v5399 = vpack.c.b16 %v4889, %v4883
    %v5400 = vpack.c.b16 %v4896, %v4890
    %v5401 = vpack.c.b16 %v4897, %v4891
    %v5402 = vpack.c.b16 %v4898, %v4892
    %v5403 = vpack.c.b16 %v4899, %v4893
    %v5404 = vpack.c.b16 %v4900, %v4894
    %v5405 = vpack.c.b16 %v4901, %v4895
    %v5406 = vpack.c.b16 %v4908, %v4902
    %v5407 = vpack.c.b16 %v4909, %v4903
    %v5408 = vpack.c.b16 %v4910, %v4904
    %v5409 = vpack.c.b16 %v4911, %v4905
    %v5410 = vpack.c.b16 %v4912, %v4906
    %v5411 = vpack.c.b16 %v4913, %v4907
    %v5412 = vpack.c.b16 %v4920, %v4914
    %v5413 = vpack.c.b16 %v4921, %v4915
    %v5414 = vpack.c.b16 %v4922, %v4916
    %v5415 = vpack.c.b16 %v4923, %v4917
    %v5416 = vpack.c.b16 %v4924, %v4918
    %v5417 = vpack.c.b16 %v4925, %v4919
    %v5418 = vpack.c.b16 %v4932, %v4926
    %v5419 = vpack.c.b16 %v4933, %v4927
    %v5420 = vpack.c.b16 %v4934, %v4928
    %v5421 = vpack.c.b16 %v4935, %v4929
    %v5422 = vpack.c.b16 %v4936, %v4930
    %v5423 = vpack.c.b16 %v4937, %v4931
    %v5424 = vpack.c.b16 %v4944, %v4938
    %v5425 = vpack.c.b16 %v4945, %v4939
    %v5426 = vpack.c.b16 %v4946, %v4940
    %v5427 = vpack.c.b16 %v4947, %v4941
    %v5428 = vpack.c.b16 %v4948, %v4942
    %v5429 = vpack.c.b16 %v4949, %v4943
    %v5430 = vpack.c.b16 %v4956, %v4950
    %v5431 = vpack.c.b16 %v4957, %v4951
    %v5432 = vpack.c.b16 %v4958, %v4952
    %v5433 = vpack.c.b16 %v4959, %v4953
    %v5434 = vpack.c.b16 %v4960, %v4954
    %v5435 = vpack.c.b16 %v4961, %v4955
    %v5436 = vpack.c.b16 %v4968, %v4962
    %v5437 = vpack.c.b16 %v4969, %v4963
    %v5438 = vpack.c.b16 %v4970, %v4964
    %v5439 = vpack.c.b16 %v4971, %v4965
    %v5440 = vpack.c.b16 %v4972, %v4966
    %v5441 = vpack.c.b16 %v4973, %v4967
    %v5442 = vpack.c.b16 %v4980, %v4974
    %v5443 = vpack.c.b16 %v4981, %v4975
    %v5444 = vpack.c.b16 %v4982, %v4976
    %v5445 = vpack.c.b16 %v4983, %v4977
    %v5446 = vpack.c.b16 %v4984, %v4978
    %v5447 = vpack.c.b16 %v4985, %v4979
    %v5448 = vpack.c.b16 %v4992, %v4986
    %v5449 = vpack.c.b16 %v4993, %v4987
    %v5450 = vpack.c.b16 %v4994, %v4988
    %v5451 = vpack.c.b16 %v4995, %v4989
    %v5452 = vpack.c.b16 %v4996, %v4990
    %v5453 = vpack.c.b16 %v4997, %v4991
    %v5454 = vpack.c.b16 %v5004, %v4998
    %v5455 = vpack.c.b16 %v5005, %v4999
    %v5456 = vpack.c.b16 %v5006, %v5000
    %v5457 = vpack.c.b16 %v5007, %v5001
    %v5458 = vpack.c.b16 %v5008, %v5002
    %v5459 = vpack.c.b16 %v5009, %v5003
    %v5460 = vpack.c.b16 %v5016, %v5010
    %v5461 = vpack.c.b16 %v5017, %v5011
    %v5462 = vpack.c.b16 %v5018, %v5012
    %v5463 = vpack.c.b16 %v5019, %v5013
    %v5464 = vpack.c.b16 %v5020, %v5014
    %v5465 = vpack.c.b16 %v5021, %v5015
    %v5466 = vpack.c.b16 %v5028, %v5022
    %v5467 = vpack.c.b16 %v5029, %v5023
    %v5468 = vpack.c.b16 %v5030, %v5024
    %v5469 = vpack.c.b16 %v5031, %v5025
    %v5470 = vpack.c.b16 %v5032, %v5026
    %v5471 = vpack.c.b16 %v5033, %v5027
    %v5472 = vpack.c.b16 %v5040, %v5034
    %v5473 = vpack.c.b16 %v5041, %v5035
    %v5474 = vpack.c.b16 %v5042, %v5036
    %v5475 = vpack.c.b16 %v5043, %v5037
    %v5476 = vpack.c.b16 %v5044, %v5038
    %v5477 = vpack.c.b16 %v5045, %v5039
    %v5478 = vpack.c.b16 %v5052, %v5046
    %v5479 = vpack.c.b16 %v5053, %v5047
    %v5480 = vpack.c.b16 %v5054, %v5048
    %v5481 = vpack.c.b16 %v5055, %v5049
    %v5482 = vpack.c.b16 %v5056, %v5050
    %v5483 = vpack.c.b16 %v5057, %v5051
    %v5484 = vpack.c.b16 %v5064, %v5058
    %v5485 = vpack.c.b16 %v5065, %v5059
    %v5486 = vpack.c.b16 %v5066, %v5060
    %v5487 = vpack.c.b16 %v5067, %v5061
    %v5488 = vpack.c.b16 %v5068, %v5062
    %v5489 = vpack.c.b16 %v5069, %v5063
    %v5490 = vpack.c.b16 %v5076, %v5070
    %v5491 = vpack.c.b16 %v5077, %v5071
    %v5492 = vpack.c.b16 %v5078, %v5072
    %v5493 = vpack.c.b16 %v5079, %v5073
    %v5494 = vpack.c.b16 %v5080, %v5074
    %v5495 = vpack.c.b16 %v5081, %v5075
    %v5496 = vpack.c.b16 %v5088, %v5082
    %v5497 = vpack.c.b16 %v5089, %v5083
    %v5498 = vpack.c.b16 %v5090, %v5084
    %v5499 = vpack.c.b16 %v5091, %v5085
    %v5500 = vpack.c.b16 %v5092, %v5086
    %v5501 = vpack.c.b16 %v5093, %v5087
    %v5502 = vpack.c.b16 %v5100, %v5094
    %v5503 = vpack.c.b16 %v5101, %v5095
    %v5504 = vpack.c.b16 %v5102, %v5096
    %v5505 = vpack.c.b16 %v5103, %v5097
    %v5506 = vpack.c.b16 %v5104, %v5098
    %v5507 = vpack.c.b16 %v5105, %v5099
    %v5508 = vpack.c.b16 %v5112, %v5106
    %v5509 = vpack.c.b16 %v5113, %v5107
    %v5510 = vpack.c.b16 %v5114, %v5108
    %v5511 = vpack.c.b16 %v5115, %v5109
    %v5512 = vpack.c.b16 %v5116, %v5110
    %v5513 = vpack.c.b16 %v5117, %v5111
    %v5514 = vpack.c.b16 %v5124, %v5118
    %v5515 = vpack.c.b16 %v5125, %v5119
    %v5516 = vpack.c.b16 %v5126, %v5120
    %v5517 = vpack.c.b16 %v5127, %v5121
    %v5518 = vpack.c.b16 %v5128, %v5122
    %v5519 = vpack.c.b16 %v5129, %v5123
    %v5520 = vpack.c.b16 %v5136, %v5130
    %v5521 = vpack.c.b16 %v5137, %v5131
    %v5522 = vpack.c.b16 %v5138, %v5132
    %v5523 = vpack.c.b16 %v5139, %v5133
    %v5524 = vpack.c.b16 %v5140, %v5134
    %v5525 = vpack.c.b16 %v5141, %v5135
    %v5526 = vpack.c.b16 %v5148, %v5142
    %v5527 = vpack.c.b16 %v5149, %v5143
    %v5528 = vpack.c.b16 %v5150, %v5144
    %v5529 = vpack.c.b16 %v5151, %v5145
    %v5530 = vpack.c.b16 %v5152, %v5146
    %v5531 = vpack.c.b16 %v5153, %v5147
    %v5532 = vpack.c.b16 %v5160, %v5154
    %v5533 = vpack.c.b16 %v5161, %v5155
    %v5534 = vpack.c.b16 %v5162, %v5156
    %v5535 = vpack.c.b16 %v5163, %v5157
    %v5536 = vpack.c.b16 %v5164, %v5158
    %v5537 = vpack.c.b16 %v5165, %v5159
    %v5538 = vpack.c.b16 %v5172, %v5166
    %v5539 = vpack.c.b16 %v5173, %v5167
    %v5540 = vpack.c.b16 %v5174, %v5168
    %v5541 = vpack.c.b16 %v5175, %v5169
    %v5542 = vpack.c.b16 %v5176, %v5170
    %v5543 = vpack.c.b16 %v5177, %v5171
    %v5544 = vpack.c.b16 %v5184, %v5178
    %v5545 = vpack.c.b16 %v5185, %v5179
    %v5546 = vpack.c.b16 %v5186, %v5180
    %v5547 = vpack.c.b16 %v5187, %v5181
    %v5548 = vpack.c.b16 %v5188, %v5182
    %v5549 = vpack.c.b16 %v5189, %v5183
    %v5550 = vpack.c.b16 %v5196, %v5190
    %v5551 = vpack.c.b16 %v5197, %v5191
    %v5552 = vpack.c.b16 %v5198, %v5192
    %v5553 = vpack.c.b16 %v5199, %v5193
    %v5554 = vpack.c.b16 %v5200, %v5194
    %v5555 = vpack.c.b16 %v5201, %v5195
    %v5556 = vpack.c.b16 %v5208, %v5202
    %v5557 = vpack.c.b16 %v5209, %v5203
    %v5558 = vpack.c.b16 %v5210, %v5204
    %v5559 = vpack.c.b16 %v5211, %v5205
    %v5560 = vpack.c.b16 %v5212, %v5206
    %v5561 = vpack.c.b16 %v5213, %v5207
    %v5562 = vpack.c.b16 %v5220, %v5214
    %v5563 = vpack.c.b16 %v5221, %v5215
    %v5564 = vpack.c.b16 %v5222, %v5216
    %v5565 = vpack.c.b16 %v5223, %v5217
    %v5566 = vpack.c.b16 %v5224, %v5218
    %v5567 = vpack.c.b16 %v5225, %v5219
    %v5568 = vpack.c.b16 %v5232, %v5226
    %v5569 = vpack.c.b16 %v5233, %v5227
    %v5570 = vpack.c.b16 %v5234, %v5228
    %v5571 = vpack.c.b16 %v5235, %v5229
    %v5572 = vpack.c.b16 %v5236, %v5230
    %v5573 = vpack.c.b16 %v5237, %v5231
    %v5574 = vpack.c.b16 %v5244, %v5238
    %v5575 = vpack.c.b16 %v5245, %v5239
    %v5576 = vpack.c.b16 %v5246, %v5240
    %v5577 = vpack.c.b16 %v5247, %v5241
    %v5578 = vpack.c.b16 %v5248, %v5242
    %v5579 = vpack.c.b16 %v5249, %v5243
    %v5580 = vpack.c.b16 %v5256, %v5250
    %v5581 = vpack.c.b16 %v5257, %v5251
    %v5582 = vpack.c.b16 %v5258, %v5252
    %v5583 = vpack.c.b16 %v5259, %v5253
    %v5584 = vpack.c.b16 %v5260, %v5254
    %v5585 = vpack.c.b16 %v5261, %v5255
    %v5586 = vpack.c.b16 %v5268, %v5262
    %v5587 = vpack.c.b16 %v5269, %v5263
    %v5588 = vpack.c.b16 %v5270, %v5264
    %v5589 = vpack.c.b16 %v5271, %v5265
    %v5590 = vpack.c.b16 %v5272, %v5266
    %v5591 = vpack.c.b16 %v5273, %v5267
    %v5592 = vpack.c.b16 %v5280, %v5274
    %v5593 = vpack.c.b16 %v5281, %v5275
    %v5594 = vpack.c.b16 %v5282, %v5276
    %v5595 = vpack.c.b16 %v5283, %v5277
    %v5596 = vpack.c.b16 %v5284, %v5278
    %v5597 = vpack.c.b16 %v5285, %v5279
    %v5598 = vpack.c.b16 %v5292, %v5286
    %v5599 = vpack.c.b16 %v5293, %v5287
    %v5600 = vpack.c.b16 %v5294, %v5288
    %v5601 = vpack.c.b16 %v5295, %v5289
    %v5602 = vpack.c.b16 %v5296, %v5290
    %v5603 = vpack.c.b16 %v5297, %v5291
    %v5604 = vpack.c.b16 %v5304, %v5298
    %v5605 = vpack.c.b16 %v5305, %v5299
    %v5606 = vpack.c.b16 %v5306, %v5300
    %v5607 = vpack.c.b16 %v5307, %v5301
    %v5608 = vpack.c.b16 %v5308, %v5302
    %v5609 = vpack.c.b16 %v5309, %v5303
    %v5610 = vpack.c.b16 %v5316, %v5310
    %v5611 = vpack.c.b16 %v5317, %v5311
    %v5612 = vpack.c.b16 %v5318, %v5312
    %v5613 = vpack.c.b16 %v5319, %v5313
    %v5614 = vpack.c.b16 %v5320, %v5314
    %v5615 = vpack.c.b16 %v5321, %v5315
    %v5616 = vpack.c.b16 %v5328, %v5322
    %v5617 = vpack.c.b16 %v5329, %v5323
    %v5618 = vpack.c.b16 %v5330, %v5324
    %v5619 = vpack.c.b16 %v5331, %v5325
    %v5620 = vpack.c.b16 %v5332, %v5326
    %v5621 = vpack.c.b16 %v5333, %v5327
    %5910 = vmatprep.subr.bf16.mxu0 %v5335
    %5911 = vmatpush1.bf16.msra.mxu0 %v5334
    %5912 = vmatprep.subr.bf16.mxu0 %v5341
    %5913 = vmatpush1.bf16.msra.mxu0 %v5340
    %5914 = vmatprep.subr.bf16.mxu0 %v5347
    %5915 = vmatpush1.bf16.msra.mxu0 %v5346
    %5916 = vmatprep.subr.bf16.mxu0 %v5353
    %5917 = vmatpush1.bf16.msra.mxu0 %v5352
    %5918 = vmatprep.subr.bf16.mxu0 %v5359
    %5919 = vmatpush1.bf16.msra.mxu0 %v5358
    %5920 = vmatprep.subr.bf16.mxu0 %v5365
    %5921 = vmatpush1.bf16.msra.mxu0 %v5364
    %5922 = vmatprep.subr.bf16.mxu0 %v5371
    %5923 = vmatpush1.bf16.msra.mxu0 %v5370
    %5924 = vmatprep.subr.bf16.mxu0 %v5377
    %5925 = vmatpush1.bf16.msra.mxu0 %v5376
    %5926 = vmatprep.subr.bf16.mxu0 %v5383
    %5927 = vmatpush1.bf16.msra.mxu0 %v5382
    %5928 = vmatprep.subr.bf16.mxu0 %v5389
    %5929 = vmatpush1.bf16.msra.mxu0 %v5388
    %5930 = vmatprep.subr.bf16.mxu0 %v5395
    %5931 = vmatpush1.bf16.msra.mxu0 %v5394
    %5932 = vmatprep.subr.bf16.mxu0 %v5401
    %5933 = vmatpush1.bf16.msra.mxu0 %v5400
    %5934 = vmatprep.subr.bf16.mxu0 %v5407
    %5935 = vmatpush1.bf16.msra.mxu0 %v5406
    %5936 = vmatprep.subr.bf16.mxu0 %v5413
    %5937 = vmatpush1.bf16.msra.mxu0 %v5412
    %5938 = vmatprep.subr.bf16.mxu0 %v5419
    %5939 = vmatpush1.bf16.msra.mxu0 %v5418
    %5940 = vmatprep.subr.bf16.mxu0 %v5425
    %5941 = vmatpush1.bf16.msra.mxu0 %v5424
    %5942 = vmatprep.mubr.bf16.mxu0 %v4145
    %5943 = vmatmul.mubr.bf16.gmra.mrb[0].mxu0 %v4144
    %v5944 = vpop.f32.mrb[0].mxu0
    %v5945 = vadd.f32 %v4443, %v5944
    %v5946 = vpop.f32.mrb[0].mxu0
    %v5947 = vadd.f32 %v4447, %v5946
    %v5948 = vpop.f32.mrb[0].mxu0
    %v5949 = vpop.f32.mrb[0].mxu0
    %5950 = vdwg.mxu0
    %5951 = vmatprep.subr.bf16.mxu0 %v5431
    %5952 = vmatpush1.bf16.msra.mxu0 %v5430
    %5953 = vmatprep.subr.bf16.mxu0 %v5437
    %5954 = vmatpush1.bf16.msra.mxu0 %v5436
    %5955 = vmatprep.subr.bf16.mxu0 %v5443
    %5956 = vmatpush1.bf16.msra.mxu0 %v5442
    %5957 = vmatprep.subr.bf16.mxu0 %v5449
    %5958 = vmatpush1.bf16.msra.mxu0 %v5448
    %5959 = vmatprep.subr.bf16.mxu0 %v5455
    %5960 = vmatpush1.bf16.msra.mxu0 %v5454
    %5961 = vmatprep.subr.bf16.mxu0 %v5461
    %5962 = vmatpush1.bf16.msra.mxu0 %v5460
    %5963 = vmatprep.subr.bf16.mxu0 %v5467
    %5964 = vmatpush1.bf16.msra.mxu0 %v5466
    %5965 = vmatprep.subr.bf16.mxu0 %v5473
    %5966 = vmatpush1.bf16.msra.mxu0 %v5472
    %5967 = vmatprep.subr.bf16.mxu0 %v5479
    %5968 = vmatpush1.bf16.msra.mxu0 %v5478
    %5969 = vmatprep.subr.bf16.mxu0 %v5485
    %5970 = vmatpush1.bf16.msra.mxu0 %v5484
    %5971 = vmatprep.subr.bf16.mxu0 %v5491
    %5972 = vmatpush1.bf16.msra.mxu0 %v5490
    %5973 = vmatprep.subr.bf16.mxu0 %v5497
    %5974 = vmatpush1.bf16.msra.mxu0 %v5496
    %5975 = vmatprep.subr.bf16.mxu0 %v5503
    %5976 = vmatpush1.bf16.msra.mxu0 %v5502
    %5977 = vmatprep.subr.bf16.mxu0 %v5509
    %5978 = vmatpush1.bf16.msra.mxu0 %v5508
    %5979 = vmatprep.subr.bf16.mxu0 %v5515
    %5980 = vmatpush1.bf16.msra.mxu0 %v5514
    %5981 = vmatprep.subr.bf16.mxu0 %v5521
    %5982 = vmatpush1.bf16.msra.mxu0 %v5520
    %5983 = vmatprep.mubr.bf16.mxu0 %v4147
    %5984 = vmatmul.mubr.bf16.gmra.mrb[0].mxu0 %v4146
    %v5985 = vpop.f32.mrb[0].mxu0
    %v5986 = vadd.f32 %v5945, %v5985
    %v5987 = vpop.f32.mrb[0].mxu0
    %v5988 = vadd.f32 %v5947, %v5987
    %v5989 = vpop.f32.mrb[0].mxu0
    %v5990 = vpop.f32.mrb[0].mxu0
    %5991 = vdwg.mxu0
    %5992 = vmatprep.subr.bf16.mxu0 %v5527
    %5993 = vmatpush1.bf16.msra.mxu0 %v5526
    %5994 = vmatprep.subr.bf16.mxu0 %v5533
    %5995 = vmatpush1.bf16.msra.mxu0 %v5532
    %5996 = vmatprep.subr.bf16.mxu0 %v5539
    %5997 = vmatpush1.bf16.msra.mxu0 %v5538
    %5998 = vmatprep.subr.bf16.mxu0 %v5545
    %5999 = vmatpush1.bf16.msra.mxu0 %v5544
    %6000 = vmatprep.subr.bf16.mxu0 %v5551
    %6001 = vmatpush1.bf16.msra.mxu0 %v5550
    %6002 = vmatprep.subr.bf16.mxu0 %v5557
    %6003 = vmatpush1.bf16.msra.mxu0 %v5556
    %6004 = vmatprep.subr.bf16.mxu0 %v5563
    %6005 = vmatpush1.bf16.msra.mxu0 %v5562
    %6006 = vmatprep.subr.bf16.mxu0 %v5569
    %6007 = vmatpush1.bf16.msra.mxu0 %v5568
    %6008 = vmatprep.subr.bf16.mxu0 %v5575
    %6009 = vmatpush1.bf16.msra.mxu0 %v5574
    %6010 = vmatprep.subr.bf16.mxu0 %v5581
    %6011 = vmatpush1.bf16.msra.mxu0 %v5580
    %6012 = vmatprep.subr.bf16.mxu0 %v5587
    %6013 = vmatpush1.bf16.msra.mxu0 %v5586
    %6014 = vmatprep.subr.bf16.mxu0 %v5593
    %6015 = vmatpush1.bf16.msra.mxu0 %v5592
    %6016 = vmatprep.subr.bf16.mxu0 %v5599
    %6017 = vmatpush1.bf16.msra.mxu0 %v5598
    %6018 = vmatprep.subr.bf16.mxu0 %v5605
    %6019 = vmatpush1.bf16.msra.mxu0 %v5604
    %6020 = vmatprep.subr.bf16.mxu0 %v5611
    %6021 = vmatpush1.bf16.msra.mxu0 %v5610
    %6022 = vmatprep.subr.bf16.mxu0 %v5617
    %6023 = vmatpush1.bf16.msra.mxu0 %v5616
    %6024 = vmatprep.mubr.bf16.mxu0 %v4149
    %6025 = vmatmul.mubr.bf16.gmra.mrb[0].mxu0 %v4148
    %v6026 = vpop.f32.mrb[0].mxu0
    %v6027 = vadd.f32 %v5986, %v6026
    %v6028 = vpop.f32.mrb[0].mxu0
    %v6029 = vadd.f32 %v5988, %v6028
    %v6030 = vpop.f32.mrb[0].mxu0
    %v6031 = vpop.f32.mrb[0].mxu0
    %6032 = vdwg.mxu0
    %6033 = vmatprep.subr.bf16.mxu0 %v5337
    %6034 = vmatpush1.bf16.msra.mxu0 %v5336
    %6035 = vmatprep.subr.bf16.mxu0 %v5343
    %6036 = vmatpush1.bf16.msra.mxu0 %v5342
    %6037 = vmatprep.subr.bf16.mxu0 %v5349
    %6038 = vmatpush1.bf16.msra.mxu0 %v5348
    %6039 = vmatprep.subr.bf16.mxu0 %v5355
    %6040 = vmatpush1.bf16.msra.mxu0 %v5354
    %6041 = vmatprep.subr.bf16.mxu0 %v5361
    %6042 = vmatpush1.bf16.msra.mxu0 %v5360
    %6043 = vmatprep.subr.bf16.mxu0 %v5367
    %6044 = vmatpush1.bf16.msra.mxu0 %v5366
    %6045 = vmatprep.subr.bf16.mxu0 %v5373
    %6046 = vmatpush1.bf16.msra.mxu0 %v5372
    %6047 = vmatprep.subr.bf16.mxu0 %v5379
    %6048 = vmatpush1.bf16.msra.mxu0 %v5378
    %6049 = vmatprep.subr.bf16.mxu0 %v5385
    %6050 = vmatpush1.bf16.msra.mxu0 %v5384
    %6051 = vmatprep.subr.bf16.mxu0 %v5391
    %6052 = vmatpush1.bf16.msra.mxu0 %v5390
    %6053 = vmatprep.subr.bf16.mxu0 %v5397
    %6054 = vmatpush1.bf16.msra.mxu0 %v5396
    %6055 = vmatprep.subr.bf16.mxu0 %v5403
    %6056 = vmatpush1.bf16.msra.mxu0 %v5402
    %6057 = vmatprep.subr.bf16.mxu0 %v5409
    %6058 = vmatpush1.bf16.msra.mxu0 %v5408
    %6059 = vmatprep.subr.bf16.mxu0 %v5415
    %6060 = vmatpush1.bf16.msra.mxu0 %v5414
    %6061 = vmatprep.subr.bf16.mxu0 %v5421
    %6062 = vmatpush1.bf16.msra.mxu0 %v5420
    %6063 = vmatprep.subr.bf16.mxu0 %v5427
    %6064 = vmatpush1.bf16.msra.mxu0 %v5426
    %6065 = vmatprep.mubr.bf16.mxu0 %v4145
    %6066 = vmatmul.mubr.bf16.gmra.mrb[0].mxu0 %v4144
    %v6067 = vpop.f32.mrb[0].mxu0
    %v6068 = vadd.f32 %v4451, %v6067
    %v6069 = vpop.f32.mrb[0].mxu0
    %v6070 = vadd.f32 %v4455, %v6069
    %v6071 = vpop.f32.mrb[0].mxu0
    %v6072 = vpop.f32.mrb[0].mxu0
    %6073 = vdwg.mxu0
    %6074 = vmatprep.subr.bf16.mxu0 %v5433
    %6075 = vmatpush1.bf16.msra.mxu0 %v5432
    %6076 = vmatprep.subr.bf16.mxu0 %v5439
    %6077 = vmatpush1.bf16.msra.mxu0 %v5438
    %6078 = vmatprep.subr.bf16.mxu0 %v5445
    %6079 = vmatpush1.bf16.msra.mxu0 %v5444
    %6080 = vmatprep.subr.bf16.mxu0 %v5451
    %6081 = vmatpush1.bf16.msra.mxu0 %v5450
    %6082 = vmatprep.subr.bf16.mxu0 %v5457
    %6083 = vmatpush1.bf16.msra.mxu0 %v5456
    %6084 = vmatprep.subr.bf16.mxu0 %v5463
    %6085 = vmatpush1.bf16.msra.mxu0 %v5462
    %6086 = vmatprep.subr.bf16.mxu0 %v5469
    %6087 = vmatpush1.bf16.msra.mxu0 %v5468
    %6088 = vmatprep.subr.bf16.mxu0 %v5475
    %6089 = vmatpush1.bf16.msra.mxu0 %v5474
    %6090 = vmatprep.subr.bf16.mxu0 %v5481
    %6091 = vmatpush1.bf16.msra.mxu0 %v5480
    %6092 = vmatprep.subr.bf16.mxu0 %v5487
    %6093 = vmatpush1.bf16.msra.mxu0 %v5486
    %6094 = vmatprep.subr.bf16.mxu0 %v5493
    %6095 = vmatpush1.bf16.msra.mxu0 %v5492
    %6096 = vmatprep.subr.bf16.mxu0 %v5499
    %6097 = vmatpush1.bf16.msra.mxu0 %v5498
    %6098 = vmatprep.subr.bf16.mxu0 %v5505
    %6099 = vmatpush1.bf16.msra.mxu0 %v5504
    %6100 = vmatprep.subr.bf16.mxu0 %v5511
    %6101 = vmatpush1.bf16.msra.mxu0 %v5510
    %6102 = vmatprep.subr.bf16.mxu0 %v5517
    %6103 = vmatpush1.bf16.msra.mxu0 %v5516
    %6104 = vmatprep.subr.bf16.mxu0 %v5523
    %6105 = vmatpush1.bf16.msra.mxu0 %v5522
    %6106 = vmatprep.mubr.bf16.mxu0 %v4147
    %6107 = vmatmul.mubr.bf16.gmra.mrb[0].mxu0 %v4146
    %v6108 = vpop.f32.mrb[0].mxu0
    %v6109 = vadd.f32 %v6068, %v6108
    %v6110 = vpop.f32.mrb[0].mxu0
    %v6111 = vadd.f32 %v6070, %v6110
    %v6112 = vpop.f32.mrb[0].mxu0
    %v6113 = vpop.f32.mrb[0].mxu0
    %6114 = vdwg.mxu0
    %6115 = vmatprep.subr.bf16.mxu0 %v5529
    %6116 = vmatpush1.bf16.msra.mxu0 %v5528
    %6117 = vmatprep.subr.bf16.mxu0 %v5535
    %6118 = vmatpush1.bf16.msra.mxu0 %v5534
    %6119 = vmatprep.subr.bf16.mxu0 %v5541
    %6120 = vmatpush1.bf16.msra.mxu0 %v5540
    %6121 = vmatprep.subr.bf16.mxu0 %v5547
    %6122 = vmatpush1.bf16.msra.mxu0 %v5546
    %6123 = vmatprep.subr.bf16.mxu0 %v5553
    %6124 = vmatpush1.bf16.msra.mxu0 %v5552
    %6125 = vmatprep.subr.bf16.mxu0 %v5559
    %6126 = vmatpush1.bf16.msra.mxu0 %v5558
    %6127 = vmatprep.subr.bf16.mxu0 %v5565
    %6128 = vmatpush1.bf16.msra.mxu0 %v5564
    %6129 = vmatprep.subr.bf16.mxu0 %v5571
    %6130 = vmatpush1.bf16.msra.mxu0 %v5570
    %6131 = vmatprep.subr.bf16.mxu0 %v5577
    %6132 = vmatpush1.bf16.msra.mxu0 %v5576
    %6133 = vmatprep.subr.bf16.mxu0 %v5583
    %6134 = vmatpush1.bf16.msra.mxu0 %v5582
    %6135 = vmatprep.subr.bf16.mxu0 %v5589
    %6136 = vmatpush1.bf16.msra.mxu0 %v5588
    %6137 = vmatprep.subr.bf16.mxu0 %v5595
    %6138 = vmatpush1.bf16.msra.mxu0 %v5594
    %6139 = vmatprep.subr.bf16.mxu0 %v5601
    %6140 = vmatpush1.bf16.msra.mxu0 %v5600
    %6141 = vmatprep.subr.bf16.mxu0 %v5607
    %6142 = vmatpush1.bf16.msra.mxu0 %v5606
    %6143 = vmatprep.subr.bf16.mxu0 %v5613
    %6144 = vmatpush1.bf16.msra.mxu0 %v5612
    %6145 = vmatprep.subr.bf16.mxu0 %v5619
    %6146 = vmatpush1.bf16.msra.mxu0 %v5618
    %6147 = vmatprep.mubr.bf16.mxu0 %v4149
    %6148 = vmatmul.mubr.bf16.gmra.mrb[0].mxu0 %v4148
    %v6149 = vpop.f32.mrb[0].mxu0
    %v6150 = vadd.f32 %v6109, %v6149
    %v6151 = vpop.f32.mrb[0].mxu0
    %v6152 = vadd.f32 %v6111, %v6151
    %v6153 = vpop.f32.mrb[0].mxu0
    %v6154 = vpop.f32.mrb[0].mxu0
    %6155 = vdwg.mxu0
    %6156 = vmatprep.subr.bf16.mxu0 %v5339
    %6157 = vmatpush1.bf16.msra.mxu0 %v5338
    %6158 = vmatprep.subr.bf16.mxu0 %v5345
    %6159 = vmatpush1.bf16.msra.mxu0 %v5344
    %6160 = vmatprep.subr.bf16.mxu0 %v5351
    %6161 = vmatpush1.bf16.msra.mxu0 %v5350
    %6162 = vmatprep.subr.bf16.mxu0 %v5357
    %6163 = vmatpush1.bf16.msra.mxu0 %v5356
    %6164 = vmatprep.subr.bf16.mxu0 %v5363
    %6165 = vmatpush1.bf16.msra.mxu0 %v5362
    %6166 = vmatprep.subr.bf16.mxu0 %v5369
    %6167 = vmatpush1.bf16.msra.mxu0 %v5368
    %6168 = vmatprep.subr.bf16.mxu0 %v5375
    %6169 = vmatpush1.bf16.msra.mxu0 %v5374
    %6170 = vmatprep.subr.bf16.mxu0 %v5381
    %6171 = vmatpush1.bf16.msra.mxu0 %v5380
    %6172 = vmatprep.subr.bf16.mxu0 %v5387
    %6173 = vmatpush1.bf16.msra.mxu0 %v5386
    %6174 = vmatprep.subr.bf16.mxu0 %v5393
    %6175 = vmatpush1.bf16.msra.mxu0 %v5392
    %6176 = vmatprep.subr.bf16.mxu0 %v5399
    %6177 = vmatpush1.bf16.msra.mxu0 %v5398
    %6178 = vmatprep.subr.bf16.mxu0 %v5405
    %6179 = vmatpush1.bf16.msra.mxu0 %v5404
    %6180 = vmatprep.subr.bf16.mxu0 %v5411
    %6181 = vmatpush1.bf16.msra.mxu0 %v5410
    %6182 = vmatprep.subr.bf16.mxu0 %v5417
    %6183 = vmatpush1.bf16.msra.mxu0 %v5416
    %6184 = vmatprep.subr.bf16.mxu0 %v5423
    %6185 = vmatpush1.bf16.msra.mxu0 %v5422
    %6186 = vmatprep.subr.bf16.mxu0 %v5429
    %6187 = vmatpush1.bf16.msra.mxu0 %v5428
    %6188 = vmatprep.mubr.bf16.mxu0 %v4145
    %6189 = vmatmul.mubr.bf16.gmra.mrb[0].mxu0 %v4144
    %v6190 = vpop.f32.mrb[0].mxu0
    %v6191 = vadd.f32 %v4459, %v6190
    %v6192 = vpop.f32.mrb[0].mxu0
    %v6193 = vadd.f32 %v4463, %v6192
    %v6194 = vpop.f32.mrb[0].mxu0
    %v6195 = vpop.f32.mrb[0].mxu0
    %6196 = vdwg.mxu0
    %6197 = vmatprep.subr.bf16.mxu0 %v5435
    %6198 = vmatpush1.bf16.msra.mxu0 %v5434
    %6199 = vmatprep.subr.bf16.mxu0 %v5441
    %6200 = vmatpush1.bf16.msra.mxu0 %v5440
    %6201 = vmatprep.subr.bf16.mxu0 %v5447
    %6202 = vmatpush1.bf16.msra.mxu0 %v5446
    %6203 = vmatprep.subr.bf16.mxu0 %v5453
    %6204 = vmatpush1.bf16.msra.mxu0 %v5452
    %6205 = vmatprep.subr.bf16.mxu0 %v5459
    %6206 = vmatpush1.bf16.msra.mxu0 %v5458
    %6207 = vmatprep.subr.bf16.mxu0 %v5465
    %6208 = vmatpush1.bf16.msra.mxu0 %v5464
    %6209 = vmatprep.subr.bf16.mxu0 %v5471
    %6210 = vmatpush1.bf16.msra.mxu0 %v5470
    %6211 = vmatprep.subr.bf16.mxu0 %v5477
    %6212 = vmatpush1.bf16.msra.mxu0 %v5476
    %6213 = vmatprep.subr.bf16.mxu0 %v5483
    %6214 = vmatpush1.bf16.msra.mxu0 %v5482
    %6215 = vmatprep.subr.bf16.mxu0 %v5489
    %6216 = vmatpush1.bf16.msra.mxu0 %v5488
    %6217 = vmatprep.subr.bf16.mxu0 %v5495
    %6218 = vmatpush1.bf16.msra.mxu0 %v5494
    %6219 = vmatprep.subr.bf16.mxu0 %v5501
    %6220 = vmatpush1.bf16.msra.mxu0 %v5500
    %6221 = vmatprep.subr.bf16.mxu0 %v5507
    %6222 = vmatpush1.bf16.msra.mxu0 %v5506
    %6223 = vmatprep.subr.bf16.mxu0 %v5513
    %6224 = vmatpush1.bf16.msra.mxu0 %v5512
    %6225 = vmatprep.subr.bf16.mxu0 %v5519
    %6226 = vmatpush1.bf16.msra.mxu0 %v5518
    %6227 = vmatprep.subr.bf16.mxu0 %v5525
    %6228 = vmatpush1.bf16.msra.mxu0 %v5524
    %6229 = vmatprep.mubr.bf16.mxu0 %v4147
    %6230 = vmatmul.mubr.bf16.gmra.mrb[0].mxu0 %v4146
    %v6231 = vpop.f32.mrb[0].mxu0
    %v6232 = vadd.f32 %v6191, %v6231
    %v6233 = vpop.f32.mrb[0].mxu0
    %v6234 = vadd.f32 %v6193, %v6233
    %v6235 = vpop.f32.mrb[0].mxu0
    %v6236 = vpop.f32.mrb[0].mxu0
    %6237 = vdwg.mxu0
    %6238 = vmatprep.subr.bf16.mxu0 %v5531
    %6239 = vmatpush1.bf16.msra.mxu0 %v5530
    %6240 = vmatprep.subr.bf16.mxu0 %v5537
    %6241 = vmatpush1.bf16.msra.mxu0 %v5536
    %6242 = vmatprep.subr.bf16.mxu0 %v5543
    %6243 = vmatpush1.bf16.msra.mxu0 %v5542
    %6244 = vmatprep.subr.bf16.mxu0 %v5549
    %6245 = vmatpush1.bf16.msra.mxu0 %v5548
    %6246 = vmatprep.subr.bf16.mxu0 %v5555
    %6247 = vmatpush1.bf16.msra.mxu0 %v5554
    %6248 = vmatprep.subr.bf16.mxu0 %v5561
    %6249 = vmatpush1.bf16.msra.mxu0 %v5560
    %6250 = vmatprep.subr.bf16.mxu0 %v5567
    %6251 = vmatpush1.bf16.msra.mxu0 %v5566
    %6252 = vmatprep.subr.bf16.mxu0 %v5573
    %6253 = vmatpush1.bf16.msra.mxu0 %v5572
    %6254 = vmatprep.subr.bf16.mxu0 %v5579
    %6255 = vmatpush1.bf16.msra.mxu0 %v5578
    %6256 = vmatprep.subr.bf16.mxu0 %v5585
    %6257 = vmatpush1.bf16.msra.mxu0 %v5584
    %6258 = vmatprep.subr.bf16.mxu0 %v5591
    %6259 = vmatpush1.bf16.msra.mxu0 %v5590
    %6260 = vmatprep.subr.bf16.mxu0 %v5597
    %6261 = vmatpush1.bf16.msra.mxu0 %v5596
    %6262 = vmatprep.subr.bf16.mxu0 %v5603
    %6263 = vmatpush1.bf16.msra.mxu0 %v5602
    %6264 = vmatprep.subr.bf16.mxu0 %v5609
    %6265 = vmatpush1.bf16.msra.mxu0 %v5608
    %6266 = vmatprep.subr.bf16.mxu0 %v5615
    %6267 = vmatpush1.bf16.msra.mxu0 %v5614
    %6268 = vmatprep.subr.bf16.mxu0 %v5621
    %6269 = vmatpush1.bf16.msra.mxu0 %v5620
    %6270 = vmatprep.mubr.bf16.mxu0 %v4149
    %6271 = vmatmul.mubr.bf16.gmra.mrb[0].mxu0 %v4148
    %v6272 = vpop.f32.mrb[0].mxu0
    %v6273 = vadd.f32 %v6232, %v6272
    %v6274 = vpop.f32.mrb[0].mxu0
    %v6275 = vadd.f32 %v6234, %v6274
    %v6276 = vpop.f32.mrb[0].mxu0
    %v6277 = vpop.f32.mrb[0].mxu0
    %6278 = vdwg.mxu0
    %v6279 = vld [vmem:[#allocation15] sm:$0x3]
    %v6281 = vlaneseq
    %v6282 = vshrl.u32 %v6281, 7
    %v6283 = vsub.s32 0, %v6282
    %v6284 = vrot.slane %v6279, %v6283
    %v6285 = vlaneseq
    %v6286 = vshrl.u32 %v6285, 7
    %v6287 = vsub.s32 1, %v6286
    %v6288 = vrot.slane %v6279, %v6287
    %v6291 = vmul.f32 %v4142, %v6284
    %v6292 = vmul.f32 %v4143, %v6288
    %v6293 = vadd.f32 %v6291, %v6292
    %6294 = vadd.xlane.f32.xlu0 %v6293
    %v6295 = vpop.xlane.xlu0 %6294
    %v6296 = vld [vmem:[#allocation2] sm:$0x1]
    %v6298 = vlaneseq
    %v6299 = vshrl.u32 %v6298, 7
    %v6300 = vsub.s32 0, %v6299
    %v6301 = vrot.slane %v6296, %v6300
    %v6303 = vadd.f32 %v6295, %v6301
    %vm6304 = vcmp.gt.f32.partialorder %v6303, 20.0
    %v6305 = vmin.f32 %v6303, 20.0
    %v6306 = vmul.f32 %v6305, 1.442695
    %v6307 = vpow.pop %v6306
    %v6308 = vadd.f32 %v6307, 1.0
    %v6309 = vlog2.pop %v6308
    %v6310 = vmul.f32 %v6309, 0.6931472
    %v6311 = vmul.f32 -0.5, %v6307
    %v6312 = vadd.f32 %v6311, 1.0
    %v6313 = vmul.f32 %v6312, %v6307
    %v6314 = vand.u32 2147483647, %v6307
    %vm6315 = vcmp.lt.f32.partialorder %v6314, 0.0004427343
    %v6316 = vsel %vm6315, %v6313, %v6310
    %v6317 = vsel %vm6304, %v6303, %v6316
    %v6318 = vmul.f32 %v6027, %v6027
    %v6319 = vmul.f32 %v6029, %v6029
    %v6320 = vmul.f32 %v6150, %v6150
    %v6321 = vmul.f32 %v6152, %v6152
    %v6322 = vmul.f32 %v6273, %v6273
    %v6323 = vmul.f32 %v6275, %v6275
    %v6324 = vadd.f32 %v6318, %v6319
    %v6325 = vadd.f32 %v6324, %v6320
    %v6326 = vadd.f32 %v6325, %v6321
    %v6327 = vadd.f32 %v6326, %v6322
    %v6328 = vadd.f32 %v6327, %v6323
    %6329 = vadd.xlane.f32.xlu0 %v6328
    %v6330 = vpop.xlane.xlu0 %6329
    %v6331 = vmax.f32 %v6330, 1e-24
    %v6332 = vrsqrt.pop %v6331
    %v6333 = vmul.f32 %v6027, %v6332
    %v6334 = vmul.f32 %v6029, %v6332
    %v6335 = vmul.f32 %v6150, %v6332
    %v6336 = vmul.f32 %v6152, %v6332
    %v6337 = vmul.f32 %v6273, %v6332
    %v6338 = vmul.f32 %v6275, %v6332
    %6340 = vset.pattern.permute.xlu0 0
    %6341 = vperm.xlu0 %6340, %v6317
    %v6342 = vpop.permute.xlu0 %6341
    %v6344 = vmul.f32 %v6333, %v6342
    %v6345 = vmul.f32 %v6334, %v6342
    %v6346 = vmul.f32 %v6335, %v6342
    %v6347 = vmul.f32 %v6336, %v6342
    %v6348 = vmul.f32 %v6337, %v6342
    %v6349 = vmul.f32 %v6338, %v6342
    %6350 = vst [vmem:[#allocation17] sm:$0xff] %v6344
    %6351 = vst [vmem:[#allocation17 + $0x8] sm:$0xff] %v6345
    %6352 = vst [vmem:[#allocation17 + $0x10] sm:$0xff] %v6346
    %6353 = vst [vmem:[#allocation17 + $0x18] sm:$0xff] %v6347
    %6354 = vst [vmem:[#allocation17 + $0x20] sm:$0xff] %v6348
    %6355 = vst [vmem:[#allocation17 + $0x28] sm:$0xff] %v6349
    %vm6356 = vcmask 7168
    %6357 = vst.msk [vmem:[%s10] sm:$0xff] %vm6356, %v6317
    // Predicated region
    $region70: #{tpu_custom_call.1} parent=1 // pred_check
      _
    $region71: #{tpu_custom_call.1} parent=1 // pred_check_branch
      %6359 = sbr.rel (0) target = $region73
    $region72: #{tpu_custom_call.1} parent=1 // pred_region
      %s6361 = ssub.s32 768, 768
      %6362 = vsyncadd [#allocation5], %s6361
      %s6364 = sshll.u32 [#allocation17], 4
      %s6365 = int_to_ptr.vmem [resolvable:$true] %s6364
      %6367 = dma.vmem_to_hbm [thread:$0]  %s6365, 768, %s9, [#allocation5]
    $region73: #{tpu_custom_call.1} parent=1 // pred_fallthru
      _
    // Predicated region
    $region74: #{tpu_custom_call.1} parent=1 // pred_check
      _
    $region75: #{tpu_custom_call.1} parent=1 // pred_check_branch
      %6369 = sbr.rel (0) target = $region77
    $region76: #{tpu_custom_call.1} parent=1 // pred_region
      _
    $region77: #{tpu_custom_call.1} parent=1 // pred_fallthru
      _
    // Predicated region
    $region78: #{tpu_custom_call.1} parent=1 // pred_check
      _
    $region79: #{tpu_custom_call.1} parent=1 // pred_check_branch
      %6371 = sbr.rel (0) target = $region81
    $region80: #{tpu_custom_call.1} parent=1 // pred_region
      %6372 = dma.done [#allocation5], 768
    $region81: #{tpu_custom_call.1} parent=1 // pred_fallthru
      _
    // Predicated region
    $region82: #{tpu_custom_call.1} parent=1 // pred_check
      _
    $region83: #{tpu_custom_call.1} parent=1 // pred_check_branch
      %6374 = sbr.rel (0) target = $region85
    $region84: #{tpu_custom_call.1} parent=1 // pred_region
      _
    $region85: #{tpu_custom_call.1} parent=1 // pred_fallthru
      _
    %6375 = vsyncpa [#allocation4], 1
    %6376 = vsyncpa [#allocation7], 1
    %6377 = vsyncpa [#allocation10], 1
    %6378 = vsyncpa [#allocation13], 1
    %6379 = vsyncpa [#allocation16], 1
    %6380 = vsyncpa [#allocation5], 1

</llo_original>
